<compile_context>
chip_gen: v5e
topology: v5e:2x2
jax: 0.10.0
libtpu: 0.0.40
codegen_flags: <defaults>
</compile_context>

<pallas_src>
import jax
import jax.numpy as jnp
from jax.experimental import pallas as pl
from jax.experimental.pallas import tpu as pltpu

LANE = 128      # lane-dense padding target for channel / feature dims
KP1 = 128       # conv1 im2col K: 5*5*3  = 75  -> 128
KP2 = 384       # conv2 im2col K: 5*5*12 = 300 -> 384

_VMEM = pl.BlockSpec(memory_space=pltpu.MemorySpace.VMEM)


# ---------------------------------------------------------------------------
# Pallas kernels
# ---------------------------------------------------------------------------
def conv_relu_pool_kernel(p_ref, w_ref, b_ref, o_ref):
    """Fused (im2col-)conv + bias + ReLU + 2x2/2 maxpool.

    p_ref: (4, Mp, K) bf16 -- patch matrix, one slab per pool corner
    w_ref: (K, 128)   bf16 -- flattened conv weight, Cout padded to 128
    b_ref: (1, 128)   f32
    o_ref: (Mp, 128)  bf16 -- pooled activation, rows ordered (b, ph, pw)
    """
    w = w_ref[...]
    b = b_ref[...]
    acc = None
    for q in range(4):                       # 4 pool corners; max-reduce on the fly
        y = jnp.dot(p_ref[q], w, preferred_element_type=jnp.float32)
        y = jnp.maximum(y + b, 0.0)          # bias + ReLU in f32
        acc = y if acc is None else jnp.maximum(acc, y)
    o_ref[...] = acc.astype(o_ref.dtype)


def fc_stack_kernel(x_ref, w1_ref, b1_ref, w2_ref, b2_ref, w3_ref, b3_ref, o_ref):
    """Fused fc1(ReLU) -> fc2(ReLU) -> fc3; all feature dims padded to 128."""
    h = jnp.dot(x_ref[...], w1_ref[...], preferred_element_type=jnp.float32)
    h = jnp.maximum(h + b1_ref[...], 0.0)
    h = jnp.dot(h.astype(w2_ref.dtype), w2_ref[...], preferred_element_type=jnp.float32)
    h = jnp.maximum(h + b2_ref[...], 0.0)
    h = jnp.dot(h.astype(w3_ref.dtype), w3_ref[...], preferred_element_type=jnp.float32)
    o_ref[...] = (h + b3_ref[...]).astype(o_ref.dtype)


# ---------------------------------------------------------------------------
# pallas_call wrappers (whole-array blocks; everything fits VMEM at this size)
# ---------------------------------------------------------------------------
def conv_relu_pool(patches, w, b):
    _, mp, kp = patches.shape
    cp = w.shape[1]
    flops = 2 * 4 * mp * kp * cp
    bytes_acc = (patches.size + w.size + mp * cp) * 2 + b.size * 4
    return pl.pallas_call(
        conv_relu_pool_kernel,
        out_shape=jax.ShapeDtypeStruct((mp, cp), jnp.bfloat16),
        in_specs=[_VMEM, _VMEM, _VMEM],
        out_specs=_VMEM,
        cost_estimate=pl.CostEstimate(flops=flops, transcendentals=0,
                                      bytes_accessed=bytes_acc),
    )(patches, w, b)


def fc_stack(x, w1, b1, w2, b2, w3, b3):
    bsz, k1 = x.shape
    n = w3.shape[1]
    flops = 2 * bsz * (k1 * w1.shape[1] + w1.shape[1] * w2.shape[1] + w2.shape[1] * n)
    bytes_acc = ((x.size + w1.size + w2.size + w3.size) * 2
                 + (b1.size + b2.size + b3.size + bsz * n) * 4)
    return pl.pallas_call(
        fc_stack_kernel,
        out_shape=jax.ShapeDtypeStruct((bsz, n), jnp.float32),
        in_specs=[_VMEM] * 7,
        out_specs=_VMEM,
        cost_estimate=pl.CostEstimate(flops=flops, transcendentals=0,
                                      bytes_accessed=bytes_acc),
    )(x, w1, b1, w2, b2, w3, b3)


# ---------------------------------------------------------------------------
# NHWC patch extraction, pre-grouped by 2x2-pool corner (tiny XLA glue)
# ---------------------------------------------------------------------------
def _pooled_patches(x_nhwc, kh, kw, k_pad):
    """Returns (4, B*Hp*Wp, k_pad) bf16; quadrant q holds the im2col rows of the
    conv-output pixels at pool corner q, rows ordered (b, ph, pw)."""
    B, H, W, C = x_nhwc.shape
    Ho, Wo = H - kh + 1, W - kw + 1
    assert Ho % 2 == 0 and Wo % 2 == 0, "2x2/2 pool expects even conv output dims"
    Hp, Wp = Ho // 2, Wo // 2
    k = kh * kw * C
    cols = [x_nhwc[:, i:i + Ho, j:j + Wo, :] for i in range(kh) for j in range(kw)]
    patches = jnp.concatenate(cols, axis=-1)                         # (B,Ho,Wo,k), cols (i,j,c)
    if k_pad > k:
        patches = jnp.pad(patches, ((0, 0), (0, 0), (0, 0), (0, k_pad - k)))
    quads = jnp.stack(
        [patches[:, dr:dr + Ho:2, dc:dc + Wo:2, :] for dr in (0, 1) for dc in (0, 1)],
        axis=0)                                                      # (4,B,Hp,Wp,k_pad)
    return quads.reshape(4, B * Hp * Wp, k_pad), Hp, Wp


# ---------------------------------------------------------------------------
# Parameters: PyTorch-layout init + one-time conversion to kernel layouts
# ---------------------------------------------------------------------------
def init_params(key):
    def uni(k, shape, fan_in):
        bound = 1.0 / jnp.sqrt(jnp.float32(fan_in))
        return jax.random.uniform(k, shape, jnp.float32, -bound, bound)

    ks = jax.random.split(key, 10)
    return dict(
        w1=uni(ks[0], (12, 3, 5, 5), 3 * 5 * 5),   b1=uni(ks[1], (12,), 3 * 5 * 5),
        w2=uni(ks[2], (24, 12, 5, 5), 12 * 5 * 5), b2=uni(ks[3], (24,), 12 * 5 * 5),
        wf1=uni(ks[4], (120, 600), 600),           bf1=uni(ks[5], (120,), 600),
        wf2=uni(ks[6], (84, 120), 120),            bf2=uni(ks[7], (84,), 120),
        wf3=uni(ks[8], (32, 84), 84),              bf3=uni(ks[9], (32,), 84),
    )


def prepare_params(p):
    """One-time: reshape/transpose/pad weights to lane-dense bf16 kernel layouts."""
    def conv_w(w, b, k_pad):
        cout, cin, kh, kw = w.shape
        w2 = jnp.transpose(w, (2, 3, 1, 0)).reshape(kh * kw * cin, cout)   # rows (i,j,c)
        w2 = jnp.pad(w2, ((0, k_pad - kh * kw * cin), (0, LANE - cout)))
        b2 = jnp.pad(b, (0, LANE - cout)).reshape(1, LANE)
        return w2.astype(jnp.bfloat16), b2.astype(jnp.float32)

    def fc_w(w, b):
        n, k = w.shape
        w2 = jnp.pad(w.T, ((0, LANE - k), (0, LANE - n)))
        b2 = jnp.pad(b, (0, LANE - n)).reshape(1, LANE)
        return w2.astype(jnp.bfloat16), b2.astype(jnp.float32)

    def fc1_w(w, b, c_real, hw):
        # Fold PyTorch's NCHW flatten order (c*hw*hw + p*hw + q) into the weight so
        # the kernel consumes the (b, p, q, c[pad 128]) activation directly.
        n = w.shape[0]
        w4 = jnp.transpose(w.reshape(n, c_real, hw, hw), (2, 3, 1, 0))     # (p,q,c,n)
        w4 = jnp.pad(w4, ((0, 0), (0, 0), (0, LANE - c_real), (0, LANE - n)))
        w2 = w4.reshape(hw * hw * LANE, LANE)                              # row=(p*hw+q)*128+c
        b2 = jnp.pad(b, (0, LANE - n)).reshape(1, LANE)
        return w2.astype(jnp.bfloat16), b2.astype(jnp.float32)

    w1, b1 = conv_w(p["w1"], p["b1"], KP1)
    w2, b2 = conv_w(p["w2"], p["b2"], KP2)
    wf1, bf1 = fc1_w(p["wf1"], p["bf1"], 24, 5)
    wf2, bf2 = fc_w(p["wf2"], p["bf2"])
    wf3, bf3 = fc_w(p["wf3"], p["bf3"])
    return dict(w1=w1, b1=b1, w2=w2, b2=b2, wf1=wf1, bf1=bf1,
                wf2=wf2, bf2=bf2, wf3=wf3, bf3=bf3)


# ---------------------------------------------------------------------------
# Forward pass (mirrors NeuralNet.forward); x is NCHW like the PyTorch module
# ---------------------------------------------------------------------------
@jax.jit
def forward(x, kp):
    B = x.shape[0]
    xh = jnp.transpose(x, (0, 2, 3, 1)).astype(jnp.bfloat16)         # NHWC bf16

    p1, hp1, wp1 = _pooled_patches(xh, 5, 5, KP1)                    # (4, B*14*14, 128)
    a1 = conv_relu_pool(p1, kp["w1"], kp["b1"])                      # (B*196, 128) bf16
    a1 = a1.reshape(B, hp1, wp1, LANE)[..., :12]                     # (B, 14, 14, 12)

    p2, hp2, wp2 = _pooled_patches(a1, 5, 5, KP2)                    # (4, B*25, 384)
    a2 = conv_relu_pool(p2, kp["w2"], kp["b2"])                      # (B*25, 128) bf16
    a2 = a2.reshape(B, hp2 * wp2 * LANE)                             # (B, 3200)

    out = fc_stack(a2, kp["wf1"], kp["bf1"], kp["wf2"], kp["bf2"],
                   kp["wf3"], kp["bf3"])                             # (B, 128) f32
    return out[:, :32]


if __name__ == "__main__":
    key = jax.random.PRNGKey(0)
    k_x, k_p = jax.random.split(key)
    # Input must be 3x32x32 so the flatten size is 24*5*5 = 600 (as in the module).
    x = jax.random.normal(k_x, (2, 3, 32, 32), dtype=jnp.float32)
    params = prepare_params(init_params(k_p))    # one-time kernel-layout param prep

    out = forward(x, params)
    jax.block_until_ready(out)
    assert out.shape == (2, 32), out.shape
    print("KERNEL_OK")
</pallas_src>

<mosaic_0001>
module attributes {stable_mosaic.version = 11 : i64} {
  func.func @conv_relu_pool_kernel(%arg0: memref<4x392x128xbf16, #tpu.memory_space<vmem>>, %arg1: memref<128x128xbf16, #tpu.memory_space<vmem>>, %arg2: memref<1x128xf32, #tpu.memory_space<vmem>>, %arg3: memref<392x128xbf16, #tpu.memory_space<vmem>>) attributes {dimension_semantics = [], scalar_prefetch = 0 : i64, scratch_operands = 0 : i64, tpu.core_type = #tpu.core_type<tc>} {
    %c0 = arith.constant 0 : index
    %c0_0 = arith.constant 0 : index
    %0 = vector.load %arg1[%c0, %c0_0] : memref<128x128xbf16, #tpu.memory_space<vmem>>, vector<128x128xbf16>
    %c0_1 = arith.constant 0 : index
    %c0_2 = arith.constant 0 : index
    %1 = vector.load %arg2[%c0_1, %c0_2] : memref<1x128xf32, #tpu.memory_space<vmem>>, vector<1x128xf32>
    %c0_3 = arith.constant 0 : index
    %c0_4 = arith.constant 0 : index
    %c0_5 = arith.constant 0 : index
    %2 = vector.load %arg0[%c0_3, %c0_4, %c0_5] : memref<4x392x128xbf16, #tpu.memory_space<vmem>>, vector<1x392x128xbf16>
    %3 = vector.shape_cast %2 : vector<1x392x128xbf16> to vector<392x128xbf16>
    %cst = arith.constant dense<0.000000e+00> : vector<392x128xf32>
    %4 = tpu.matmul %3, %0, %cst {dimension_numbers = #tpu.dot_dimension_numbers<[1], [0], [0], [1], [0, 0, 1, 1], [], []>} : vector<392x128xbf16>, vector<128x128xbf16>, vector<392x128xf32> -> vector<392x128xf32>
    %5 = vector.broadcast %1 : vector<1x128xf32> to vector<392x128xf32>
    %6 = arith.addf %4, %5 : vector<392x128xf32>
    %cst_6 = arith.constant 0.000000e+00 : f32
    %7 = vector.broadcast %cst_6 : f32 to vector<392x128xf32>
    %8 = arith.maximumf %6, %7 : vector<392x128xf32>
    %c1 = arith.constant 1 : index
    %c0_7 = arith.constant 0 : index
    %c0_8 = arith.constant 0 : index
    %9 = vector.load %arg0[%c1, %c0_7, %c0_8] : memref<4x392x128xbf16, #tpu.memory_space<vmem>>, vector<1x392x128xbf16>
    %10 = vector.shape_cast %9 : vector<1x392x128xbf16> to vector<392x128xbf16>
    %cst_9 = arith.constant dense<0.000000e+00> : vector<392x128xf32>
    %11 = tpu.matmul %10, %0, %cst_9 {dimension_numbers = #tpu.dot_dimension_numbers<[1], [0], [0], [1], [0, 0, 1, 1], [], []>} : vector<392x128xbf16>, vector<128x128xbf16>, vector<392x128xf32> -> vector<392x128xf32>
    %12 = vector.broadcast %1 : vector<1x128xf32> to vector<392x128xf32>
    %13 = arith.addf %11, %12 : vector<392x128xf32>
    %cst_10 = arith.constant 0.000000e+00 : f32
    %14 = vector.broadcast %cst_10 : f32 to vector<392x128xf32>
    %15 = arith.maximumf %13, %14 : vector<392x128xf32>
    %16 = arith.maximumf %8, %15 : vector<392x128xf32>
    %c2 = arith.constant 2 : index
    %c0_11 = arith.constant 0 : index
    %c0_12 = arith.constant 0 : index
    %17 = vector.load %arg0[%c2, %c0_11, %c0_12] : memref<4x392x128xbf16, #tpu.memory_space<vmem>>, vector<1x392x128xbf16>
    %18 = vector.shape_cast %17 : vector<1x392x128xbf16> to vector<392x128xbf16>
    %cst_13 = arith.constant dense<0.000000e+00> : vector<392x128xf32>
    %19 = tpu.matmul %18, %0, %cst_13 {dimension_numbers = #tpu.dot_dimension_numbers<[1], [0], [0], [1], [0, 0, 1, 1], [], []>} : vector<392x128xbf16>, vector<128x128xbf16>, vector<392x128xf32> -> vector<392x128xf32>
    %20 = vector.broadcast %1 : vector<1x128xf32> to vector<392x128xf32>
    %21 = arith.addf %19, %20 : vector<392x128xf32>
    %cst_14 = arith.constant 0.000000e+00 : f32
    %22 = vector.broadcast %cst_14 : f32 to vector<392x128xf32>
    %23 = arith.maximumf %21, %22 : vector<392x128xf32>
    %24 = arith.maximumf %16, %23 : vector<392x128xf32>
    %c3 = arith.constant 3 : index
    %c0_15 = arith.constant 0 : index
    %c0_16 = arith.constant 0 : index
    %25 = vector.load %arg0[%c3, %c0_15, %c0_16] : memref<4x392x128xbf16, #tpu.memory_space<vmem>>, vector<1x392x128xbf16>
    %26 = vector.shape_cast %25 : vector<1x392x128xbf16> to vector<392x128xbf16>
    %cst_17 = arith.constant dense<0.000000e+00> : vector<392x128xf32>
    %27 = tpu.matmul %26, %0, %cst_17 {dimension_numbers = #tpu.dot_dimension_numbers<[1], [0], [0], [1], [0, 0, 1, 1], [], []>} : vector<392x128xbf16>, vector<128x128xbf16>, vector<392x128xf32> -> vector<392x128xf32>
    %28 = vector.broadcast %1 : vector<1x128xf32> to vector<392x128xf32>
    %29 = arith.addf %27, %28 : vector<392x128xf32>
    %cst_18 = arith.constant 0.000000e+00 : f32
    %30 = vector.broadcast %cst_18 : f32 to vector<392x128xf32>
    %31 = arith.maximumf %29, %30 : vector<392x128xf32>
    %32 = arith.maximumf %24, %31 : vector<392x128xf32>
    %33 = arith.truncf %32 : vector<392x128xf32> to vector<392x128xbf16>
    %c0_19 = arith.constant 0 : index
    %c0_20 = arith.constant 0 : index
    %34 = vector.load %arg3[%c0_19, %c0_20] : memref<392x128xbf16, #tpu.memory_space<vmem>>, vector<392x128xbf16>
    tpu.vector_store %arg3[%c0_19, %c0_20], %33 {strides = array<i32>} : memref<392x128xbf16, #tpu.memory_space<vmem>>, vector<392x128xbf16>,
    return
  }
}

module attributes {stable_mosaic.version = 11 : i64} {
  func.func @conv_relu_pool_kernel(%arg0: memref<4x50x384xbf16, #tpu.memory_space<vmem>>, %arg1: memref<384x128xbf16, #tpu.memory_space<vmem>>, %arg2: memref<1x128xf32, #tpu.memory_space<vmem>>, %arg3: memref<50x128xbf16, #tpu.memory_space<vmem>>) attributes {dimension_semantics = [], scalar_prefetch = 0 : i64, scratch_operands = 0 : i64, tpu.core_type = #tpu.core_type<tc>} {
    %c0 = arith.constant 0 : index
    %c0_0 = arith.constant 0 : index
    %0 = vector.load %arg1[%c0, %c0_0] : memref<384x128xbf16, #tpu.memory_space<vmem>>, vector<384x128xbf16>
    %c0_1 = arith.constant 0 : index
    %c0_2 = arith.constant 0 : index
    %1 = vector.load %arg2[%c0_1, %c0_2] : memref<1x128xf32, #tpu.memory_space<vmem>>, vector<1x128xf32>
    %c0_3 = arith.constant 0 : index
    %c0_4 = arith.constant 0 : index
    %c0_5 = arith.constant 0 : index
    %2 = vector.load %arg0[%c0_3, %c0_4, %c0_5] : memref<4x50x384xbf16, #tpu.memory_space<vmem>>, vector<1x50x384xbf16>
    %3 = vector.shape_cast %2 : vector<1x50x384xbf16> to vector<50x384xbf16>
    %cst = arith.constant dense<0.000000e+00> : vector<50x128xf32>
    %4 = tpu.matmul %3, %0, %cst {dimension_numbers = #tpu.dot_dimension_numbers<[1], [0], [0], [1], [0, 0, 1, 1], [], []>} : vector<50x384xbf16>, vector<384x128xbf16>, vector<50x128xf32> -> vector<50x128xf32>
    %5 = vector.broadcast %1 : vector<1x128xf32> to vector<50x128xf32>
    %6 = arith.addf %4, %5 : vector<50x128xf32>
    %cst_6 = arith.constant 0.000000e+00 : f32
    %7 = vector.broadcast %cst_6 : f32 to vector<50x128xf32>
    %8 = arith.maximumf %6, %7 : vector<50x128xf32>
    %c1 = arith.constant 1 : index
    %c0_7 = arith.constant 0 : index
    %c0_8 = arith.constant 0 : index
    %9 = vector.load %arg0[%c1, %c0_7, %c0_8] : memref<4x50x384xbf16, #tpu.memory_space<vmem>>, vector<1x50x384xbf16>
    %10 = vector.shape_cast %9 : vector<1x50x384xbf16> to vector<50x384xbf16>
    %cst_9 = arith.constant dense<0.000000e+00> : vector<50x128xf32>
    %11 = tpu.matmul %10, %0, %cst_9 {dimension_numbers = #tpu.dot_dimension_numbers<[1], [0], [0], [1], [0, 0, 1, 1], [], []>} : vector<50x384xbf16>, vector<384x128xbf16>, vector<50x128xf32> -> vector<50x128xf32>
    %12 = vector.broadcast %1 : vector<1x128xf32> to vector<50x128xf32>
    %13 = arith.addf %11, %12 : vector<50x128xf32>
    %cst_10 = arith.constant 0.000000e+00 : f32
    %14 = vector.broadcast %cst_10 : f32 to vector<50x128xf32>
    %15 = arith.maximumf %13, %14 : vector<50x128xf32>
    %16 = arith.maximumf %8, %15 : vector<50x128xf32>
    %c2 = arith.constant 2 : index
    %c0_11 = arith.constant 0 : index
    %c0_12 = arith.constant 0 : index
    %17 = vector.load %arg0[%c2, %c0_11, %c0_12] : memref<4x50x384xbf16, #tpu.memory_space<vmem>>, vector<1x50x384xbf16>
    %18 = vector.shape_cast %17 : vector<1x50x384xbf16> to vector<50x384xbf16>
    %cst_13 = arith.constant dense<0.000000e+00> : vector<50x128xf32>
    %19 = tpu.matmul %18, %0, %cst_13 {dimension_numbers = #tpu.dot_dimension_numbers<[1], [0], [0], [1], [0, 0, 1, 1], [], []>} : vector<50x384xbf16>, vector<384x128xbf16>, vector<50x128xf32> -> vector<50x128xf32>
    %20 = vector.broadcast %1 : vector<1x128xf32> to vector<50x128xf32>
    %21 = arith.addf %19, %20 : vector<50x128xf32>
    %cst_14 = arith.constant 0.000000e+00 : f32
    %22 = vector.broadcast %cst_14 : f32 to vector<50x128xf32>
    %23 = arith.maximumf %21, %22 : vector<50x128xf32>
    %24 = arith.maximumf %16, %23 : vector<50x128xf32>
    %c3 = arith.constant 3 : index
    %c0_15 = arith.constant 0 : index
    %c0_16 = arith.constant 0 : index
    %25 = vector.load %arg0[%c3, %c0_15, %c0_16] : memref<4x50x384xbf16, #tpu.memory_space<vmem>>, vector<1x50x384xbf16>
    %26 = vector.shape_cast %25 : vector<1x50x384xbf16> to vector<50x384xbf16>
    %cst_17 = arith.constant dense<0.000000e+00> : vector<50x128xf32>
    %27 = tpu.matmul %26, %0, %cst_17 {dimension_numbers = #tpu.dot_dimension_numbers<[1], [0], [0], [1], [0, 0, 1, 1], [], []>} : vector<50x384xbf16>, vector<384x128xbf16>, vector<50x128xf32> -> vector<50x128xf32>
    %28 = vector.broadcast %1 : vector<1x128xf32> to vector<50x128xf32>
    %29 = arith.addf %27, %28 : vector<50x128xf32>
    %cst_18 = arith.constant 0.000000e+00 : f32
    %30 = vector.broadcast %cst_18 : f32 to vector<50x128xf32>
    %31 = arith.maximumf %29, %30 : vector<50x128xf32>
    %32 = arith.maximumf %24, %31 : vector<50x128xf32>
    %33 = arith.truncf %32 : vector<50x128xf32> to vector<50x128xbf16>
    %c0_19 = arith.constant 0 : index
    %c0_20 = arith.constant 0 : index
    %34 = vector.load %arg3[%c0_19, %c0_20] : memref<50x128xbf16, #tpu.memory_space<vmem>>, vector<50x128xbf16>
    tpu.vector_store %arg3[%c0_19, %c0_20], %33 {strides = array<i32>} : memref<50x128xbf16, #tpu.memory_space<vmem>>, vector<50x128xbf16>,
    return
  }
}

module attributes {stable_mosaic.version = 11 : i64} {
  func.func @fc_stack_kernel(%arg0: memref<2x3200xbf16, #tpu.memory_space<vmem>>, %arg1: memref<3200x128xbf16, #tpu.memory_space<vmem>>, %arg2: memref<1x128xf32, #tpu.memory_space<vmem>>, %arg3: memref<128x128xbf16, #tpu.memory_space<vmem>>, %arg4: memref<1x128xf32, #tpu.memory_space<vmem>>, %arg5: memref<128x128xbf16, #tpu.memory_space<vmem>>, %arg6: memref<1x128xf32, #tpu.memory_space<vmem>>, %arg7: memref<2x128xf32, #tpu.memory_space<vmem>>) attributes {dimension_semantics = [], scalar_prefetch = 0 : i64, scratch_operands = 0 : i64, tpu.core_type = #tpu.core_type<tc>} {
    %c0 = arith.constant 0 : index
    %c0_0 = arith.constant 0 : index
    %0 = vector.load %arg0[%c0, %c0_0] : memref<2x3200xbf16, #tpu.memory_space<vmem>>, vector<2x3200xbf16>
    %c0_1 = arith.constant 0 : index
    %c0_2 = arith.constant 0 : index
    %1 = vector.load %arg1[%c0_1, %c0_2] : memref<3200x128xbf16, #tpu.memory_space<vmem>>, vector<3200x128xbf16>
    %cst = arith.constant dense<0.000000e+00> : vector<2x128xf32>
    %2 = tpu.matmul %0, %1, %cst {dimension_numbers = #tpu.dot_dimension_numbers<[1], [0], [0], [1], [0, 0, 1, 1], [], []>} : vector<2x3200xbf16>, vector<3200x128xbf16>, vector<2x128xf32> -> vector<2x128xf32>
    %c0_3 = arith.constant 0 : index
    %c0_4 = arith.constant 0 : index
    %3 = vector.load %arg2[%c0_3, %c0_4] : memref<1x128xf32, #tpu.memory_space<vmem>>, vector<1x128xf32>
    %4 = vector.broadcast %3 : vector<1x128xf32> to vector<2x128xf32>
    %5 = arith.addf %2, %4 : vector<2x128xf32>
    %cst_5 = arith.constant 0.000000e+00 : f32
    %6 = vector.broadcast %cst_5 : f32 to vector<2x128xf32>
    %7 = arith.maximumf %5, %6 : vector<2x128xf32>
    %8 = arith.truncf %7 : vector<2x128xf32> to vector<2x128xbf16>
    %c0_6 = arith.constant 0 : index
    %c0_7 = arith.constant 0 : index
    %9 = vector.load %arg3[%c0_6, %c0_7] : memref<128x128xbf16, #tpu.memory_space<vmem>>, vector<128x128xbf16>
    %cst_8 = arith.constant dense<0.000000e+00> : vector<2x128xf32>
    %10 = tpu.matmul %8, %9, %cst_8 {dimension_numbers = #tpu.dot_dimension_numbers<[1], [0], [0], [1], [0, 0, 1, 1], [], []>} : vector<2x128xbf16>, vector<128x128xbf16>, vector<2x128xf32> -> vector<2x128xf32>
    %c0_9 = arith.constant 0 : index
    %c0_10 = arith.constant 0 : index
    %11 = vector.load %arg4[%c0_9, %c0_10] : memref<1x128xf32, #tpu.memory_space<vmem>>, vector<1x128xf32>
    %12 = vector.broadcast %11 : vector<1x128xf32> to vector<2x128xf32>
    %13 = arith.addf %10, %12 : vector<2x128xf32>
    %cst_11 = arith.constant 0.000000e+00 : f32
    %14 = vector.broadcast %cst_11 : f32 to vector<2x128xf32>
    %15 = arith.maximumf %13, %14 : vector<2x128xf32>
    %16 = arith.truncf %15 : vector<2x128xf32> to vector<2x128xbf16>
    %c0_12 = arith.constant 0 : index
    %c0_13 = arith.constant 0 : index
    %17 = vector.load %arg5[%c0_12, %c0_13] : memref<128x128xbf16, #tpu.memory_space<vmem>>, vector<128x128xbf16>
    %cst_14 = arith.constant dense<0.000000e+00> : vector<2x128xf32>
    %18 = tpu.matmul %16, %17, %cst_14 {dimension_numbers = #tpu.dot_dimension_numbers<[1], [0], [0], [1], [0, 0, 1, 1], [], []>} : vector<2x128xbf16>, vector<128x128xbf16>, vector<2x128xf32> -> vector<2x128xf32>
    %c0_15 = arith.constant 0 : index
    %c0_16 = arith.constant 0 : index
    %19 = vector.load %arg6[%c0_15, %c0_16] : memref<1x128xf32, #tpu.memory_space<vmem>>, vector<1x128xf32>
    %20 = vector.broadcast %19 : vector<1x128xf32> to vector<2x128xf32>
    %21 = arith.addf %18, %20 : vector<2x128xf32>
    %c0_17 = arith.constant 0 : index
    %c0_18 = arith.constant 0 : index
    %22 = vector.load %arg7[%c0_17, %c0_18] : memref<2x128xf32, #tpu.memory_space<vmem>>, vector<2x128xf32>
    tpu.vector_store %arg7[%c0_17, %c0_18], %21 {strides = array<i32>} : memref<2x128xf32, #tpu.memory_space<vmem>>, vector<2x128xf32>,
    return
  }
}

</mosaic_0001>

<llo_original>
// kernel: forward.3
$region0: #{forward.3}
  #allocation0 [shape = 'u32[]', space=smem, size = 0x4, offset = 0x4, fixed_abs, tag = 'smem constant byte address 0x4 - core index']
  #allocation1 [shape = 'u32[72,128]{1,0:T(1,128)}', space=vmem, size = 0x9000, scoped, tag = 'internal scratch']
  %s0 = inlined_call_operand.vmem [shape: bf16[4,392,128], index: 0, kind: input, shape index: {}]
  %s1 = inlined_call_operand.vmem [shape: bf16[128,128], index: 1, kind: input, shape index: {}]
  %s2 = inlined_call_operand.vmem [shape: f32[1,128], index: 2, kind: input, shape index: {}]
  %s3 = inlined_call_operand.vmem [shape: bf16[392,128], index: 3, kind: output, shape index: {}]
  %s4 = sld [smem:[#allocation0]]
  $region22: #{forward.3} parent=0
    _
  %s6 = ssub.s32 1, %s4
  %s7 = scalar_select 0, %s6, %s4
  // Predicated region
  $region2: #{forward.3} parent=0 // pred_check
    _
  $region3: #{forward.3} parent=0 // pred_check_branch
    %9 = sbr.rel (0) target = $region5
  $region4: #{forward.3} parent=0 // pred_region
    _
  $region5: #{forward.3} parent=0 // pred_fallthru
    _
  // Predicated region
  $region6: #{forward.3} parent=0 // pred_check
    _
  $region7: #{forward.3} parent=0 // pred_check_branch
    %11 = sbr.rel (0) target = $region9
  $region8: #{forward.3} parent=0 // pred_region
    _
  $region9: #{forward.3} parent=0 // pred_fallthru
    _
  // Predicated region
  $region10: #{forward.3} parent=0 // pred_check
    _
  $region11: #{forward.3} parent=0 // pred_check_branch
    %13 = sbr.rel (0) target = $region13
  $region12: #{forward.3} parent=0 // pred_region
    _
  $region13: #{forward.3} parent=0 // pred_fallthru
    _
  %v14 = vld [vmem:[%s1] sm:$0xf]
  %v15 = vld [vmem:[%s1 + $0x4] sm:$0xf]
  %v16 = vld [vmem:[%s1 + $0x8] sm:$0xf]
  %v17 = vld [vmem:[%s1 + $0xc] sm:$0xf]
  %v18 = vld [vmem:[%s1 + $0x10] sm:$0xf]
  %v19 = vld [vmem:[%s1 + $0x14] sm:$0xf]
  %v20 = vld [vmem:[%s1 + $0x18] sm:$0xf]
  %v21 = vld [vmem:[%s1 + $0x1c] sm:$0xf]
  %v22 = vld [vmem:[%s1 + $0x20] sm:$0xf]
  %v23 = vld [vmem:[%s1 + $0x24] sm:$0xf]
  %v24 = vld [vmem:[%s1 + $0x28] sm:$0xf]
  %v25 = vld [vmem:[%s1 + $0x2c] sm:$0xf]
  %v26 = vld [vmem:[%s1 + $0x30] sm:$0xf]
  %v27 = vld [vmem:[%s1 + $0x34] sm:$0xf]
  %v28 = vld [vmem:[%s1 + $0x38] sm:$0xf]
  %v29 = vld [vmem:[%s1 + $0x3c] sm:$0xf]
  %v30 = vld [vmem:[%s2] sm:$0x1]
  %v31 = vld [vmem:[%s0] sm:$0xf]
  %v32 = vld [vmem:[%s0 + $0x4] sm:$0xf]
  %v33 = vld [vmem:[%s0 + $0x8] sm:$0xf]
  %v34 = vld [vmem:[%s0 + $0xc] sm:$0xf]
  %v35 = vld [vmem:[%s0 + $0x10] sm:$0xf]
  %v36 = vld [vmem:[%s0 + $0x14] sm:$0xf]
  %v37 = vld [vmem:[%s0 + $0x18] sm:$0xf]
  %v38 = vld [vmem:[%s0 + $0x1c] sm:$0xf]
  %v39 = vld [vmem:[%s0 + $0x20] sm:$0xf]
  %v40 = vld [vmem:[%s0 + $0x24] sm:$0xf]
  %v41 = vld [vmem:[%s0 + $0x28] sm:$0xf]
  %v42 = vld [vmem:[%s0 + $0x2c] sm:$0xf]
  %v43 = vld [vmem:[%s0 + $0x30] sm:$0xf]
  %v44 = vld [vmem:[%s0 + $0x34] sm:$0xf]
  %v45 = vld [vmem:[%s0 + $0x38] sm:$0xf]
  %v46 = vld [vmem:[%s0 + $0x3c] sm:$0xf]
  %v47 = vld [vmem:[%s0 + $0x40] sm:$0xf]
  %v48 = vld [vmem:[%s0 + $0x44] sm:$0xf]
  %v49 = vld [vmem:[%s0 + $0x48] sm:$0xf]
  %v50 = vld [vmem:[%s0 + $0x4c] sm:$0xf]
  %v51 = vld [vmem:[%s0 + $0x50] sm:$0xf]
  %v52 = vld [vmem:[%s0 + $0x54] sm:$0xf]
  %v53 = vld [vmem:[%s0 + $0x58] sm:$0xf]
  %v54 = vld [vmem:[%s0 + $0x5c] sm:$0xf]
  %v55 = vld [vmem:[%s0 + $0x60] sm:$0xf]
  %v56 = vld [vmem:[%s0 + $0x64] sm:$0xf]
  %v57 = vld [vmem:[%s0 + $0x68] sm:$0xf]
  %v58 = vld [vmem:[%s0 + $0x6c] sm:$0xf]
  %v59 = vld [vmem:[%s0 + $0x70] sm:$0xf]
  %v60 = vld [vmem:[%s0 + $0x74] sm:$0xf]
  %v61 = vld [vmem:[%s0 + $0x78] sm:$0xf]
  %v62 = vld [vmem:[%s0 + $0x7c] sm:$0xf]
  %v63 = vld [vmem:[%s0 + $0x80] sm:$0xf]
  %v64 = vld [vmem:[%s0 + $0x84] sm:$0xf]
  %v65 = vld [vmem:[%s0 + $0x88] sm:$0xf]
  %v66 = vld [vmem:[%s0 + $0x8c] sm:$0xf]
  %v67 = vld [vmem:[%s0 + $0x90] sm:$0xf]
  %v68 = vld [vmem:[%s0 + $0x94] sm:$0xf]
  %v69 = vld [vmem:[%s0 + $0x98] sm:$0xf]
  %v70 = vld [vmem:[%s0 + $0x9c] sm:$0xf]
  %v71 = vld [vmem:[%s0 + $0xa0] sm:$0xf]
  %v72 = vld [vmem:[%s0 + $0xa4] sm:$0xf]
  %v73 = vld [vmem:[%s0 + $0xa8] sm:$0xf]
  %v74 = vld [vmem:[%s0 + $0xac] sm:$0xf]
  %v75 = vld [vmem:[%s0 + $0xb0] sm:$0xf]
  %v76 = vld [vmem:[%s0 + $0xb4] sm:$0xf]
  %v77 = vld [vmem:[%s0 + $0xb8] sm:$0xf]
  %v78 = vld [vmem:[%s0 + $0xbc] sm:$0xf]
  %v79 = vld [vmem:[%s0 + $0xc0] sm:$0xf]
  %v81 = vperm.slane %v30, 0
  %v132 = vunpack.c.l.b16 %v31
  %v133 = vunpack.c.l.b16 %v32
  %v134 = vunpack.c.l.b16 %v33
  %v135 = vunpack.c.l.b16 %v34
  %v136 = vunpack.c.l.b16 %v35
  %v137 = vunpack.c.l.b16 %v36
  %v138 = vunpack.c.l.b16 %v37
  %v139 = vunpack.c.l.b16 %v38
  %v140 = vunpack.c.l.b16 %v39
  %v141 = vunpack.c.l.b16 %v40
  %v142 = vunpack.c.l.b16 %v41
  %v143 = vunpack.c.l.b16 %v42
  %v144 = vunpack.c.l.b16 %v43
  %v145 = vunpack.c.l.b16 %v44
  %v146 = vunpack.c.l.b16 %v45
  %v147 = vunpack.c.l.b16 %v46
  %v148 = vunpack.c.l.b16 %v47
  %v149 = vunpack.c.l.b16 %v48
  %v150 = vunpack.c.l.b16 %v49
  %v151 = vunpack.c.l.b16 %v50
  %v152 = vunpack.c.l.b16 %v51
  %v153 = vunpack.c.l.b16 %v52
  %v154 = vunpack.c.l.b16 %v53
  %v155 = vunpack.c.l.b16 %v54
  %v156 = vunpack.c.l.b16 %v55
  %v157 = vunpack.c.l.b16 %v56
  %v158 = vunpack.c.l.b16 %v57
  %v159 = vunpack.c.l.b16 %v58
  %v160 = vunpack.c.l.b16 %v59
  %v161 = vunpack.c.l.b16 %v60
  %v162 = vunpack.c.l.b16 %v61
  %v163 = vunpack.c.l.b16 %v62
  %v164 = vunpack.c.l.b16 %v63
  %v165 = vunpack.c.l.b16 %v64
  %v166 = vunpack.c.l.b16 %v65
  %v167 = vunpack.c.l.b16 %v66
  %v168 = vunpack.c.l.b16 %v67
  %v169 = vunpack.c.l.b16 %v68
  %v170 = vunpack.c.l.b16 %v69
  %v171 = vunpack.c.l.b16 %v70
  %v172 = vunpack.c.l.b16 %v71
  %v173 = vunpack.c.l.b16 %v72
  %v174 = vunpack.c.l.b16 %v73
  %v175 = vunpack.c.l.b16 %v74
  %v176 = vunpack.c.l.b16 %v75
  %v177 = vunpack.c.l.b16 %v76
  %v178 = vunpack.c.l.b16 %v77
  %v179 = vunpack.c.l.b16 %v78
  %v180 = vunpack.c.l.b16 %v79
  %v181 = vpack.c.b16 %v133, %v132
  %v182 = vpack.c.b16 %v135, %v134
  %v183 = vpack.c.b16 %v137, %v136
  %v184 = vpack.c.b16 %v139, %v138
  %v185 = vpack.c.b16 %v141, %v140
  %v186 = vpack.c.b16 %v143, %v142
  %v187 = vpack.c.b16 %v145, %v144
  %v188 = vpack.c.b16 %v147, %v146
  %v189 = vpack.c.b16 %v149, %v148
  %v190 = vpack.c.b16 %v151, %v150
  %v191 = vpack.c.b16 %v153, %v152
  %v192 = vpack.c.b16 %v155, %v154
  %v193 = vpack.c.b16 %v157, %v156
  %v194 = vpack.c.b16 %v159, %v158
  %v195 = vpack.c.b16 %v161, %v160
  %v196 = vpack.c.b16 %v163, %v162
  %v197 = vpack.c.b16 %v165, %v164
  %v198 = vpack.c.b16 %v167, %v166
  %v199 = vpack.c.b16 %v169, %v168
  %v200 = vpack.c.b16 %v171, %v170
  %v201 = vpack.c.b16 %v173, %v172
  %v202 = vpack.c.b16 %v175, %v174
  %v203 = vpack.c.b16 %v177, %v176
  %v204 = vpack.c.b16 %v179, %v178
  %v205 = vpack.c.b16 %v180, %v180
  %v247 = vunpack.c.l.b16 %v14
  %v248 = vunpack.c.l.b16 %v15
  %v249 = vunpack.c.l.b16 %v16
  %v250 = vunpack.c.l.b16 %v17
  %v251 = vunpack.c.l.b16 %v18
  %v252 = vunpack.c.l.b16 %v19
  %v253 = vunpack.c.l.b16 %v20
  %v254 = vunpack.c.l.b16 %v21
  %v255 = vunpack.c.l.b16 %v22
  %v256 = vunpack.c.l.b16 %v23
  %v257 = vunpack.c.l.b16 %v24
  %v258 = vunpack.c.l.b16 %v25
  %v259 = vunpack.c.l.b16 %v26
  %v260 = vunpack.c.l.b16 %v27
  %v261 = vunpack.c.l.b16 %v28
  %v262 = vunpack.c.l.b16 %v29
  %v263 = vpack.c.b16 %v248, %v247
  %v264 = vpack.c.b16 %v250, %v249
  %v265 = vpack.c.b16 %v252, %v251
  %v266 = vpack.c.b16 %v254, %v253
  %v267 = vpack.c.b16 %v256, %v255
  %v268 = vpack.c.b16 %v258, %v257
  %v269 = vpack.c.b16 %v260, %v259
  %v270 = vpack.c.b16 %v262, %v261
  %279 = vmatpush.bf16.msra.mxu0 %v270
  %280 = vmatpush.bf16.msra.mxu0 %v269
  %281 = vmatpush.bf16.msra.mxu0 %v268
  %282 = vmatpush.bf16.msra.mxu0 %v267
  %283 = vmatpush.bf16.msra.mxu0 %v266
  %284 = vmatpush.bf16.msra.mxu0 %v265
  %285 = vmatpush.bf16.msra.mxu0 %v264
  %286 = vmatpush.bf16.msra.mxu0 %v263
  %287 = vmatmul.bf16.gmra.mxu0 %v181
  %v288 = vpop.f32.mrf.mxu0
  %v289 = vadd.f32 %v81, %v288
  %v290 = vpop.f32.mrf.mxu0
  %v291 = vadd.f32 %v81, %v290
  %292 = vmatmul.bf16.gmra.mxu0 %v182
  %v293 = vpop.f32.mrf.mxu0
  %v294 = vadd.f32 %v81, %v293
  %v295 = vpop.f32.mrf.mxu0
  %v296 = vadd.f32 %v81, %v295
  %297 = vmatmul.bf16.gmra.mxu0 %v183
  %v298 = vpop.f32.mrf.mxu0
  %v299 = vadd.f32 %v81, %v298
  %v300 = vpop.f32.mrf.mxu0
  %v301 = vadd.f32 %v81, %v300
  %302 = vmatmul.bf16.gmra.mxu0 %v184
  %v303 = vpop.f32.mrf.mxu0
  %v304 = vadd.f32 %v81, %v303
  %v305 = vpop.f32.mrf.mxu0
  %v306 = vadd.f32 %v81, %v305
  %307 = vmatmul.bf16.gmra.mxu0 %v185
  %v308 = vpop.f32.mrf.mxu0
  %v309 = vadd.f32 %v81, %v308
  %v310 = vpop.f32.mrf.mxu0
  %v311 = vadd.f32 %v81, %v310
  %312 = vmatmul.bf16.gmra.mxu0 %v186
  %v313 = vpop.f32.mrf.mxu0
  %v314 = vadd.f32 %v81, %v313
  %v315 = vpop.f32.mrf.mxu0
  %v316 = vadd.f32 %v81, %v315
  %317 = vmatmul.bf16.gmra.mxu0 %v187
  %v318 = vpop.f32.mrf.mxu0
  %v319 = vadd.f32 %v81, %v318
  %v320 = vpop.f32.mrf.mxu0
  %v321 = vadd.f32 %v81, %v320
  %322 = vmatmul.bf16.gmra.mxu0 %v188
  %v323 = vpop.f32.mrf.mxu0
  %v324 = vadd.f32 %v81, %v323
  %v325 = vpop.f32.mrf.mxu0
  %v326 = vadd.f32 %v81, %v325
  %327 = vmatmul.bf16.gmra.mxu0 %v189
  %v328 = vpop.f32.mrf.mxu0
  %v329 = vadd.f32 %v81, %v328
  %v330 = vpop.f32.mrf.mxu0
  %v331 = vadd.f32 %v81, %v330
  %332 = vmatmul.bf16.gmra.mxu0 %v190
  %v333 = vpop.f32.mrf.mxu0
  %v334 = vadd.f32 %v81, %v333
  %v335 = vpop.f32.mrf.mxu0
  %v336 = vadd.f32 %v81, %v335
  %337 = vmatmul.bf16.gmra.mxu0 %v191
  %v338 = vpop.f32.mrf.mxu0
  %v339 = vadd.f32 %v81, %v338
  %v340 = vpop.f32.mrf.mxu0
  %v341 = vadd.f32 %v81, %v340
  %342 = vmatmul.bf16.gmra.mxu0 %v192
  %v343 = vpop.f32.mrf.mxu0
  %v344 = vadd.f32 %v81, %v343
  %v345 = vpop.f32.mrf.mxu0
  %v346 = vadd.f32 %v81, %v345
  %347 = vmatmul.bf16.gmra.mxu0 %v193
  %v348 = vpop.f32.mrf.mxu0
  %v349 = vadd.f32 %v81, %v348
  %v350 = vpop.f32.mrf.mxu0
  %v351 = vadd.f32 %v81, %v350
  %352 = vmatmul.bf16.gmra.mxu0 %v194
  %v353 = vpop.f32.mrf.mxu0
  %v354 = vadd.f32 %v81, %v353
  %v355 = vpop.f32.mrf.mxu0
  %v356 = vadd.f32 %v81, %v355
  %357 = vmatmul.bf16.gmra.mxu0 %v195
  %v358 = vpop.f32.mrf.mxu0
  %v359 = vadd.f32 %v81, %v358
  %v360 = vpop.f32.mrf.mxu0
  %v361 = vadd.f32 %v81, %v360
  %362 = vmatmul.bf16.gmra.mxu0 %v196
  %v363 = vpop.f32.mrf.mxu0
  %v364 = vadd.f32 %v81, %v363
  %v365 = vpop.f32.mrf.mxu0
  %v366 = vadd.f32 %v81, %v365
  %367 = vmatmul.bf16.gmra.mxu0 %v197
  %v368 = vpop.f32.mrf.mxu0
  %v369 = vadd.f32 %v81, %v368
  %v370 = vpop.f32.mrf.mxu0
  %v371 = vadd.f32 %v81, %v370
  %372 = vmatmul.bf16.gmra.mxu0 %v198
  %v373 = vpop.f32.mrf.mxu0
  %v374 = vadd.f32 %v81, %v373
  %v375 = vpop.f32.mrf.mxu0
  %v376 = vadd.f32 %v81, %v375
  %377 = vmatmul.bf16.gmra.mxu0 %v199
  %v378 = vpop.f32.mrf.mxu0
  %v379 = vadd.f32 %v81, %v378
  %v380 = vpop.f32.mrf.mxu0
  %v381 = vadd.f32 %v81, %v380
  %382 = vmatmul.bf16.gmra.mxu0 %v200
  %v383 = vpop.f32.mrf.mxu0
  %v384 = vadd.f32 %v81, %v383
  %v385 = vpop.f32.mrf.mxu0
  %v386 = vadd.f32 %v81, %v385
  %387 = vmatmul.bf16.gmra.mxu0 %v201
  %v388 = vpop.f32.mrf.mxu0
  %v389 = vadd.f32 %v81, %v388
  %v390 = vpop.f32.mrf.mxu0
  %v391 = vadd.f32 %v81, %v390
  %392 = vmatmul.bf16.gmra.mxu0 %v202
  %v393 = vpop.f32.mrf.mxu0
  %v394 = vadd.f32 %v81, %v393
  %v395 = vpop.f32.mrf.mxu0
  %v396 = vadd.f32 %v81, %v395
  %397 = vmatmul.bf16.gmra.mxu0 %v203
  %v398 = vpop.f32.mrf.mxu0
  %v399 = vadd.f32 %v81, %v398
  %v400 = vpop.f32.mrf.mxu0
  %v401 = vadd.f32 %v81, %v400
  %402 = vmatmul.bf16.gmra.mxu0 %v204
  %v403 = vpop.f32.mrf.mxu0
  %v404 = vadd.f32 %v81, %v403
  %v405 = vpop.f32.mrf.mxu0
  %v406 = vadd.f32 %v81, %v405
  %407 = vmatmul.bf16.gmra.mxu0 %v205
  %v408 = vpop.f32.mrf.mxu0
  %v409 = vadd.f32 %v81, %v408
  %v410 = vpop.f32.mrf.mxu0
  %411 = vdwg.mxu0
  %v412 = vmax.f32 %v289, 0.0
  %v413 = vmax.f32 %v291, 0.0
  %v414 = vmax.f32 %v294, 0.0
  %v415 = vmax.f32 %v296, 0.0
  %v416 = vmax.f32 %v299, 0.0
  %v417 = vmax.f32 %v301, 0.0
  %v418 = vmax.f32 %v304, 0.0
  %v419 = vmax.f32 %v306, 0.0
  %v420 = vmax.f32 %v309, 0.0
  %v421 = vmax.f32 %v311, 0.0
  %v422 = vmax.f32 %v314, 0.0
  %v423 = vmax.f32 %v316, 0.0
  %v424 = vmax.f32 %v319, 0.0
  %v425 = vmax.f32 %v321, 0.0
  %v426 = vmax.f32 %v324, 0.0
  %v427 = vmax.f32 %v326, 0.0
  %v428 = vmax.f32 %v329, 0.0
  %v429 = vmax.f32 %v331, 0.0
  %v430 = vmax.f32 %v334, 0.0
  %v431 = vmax.f32 %v336, 0.0
  %v432 = vmax.f32 %v339, 0.0
  %v433 = vmax.f32 %v341, 0.0
  %v434 = vmax.f32 %v344, 0.0
  %v435 = vmax.f32 %v346, 0.0
  %v436 = vmax.f32 %v349, 0.0
  %v437 = vmax.f32 %v351, 0.0
  %v438 = vmax.f32 %v354, 0.0
  %v439 = vmax.f32 %v356, 0.0
  %v440 = vmax.f32 %v359, 0.0
  %v441 = vmax.f32 %v361, 0.0
  %v442 = vmax.f32 %v364, 0.0
  %v443 = vmax.f32 %v366, 0.0
  %v444 = vmax.f32 %v369, 0.0
  %v445 = vmax.f32 %v371, 0.0
  %v446 = vmax.f32 %v374, 0.0
  %v447 = vmax.f32 %v376, 0.0
  %v448 = vmax.f32 %v379, 0.0
  %v449 = vmax.f32 %v381, 0.0
  %v450 = vmax.f32 %v384, 0.0
  %v451 = vmax.f32 %v386, 0.0
  %v452 = vmax.f32 %v389, 0.0
  %v453 = vmax.f32 %v391, 0.0
  %v454 = vmax.f32 %v394, 0.0
  %v455 = vmax.f32 %v396, 0.0
  %v456 = vmax.f32 %v399, 0.0
  %v457 = vmax.f32 %v401, 0.0
  %v458 = vmax.f32 %v404, 0.0
  %v459 = vmax.f32 %v406, 0.0
  %v460 = vmax.f32 %v409, 0.0
  %s461 = scalar_lea.vmem %s0, 196
  %v462 = vld [vmem:[%s461] sm:$0xf]
  %v463 = vld [vmem:[%s461 + $0x4] sm:$0xf]
  %v464 = vld [vmem:[%s461 + $0x8] sm:$0xf]
  %v465 = vld [vmem:[%s461 + $0xc] sm:$0xf]
  %v466 = vld [vmem:[%s461 + $0x10] sm:$0xf]
  %v467 = vld [vmem:[%s461 + $0x14] sm:$0xf]
  %v468 = vld [vmem:[%s461 + $0x18] sm:$0xf]
  %v469 = vld [vmem:[%s461 + $0x1c] sm:$0xf]
  %v470 = vld [vmem:[%s461 + $0x20] sm:$0xf]
  %v471 = vld [vmem:[%s461 + $0x24] sm:$0xf]
  %v472 = vld [vmem:[%s461 + $0x28] sm:$0xf]
  %v473 = vld [vmem:[%s461 + $0x2c] sm:$0xf]
  %v474 = vld [vmem:[%s461 + $0x30] sm:$0xf]
  %v475 = vld [vmem:[%s461 + $0x34] sm:$0xf]
  %v476 = vld [vmem:[%s461 + $0x38] sm:$0xf]
  %v477 = vld [vmem:[%s461 + $0x3c] sm:$0xf]
  %v478 = vld [vmem:[%s461 + $0x40] sm:$0xf]
  %v479 = vld [vmem:[%s461 + $0x44] sm:$0xf]
  %v480 = vld [vmem:[%s461 + $0x48] sm:$0xf]
  %v481 = vld [vmem:[%s461 + $0x4c] sm:$0xf]
  %v482 = vld [vmem:[%s461 + $0x50] sm:$0xf]
  %v483 = vld [vmem:[%s461 + $0x54] sm:$0xf]
  %v484 = vld [vmem:[%s461 + $0x58] sm:$0xf]
  %v485 = vld [vmem:[%s461 + $0x5c] sm:$0xf]
  %v486 = vld [vmem:[%s461 + $0x60] sm:$0xf]
  %v487 = vld [vmem:[%s461 + $0x64] sm:$0xf]
  %v488 = vld [vmem:[%s461 + $0x68] sm:$0xf]
  %v489 = vld [vmem:[%s461 + $0x6c] sm:$0xf]
  %v490 = vld [vmem:[%s461 + $0x70] sm:$0xf]
  %v491 = vld [vmem:[%s461 + $0x74] sm:$0xf]
  %v492 = vld [vmem:[%s461 + $0x78] sm:$0xf]
  %v493 = vld [vmem:[%s461 + $0x7c] sm:$0xf]
  %v494 = vld [vmem:[%s461 + $0x80] sm:$0xf]
  %v495 = vld [vmem:[%s461 + $0x84] sm:$0xf]
  %v496 = vld [vmem:[%s461 + $0x88] sm:$0xf]
  %v497 = vld [vmem:[%s461 + $0x8c] sm:$0xf]
  %v498 = vld [vmem:[%s461 + $0x90] sm:$0xf]
  %v499 = vld [vmem:[%s461 + $0x94] sm:$0xf]
  %v500 = vld [vmem:[%s461 + $0x98] sm:$0xf]
  %v501 = vld [vmem:[%s461 + $0x9c] sm:$0xf]
  %v502 = vld [vmem:[%s461 + $0xa0] sm:$0xf]
  %v503 = vld [vmem:[%s461 + $0xa4] sm:$0xf]
  %v504 = vld [vmem:[%s461 + $0xa8] sm:$0xf]
  %v505 = vld [vmem:[%s461 + $0xac] sm:$0xf]
  %v506 = vld [vmem:[%s461 + $0xb0] sm:$0xf]
  %v507 = vld [vmem:[%s461 + $0xb4] sm:$0xf]
  %v508 = vld [vmem:[%s461 + $0xb8] sm:$0xf]
  %v509 = vld [vmem:[%s461 + $0xbc] sm:$0xf]
  %v510 = vld [vmem:[%s461 + $0xc0] sm:$0xf]
  %v560 = vunpack.c.l.b16 %v462
  %v561 = vunpack.c.l.b16 %v463
  %v562 = vunpack.c.l.b16 %v464
  %v563 = vunpack.c.l.b16 %v465
  %v564 = vunpack.c.l.b16 %v466
  %v565 = vunpack.c.l.b16 %v467
  %v566 = vunpack.c.l.b16 %v468
  %v567 = vunpack.c.l.b16 %v469
  %v568 = vunpack.c.l.b16 %v470
  %v569 = vunpack.c.l.b16 %v471
  %v570 = vunpack.c.l.b16 %v472
  %v571 = vunpack.c.l.b16 %v473
  %v572 = vunpack.c.l.b16 %v474
  %v573 = vunpack.c.l.b16 %v475
  %v574 = vunpack.c.l.b16 %v476
  %v575 = vunpack.c.l.b16 %v477
  %v576 = vunpack.c.l.b16 %v478
  %v577 = vunpack.c.l.b16 %v479
  %v578 = vunpack.c.l.b16 %v480
  %v579 = vunpack.c.l.b16 %v481
  %v580 = vunpack.c.l.b16 %v482
  %v581 = vunpack.c.l.b16 %v483
  %v582 = vunpack.c.l.b16 %v484
  %v583 = vunpack.c.l.b16 %v485
  %v584 = vunpack.c.l.b16 %v486
  %v585 = vunpack.c.l.b16 %v487
  %v586 = vunpack.c.l.b16 %v488
  %v587 = vunpack.c.l.b16 %v489
  %v588 = vunpack.c.l.b16 %v490
  %v589 = vunpack.c.l.b16 %v491
  %v590 = vunpack.c.l.b16 %v492
  %v591 = vunpack.c.l.b16 %v493
  %v592 = vunpack.c.l.b16 %v494
  %v593 = vunpack.c.l.b16 %v495
  %v594 = vunpack.c.l.b16 %v496
  %v595 = vunpack.c.l.b16 %v497
  %v596 = vunpack.c.l.b16 %v498
  %v597 = vunpack.c.l.b16 %v499
  %v598 = vunpack.c.l.b16 %v500
  %v599 = vunpack.c.l.b16 %v501
  %v600 = vunpack.c.l.b16 %v502
  %v601 = vunpack.c.l.b16 %v503
  %v602 = vunpack.c.l.b16 %v504
  %v603 = vunpack.c.l.b16 %v505
  %v604 = vunpack.c.l.b16 %v506
  %v605 = vunpack.c.l.b16 %v507
  %v606 = vunpack.c.l.b16 %v508
  %v607 = vunpack.c.l.b16 %v509
  %v608 = vunpack.c.l.b16 %v510
  %v609 = vpack.c.b16 %v561, %v560
  %v610 = vpack.c.b16 %v563, %v562
  %v611 = vpack.c.b16 %v565, %v564
  %v612 = vpack.c.b16 %v567, %v566
  %v613 = vpack.c.b16 %v569, %v568
  %v614 = vpack.c.b16 %v571, %v570
  %v615 = vpack.c.b16 %v573, %v572
  %v616 = vpack.c.b16 %v575, %v574
  %v617 = vpack.c.b16 %v577, %v576
  %v618 = vpack.c.b16 %v579, %v578
  %v619 = vpack.c.b16 %v581, %v580
  %v620 = vpack.c.b16 %v583, %v582
  %v621 = vpack.c.b16 %v585, %v584
  %v622 = vpack.c.b16 %v587, %v586
  %v623 = vpack.c.b16 %v589, %v588
  %v624 = vpack.c.b16 %v591, %v590
  %v625 = vpack.c.b16 %v593, %v592
  %v626 = vpack.c.b16 %v595, %v594
  %v627 = vpack.c.b16 %v597, %v596
  %v628 = vpack.c.b16 %v599, %v598
  %v629 = vpack.c.b16 %v601, %v600
  %v630 = vpack.c.b16 %v603, %v602
  %v631 = vpack.c.b16 %v605, %v604
  %v632 = vpack.c.b16 %v607, %v606
  %v633 = vpack.c.b16 %v608, %v608
  %659 = vmatpush.bf16.msra.mxu0 %v270
  %660 = vmatpush.bf16.msra.mxu0 %v269
  %661 = vmatpush.bf16.msra.mxu0 %v268
  %662 = vmatpush.bf16.msra.mxu0 %v267
  %663 = vmatpush.bf16.msra.mxu0 %v266
  %664 = vmatpush.bf16.msra.mxu0 %v265
  %665 = vmatpush.bf16.msra.mxu0 %v264
  %666 = vmatpush.bf16.msra.mxu0 %v263
  %667 = vmatmul.bf16.gmra.mxu0 %v609
  %v668 = vpop.f32.mrf.mxu0
  %v669 = vadd.f32 %v81, %v668
  %v670 = vpop.f32.mrf.mxu0
  %v671 = vadd.f32 %v81, %v670
  %672 = vmatmul.bf16.gmra.mxu0 %v610
  %v673 = vpop.f32.mrf.mxu0
  %v674 = vadd.f32 %v81, %v673
  %v675 = vpop.f32.mrf.mxu0
  %v676 = vadd.f32 %v81, %v675
  %677 = vmatmul.bf16.gmra.mxu0 %v611
  %v678 = vpop.f32.mrf.mxu0
  %v679 = vadd.f32 %v81, %v678
  %v680 = vpop.f32.mrf.mxu0
  %v681 = vadd.f32 %v81, %v680
  %682 = vmatmul.bf16.gmra.mxu0 %v612
  %v683 = vpop.f32.mrf.mxu0
  %v684 = vadd.f32 %v81, %v683
  %v685 = vpop.f32.mrf.mxu0
  %v686 = vadd.f32 %v81, %v685
  %687 = vmatmul.bf16.gmra.mxu0 %v613
  %v688 = vpop.f32.mrf.mxu0
  %v689 = vadd.f32 %v81, %v688
  %v690 = vpop.f32.mrf.mxu0
  %v691 = vadd.f32 %v81, %v690
  %692 = vmatmul.bf16.gmra.mxu0 %v614
  %v693 = vpop.f32.mrf.mxu0
  %v694 = vadd.f32 %v81, %v693
  %v695 = vpop.f32.mrf.mxu0
  %v696 = vadd.f32 %v81, %v695
  %697 = vmatmul.bf16.gmra.mxu0 %v615
  %v698 = vpop.f32.mrf.mxu0
  %v699 = vadd.f32 %v81, %v698
  %v700 = vpop.f32.mrf.mxu0
  %v701 = vadd.f32 %v81, %v700
  %702 = vmatmul.bf16.gmra.mxu0 %v616
  %v703 = vpop.f32.mrf.mxu0
  %v704 = vadd.f32 %v81, %v703
  %v705 = vpop.f32.mrf.mxu0
  %v706 = vadd.f32 %v81, %v705
  %707 = vmatmul.bf16.gmra.mxu0 %v617
  %v708 = vpop.f32.mrf.mxu0
  %v709 = vadd.f32 %v81, %v708
  %v710 = vpop.f32.mrf.mxu0
  %v711 = vadd.f32 %v81, %v710
  %712 = vmatmul.bf16.gmra.mxu0 %v618
  %v713 = vpop.f32.mrf.mxu0
  %v714 = vadd.f32 %v81, %v713
  %v715 = vpop.f32.mrf.mxu0
  %v716 = vadd.f32 %v81, %v715
  %717 = vmatmul.bf16.gmra.mxu0 %v619
  %v718 = vpop.f32.mrf.mxu0
  %v719 = vadd.f32 %v81, %v718
  %v720 = vpop.f32.mrf.mxu0
  %v721 = vadd.f32 %v81, %v720
  %722 = vmatmul.bf16.gmra.mxu0 %v620
  %v723 = vpop.f32.mrf.mxu0
  %v724 = vadd.f32 %v81, %v723
  %v725 = vpop.f32.mrf.mxu0
  %v726 = vadd.f32 %v81, %v725
  %727 = vmatmul.bf16.gmra.mxu0 %v621
  %v728 = vpop.f32.mrf.mxu0
  %v729 = vadd.f32 %v81, %v728
  %v730 = vpop.f32.mrf.mxu0
  %v731 = vadd.f32 %v81, %v730
  %732 = vmatmul.bf16.gmra.mxu0 %v622
  %v733 = vpop.f32.mrf.mxu0
  %v734 = vadd.f32 %v81, %v733
  %v735 = vpop.f32.mrf.mxu0
  %v736 = vadd.f32 %v81, %v735
  %737 = vmatmul.bf16.gmra.mxu0 %v623
  %v738 = vpop.f32.mrf.mxu0
  %v739 = vadd.f32 %v81, %v738
  %v740 = vpop.f32.mrf.mxu0
  %v741 = vadd.f32 %v81, %v740
  %742 = vmatmul.bf16.gmra.mxu0 %v624
  %v743 = vpop.f32.mrf.mxu0
  %v744 = vadd.f32 %v81, %v743
  %v745 = vpop.f32.mrf.mxu0
  %v746 = vadd.f32 %v81, %v745
  %747 = vmatmul.bf16.gmra.mxu0 %v625
  %v748 = vpop.f32.mrf.mxu0
  %v749 = vadd.f32 %v81, %v748
  %v750 = vpop.f32.mrf.mxu0
  %v751 = vadd.f32 %v81, %v750
  %752 = vmatmul.bf16.gmra.mxu0 %v626
  %v753 = vpop.f32.mrf.mxu0
  %v754 = vadd.f32 %v81, %v753
  %v755 = vpop.f32.mrf.mxu0
  %v756 = vadd.f32 %v81, %v755
  %757 = vmatmul.bf16.gmra.mxu0 %v627
  %v758 = vpop.f32.mrf.mxu0
  %v759 = vadd.f32 %v81, %v758
  %v760 = vpop.f32.mrf.mxu0
  %v761 = vadd.f32 %v81, %v760
  %762 = vmatmul.bf16.gmra.mxu0 %v628
  %v763 = vpop.f32.mrf.mxu0
  %v764 = vadd.f32 %v81, %v763
  %v765 = vpop.f32.mrf.mxu0
  %v766 = vadd.f32 %v81, %v765
  %767 = vmatmul.bf16.gmra.mxu0 %v629
  %v768 = vpop.f32.mrf.mxu0
  %v769 = vadd.f32 %v81, %v768
  %v770 = vpop.f32.mrf.mxu0
  %v771 = vadd.f32 %v81, %v770
  %772 = vmatmul.bf16.gmra.mxu0 %v630
  %v773 = vpop.f32.mrf.mxu0
  %v774 = vadd.f32 %v81, %v773
  %v775 = vpop.f32.mrf.mxu0
  %v776 = vadd.f32 %v81, %v775
  %777 = vmatmul.bf16.gmra.mxu0 %v631
  %v778 = vpop.f32.mrf.mxu0
  %v779 = vadd.f32 %v81, %v778
  %v780 = vpop.f32.mrf.mxu0
  %v781 = vadd.f32 %v81, %v780
  %782 = vmatmul.bf16.gmra.mxu0 %v632
  %v783 = vpop.f32.mrf.mxu0
  %v784 = vadd.f32 %v81, %v783
  %v785 = vpop.f32.mrf.mxu0
  %v786 = vadd.f32 %v81, %v785
  %787 = vmatmul.bf16.gmra.mxu0 %v633
  %v788 = vpop.f32.mrf.mxu0
  %v789 = vadd.f32 %v81, %v788
  %v790 = vpop.f32.mrf.mxu0
  %791 = vdwg.mxu0
  %v792 = vmax.f32 %v669, 0.0
  %v793 = vmax.f32 %v671, 0.0
  %v794 = vmax.f32 %v674, 0.0
  %v795 = vmax.f32 %v676, 0.0
  %v796 = vmax.f32 %v679, 0.0
  %v797 = vmax.f32 %v681, 0.0
  %v798 = vmax.f32 %v684, 0.0
  %v799 = vmax.f32 %v686, 0.0
  %v800 = vmax.f32 %v689, 0.0
  %v801 = vmax.f32 %v691, 0.0
  %v802 = vmax.f32 %v694, 0.0
  %v803 = vmax.f32 %v696, 0.0
  %v804 = vmax.f32 %v699, 0.0
  %v805 = vmax.f32 %v701, 0.0
  %v806 = vmax.f32 %v704, 0.0
  %v807 = vmax.f32 %v706, 0.0
  %v808 = vmax.f32 %v709, 0.0
  %v809 = vmax.f32 %v711, 0.0
  %v810 = vmax.f32 %v714, 0.0
  %v811 = vmax.f32 %v716, 0.0
  %v812 = vmax.f32 %v719, 0.0
  %v813 = vmax.f32 %v721, 0.0
  %v814 = vmax.f32 %v724, 0.0
  %v815 = vmax.f32 %v726, 0.0
  %v816 = vmax.f32 %v729, 0.0
  %v817 = vmax.f32 %v731, 0.0
  %v818 = vmax.f32 %v734, 0.0
  %v819 = vmax.f32 %v736, 0.0
  %v820 = vmax.f32 %v739, 0.0
  %v821 = vmax.f32 %v741, 0.0
  %v822 = vmax.f32 %v744, 0.0
  %v823 = vmax.f32 %v746, 0.0
  %v824 = vmax.f32 %v749, 0.0
  %v825 = vmax.f32 %v751, 0.0
  %v826 = vmax.f32 %v754, 0.0
  %v827 = vmax.f32 %v756, 0.0
  %v828 = vmax.f32 %v759, 0.0
  %v829 = vmax.f32 %v761, 0.0
  %v830 = vmax.f32 %v764, 0.0
  %v831 = vmax.f32 %v766, 0.0
  %v832 = vmax.f32 %v769, 0.0
  %v833 = vmax.f32 %v771, 0.0
  %v834 = vmax.f32 %v774, 0.0
  %v835 = vmax.f32 %v776, 0.0
  %v836 = vmax.f32 %v779, 0.0
  %v837 = vmax.f32 %v781, 0.0
  %v838 = vmax.f32 %v784, 0.0
  %v839 = vmax.f32 %v786, 0.0
  %v840 = vmax.f32 %v789, 0.0
  %v841 = vmax.f32 %v412, %v792
  %v842 = vmax.f32 %v413, %v793
  %v843 = vmax.f32 %v414, %v794
  %v844 = vmax.f32 %v415, %v795
  %v845 = vmax.f32 %v416, %v796
  %v846 = vmax.f32 %v417, %v797
  %v847 = vmax.f32 %v418, %v798
  %v848 = vmax.f32 %v419, %v799
  %v849 = vmax.f32 %v420, %v800
  %v850 = vmax.f32 %v421, %v801
  %v851 = vmax.f32 %v422, %v802
  %v852 = vmax.f32 %v423, %v803
  %v853 = vmax.f32 %v424, %v804
  %v854 = vmax.f32 %v425, %v805
  %v855 = vmax.f32 %v426, %v806
  %v856 = vmax.f32 %v427, %v807
  %v857 = vmax.f32 %v428, %v808
  %v858 = vmax.f32 %v429, %v809
  %v859 = vmax.f32 %v430, %v810
  %v860 = vmax.f32 %v431, %v811
  %v861 = vmax.f32 %v432, %v812
  %v862 = vmax.f32 %v433, %v813
  %v863 = vmax.f32 %v434, %v814
  %v864 = vmax.f32 %v435, %v815
  %v865 = vmax.f32 %v436, %v816
  %v866 = vmax.f32 %v437, %v817
  %v867 = vmax.f32 %v438, %v818
  %v868 = vmax.f32 %v439, %v819
  %v869 = vmax.f32 %v440, %v820
  %v870 = vmax.f32 %v441, %v821
  %v871 = vmax.f32 %v442, %v822
  %v872 = vmax.f32 %v443, %v823
  %v873 = vmax.f32 %v444, %v824
  %v874 = vmax.f32 %v445, %v825
  %v875 = vmax.f32 %v446, %v826
  %v876 = vmax.f32 %v447, %v827
  %v877 = vmax.f32 %v448, %v828
  %v878 = vmax.f32 %v449, %v829
  %v879 = vmax.f32 %v450, %v830
  %v880 = vmax.f32 %v451, %v831
  %v881 = vmax.f32 %v452, %v832
  %v882 = vmax.f32 %v453, %v833
  %v883 = vmax.f32 %v454, %v834
  %v884 = vmax.f32 %v455, %v835
  %v885 = vmax.f32 %v456, %v836
  %v886 = vmax.f32 %v457, %v837
  %v887 = vmax.f32 %v458, %v838
  %v888 = vmax.f32 %v459, %v839
  %v889 = vmax.f32 %v460, %v840
  %s890 = scalar_lea.vmem %s0, 392
  %v891 = vld [vmem:[%s890] sm:$0xf]
  %v892 = vld [vmem:[%s890 + $0x4] sm:$0xf]
  %v893 = vld [vmem:[%s890 + $0x8] sm:$0xf]
  %v894 = vld [vmem:[%s890 + $0xc] sm:$0xf]
  %v895 = vld [vmem:[%s890 + $0x10] sm:$0xf]
  %v896 = vld [vmem:[%s890 + $0x14] sm:$0xf]
  %v897 = vld [vmem:[%s890 + $0x18] sm:$0xf]
  %v898 = vld [vmem:[%s890 + $0x1c] sm:$0xf]
  %v899 = vld [vmem:[%s890 + $0x20] sm:$0xf]
  %v900 = vld [vmem:[%s890 + $0x24] sm:$0xf]
  %v901 = vld [vmem:[%s890 + $0x28] sm:$0xf]
  %v902 = vld [vmem:[%s890 + $0x2c] sm:$0xf]
  %v903 = vld [vmem:[%s890 + $0x30] sm:$0xf]
  %v904 = vld [vmem:[%s890 + $0x34] sm:$0xf]
  %v905 = vld [vmem:[%s890 + $0x38] sm:$0xf]
  %v906 = vld [vmem:[%s890 + $0x3c] sm:$0xf]
  %v907 = vld [vmem:[%s890 + $0x40] sm:$0xf]
  %v908 = vld [vmem:[%s890 + $0x44] sm:$0xf]
  %v909 = vld [vmem:[%s890 + $0x48] sm:$0xf]
  %v910 = vld [vmem:[%s890 + $0x4c] sm:$0xf]
  %v911 = vld [vmem:[%s890 + $0x50] sm:$0xf]
  %v912 = vld [vmem:[%s890 + $0x54] sm:$0xf]
  %v913 = vld [vmem:[%s890 + $0x58] sm:$0xf]
  %v914 = vld [vmem:[%s890 + $0x5c] sm:$0xf]
  %v915 = vld [vmem:[%s890 + $0x60] sm:$0xf]
  %v916 = vld [vmem:[%s890 + $0x64] sm:$0xf]
  %v917 = vld [vmem:[%s890 + $0x68] sm:$0xf]
  %v918 = vld [vmem:[%s890 + $0x6c] sm:$0xf]
  %v919 = vld [vmem:[%s890 + $0x70] sm:$0xf]
  %v920 = vld [vmem:[%s890 + $0x74] sm:$0xf]
  %v921 = vld [vmem:[%s890 + $0x78] sm:$0xf]
  %v922 = vld [vmem:[%s890 + $0x7c] sm:$0xf]
  %v923 = vld [vmem:[%s890 + $0x80] sm:$0xf]
  %v924 = vld [vmem:[%s890 + $0x84] sm:$0xf]
  %v925 = vld [vmem:[%s890 + $0x88] sm:$0xf]
  %v926 = vld [vmem:[%s890 + $0x8c] sm:$0xf]
  %v927 = vld [vmem:[%s890 + $0x90] sm:$0xf]
  %v928 = vld [vmem:[%s890 + $0x94] sm:$0xf]
  %v929 = vld [vmem:[%s890 + $0x98] sm:$0xf]
  %v930 = vld [vmem:[%s890 + $0x9c] sm:$0xf]
  %v931 = vld [vmem:[%s890 + $0xa0] sm:$0xf]
  %v932 = vld [vmem:[%s890 + $0xa4] sm:$0xf]
  %v933 = vld [vmem:[%s890 + $0xa8] sm:$0xf]
  %v934 = vld [vmem:[%s890 + $0xac] sm:$0xf]
  %v935 = vld [vmem:[%s890 + $0xb0] sm:$0xf]
  %v936 = vld [vmem:[%s890 + $0xb4] sm:$0xf]
  %v937 = vld [vmem:[%s890 + $0xb8] sm:$0xf]
  %v938 = vld [vmem:[%s890 + $0xbc] sm:$0xf]
  %v939 = vld [vmem:[%s890 + $0xc0] sm:$0xf]
  %v989 = vunpack.c.l.b16 %v891
  %v990 = vunpack.c.l.b16 %v892
  %v991 = vunpack.c.l.b16 %v893
  %v992 = vunpack.c.l.b16 %v894
  %v993 = vunpack.c.l.b16 %v895
  %v994 = vunpack.c.l.b16 %v896
  %v995 = vunpack.c.l.b16 %v897
  %v996 = vunpack.c.l.b16 %v898
  %v997 = vunpack.c.l.b16 %v899
  %v998 = vunpack.c.l.b16 %v900
  %v999 = vunpack.c.l.b16 %v901
  %v1000 = vunpack.c.l.b16 %v902
  %v1001 = vunpack.c.l.b16 %v903
  %v1002 = vunpack.c.l.b16 %v904
  %v1003 = vunpack.c.l.b16 %v905
  %v1004 = vunpack.c.l.b16 %v906
  %v1005 = vunpack.c.l.b16 %v907
  %v1006 = vunpack.c.l.b16 %v908
  %v1007 = vunpack.c.l.b16 %v909
  %v1008 = vunpack.c.l.b16 %v910
  %v1009 = vunpack.c.l.b16 %v911
  %v1010 = vunpack.c.l.b16 %v912
  %v1011 = vunpack.c.l.b16 %v913
  %v1012 = vunpack.c.l.b16 %v914
  %v1013 = vunpack.c.l.b16 %v915
  %v1014 = vunpack.c.l.b16 %v916
  %v1015 = vunpack.c.l.b16 %v917
  %v1016 = vunpack.c.l.b16 %v918
  %v1017 = vunpack.c.l.b16 %v919
  %v1018 = vunpack.c.l.b16 %v920
  %v1019 = vunpack.c.l.b16 %v921
  %v1020 = vunpack.c.l.b16 %v922
  %v1021 = vunpack.c.l.b16 %v923
  %v1022 = vunpack.c.l.b16 %v924
  %v1023 = vunpack.c.l.b16 %v925
  %v1024 = vunpack.c.l.b16 %v926
  %v1025 = vunpack.c.l.b16 %v927
  %v1026 = vunpack.c.l.b16 %v928
  %v1027 = vunpack.c.l.b16 %v929
  %v1028 = vunpack.c.l.b16 %v930
  %v1029 = vunpack.c.l.b16 %v931
  %v1030 = vunpack.c.l.b16 %v932
  %v1031 = vunpack.c.l.b16 %v933
  %v1032 = vunpack.c.l.b16 %v934
  %v1033 = vunpack.c.l.b16 %v935
  %v1034 = vunpack.c.l.b16 %v936
  %v1035 = vunpack.c.l.b16 %v937
  %v1036 = vunpack.c.l.b16 %v938
  %v1037 = vunpack.c.l.b16 %v939
  %v1038 = vpack.c.b16 %v990, %v989
  %v1039 = vpack.c.b16 %v992, %v991
  %v1040 = vpack.c.b16 %v994, %v993
  %v1041 = vpack.c.b16 %v996, %v995
  %v1042 = vpack.c.b16 %v998, %v997
  %v1043 = vpack.c.b16 %v1000, %v999
  %v1044 = vpack.c.b16 %v1002, %v1001
  %v1045 = vpack.c.b16 %v1004, %v1003
  %v1046 = vpack.c.b16 %v1006, %v1005
  %v1047 = vpack.c.b16 %v1008, %v1007
  %v1048 = vpack.c.b16 %v1010, %v1009
  %v1049 = vpack.c.b16 %v1012, %v1011
  %v1050 = vpack.c.b16 %v1014, %v1013
  %v1051 = vpack.c.b16 %v1016, %v1015
  %v1052 = vpack.c.b16 %v1018, %v1017
  %v1053 = vpack.c.b16 %v1020, %v1019
  %v1054 = vpack.c.b16 %v1022, %v1021
  %v1055 = vpack.c.b16 %v1024, %v1023
  %v1056 = vpack.c.b16 %v1026, %v1025
  %v1057 = vpack.c.b16 %v1028, %v1027
  %v1058 = vpack.c.b16 %v1030, %v1029
  %v1059 = vpack.c.b16 %v1032, %v1031
  %v1060 = vpack.c.b16 %v1034, %v1033
  %v1061 = vpack.c.b16 %v1036, %v1035
  %v1062 = vpack.c.b16 %v1037, %v1037
  %1088 = vmatpush.bf16.msra.mxu0 %v270
  %1089 = vmatpush.bf16.msra.mxu0 %v269
  %1090 = vmatpush.bf16.msra.mxu0 %v268
  %1091 = vmatpush.bf16.msra.mxu0 %v267
  %1092 = vmatpush.bf16.msra.mxu0 %v266
  %1093 = vmatpush.bf16.msra.mxu0 %v265
  %1094 = vmatpush.bf16.msra.mxu0 %v264
  %1095 = vmatpush.bf16.msra.mxu0 %v263
  %1096 = vmatmul.bf16.gmra.mxu0 %v1038
  %v1097 = vpop.f32.mrf.mxu0
  %v1098 = vadd.f32 %v81, %v1097
  %v1099 = vpop.f32.mrf.mxu0
  %v1100 = vadd.f32 %v81, %v1099
  %1101 = vmatmul.bf16.gmra.mxu0 %v1039
  %v1102 = vpop.f32.mrf.mxu0
  %v1103 = vadd.f32 %v81, %v1102
  %v1104 = vpop.f32.mrf.mxu0
  %v1105 = vadd.f32 %v81, %v1104
  %1106 = vmatmul.bf16.gmra.mxu0 %v1040
  %v1107 = vpop.f32.mrf.mxu0
  %v1108 = vadd.f32 %v81, %v1107
  %v1109 = vpop.f32.mrf.mxu0
  %v1110 = vadd.f32 %v81, %v1109
  %1111 = vmatmul.bf16.gmra.mxu0 %v1041
  %v1112 = vpop.f32.mrf.mxu0
  %v1113 = vadd.f32 %v81, %v1112
  %v1114 = vpop.f32.mrf.mxu0
  %v1115 = vadd.f32 %v81, %v1114
  %1116 = vmatmul.bf16.gmra.mxu0 %v1042
  %v1117 = vpop.f32.mrf.mxu0
  %v1118 = vadd.f32 %v81, %v1117
  %v1119 = vpop.f32.mrf.mxu0
  %v1120 = vadd.f32 %v81, %v1119
  %1121 = vmatmul.bf16.gmra.mxu0 %v1043
  %v1122 = vpop.f32.mrf.mxu0
  %v1123 = vadd.f32 %v81, %v1122
  %v1124 = vpop.f32.mrf.mxu0
  %v1125 = vadd.f32 %v81, %v1124
  %1126 = vmatmul.bf16.gmra.mxu0 %v1044
  %v1127 = vpop.f32.mrf.mxu0
  %v1128 = vadd.f32 %v81, %v1127
  %v1129 = vpop.f32.mrf.mxu0
  %v1130 = vadd.f32 %v81, %v1129
  %1131 = vmatmul.bf16.gmra.mxu0 %v1045
  %v1132 = vpop.f32.mrf.mxu0
  %v1133 = vadd.f32 %v81, %v1132
  %v1134 = vpop.f32.mrf.mxu0
  %v1135 = vadd.f32 %v81, %v1134
  %1136 = vmatmul.bf16.gmra.mxu0 %v1046
  %v1137 = vpop.f32.mrf.mxu0
  %v1138 = vadd.f32 %v81, %v1137
  %v1139 = vpop.f32.mrf.mxu0
  %v1140 = vadd.f32 %v81, %v1139
  %1141 = vmatmul.bf16.gmra.mxu0 %v1047
  %v1142 = vpop.f32.mrf.mxu0
  %v1143 = vadd.f32 %v81, %v1142
  %v1144 = vpop.f32.mrf.mxu0
  %v1145 = vadd.f32 %v81, %v1144
  %1146 = vmatmul.bf16.gmra.mxu0 %v1048
  %v1147 = vpop.f32.mrf.mxu0
  %v1148 = vadd.f32 %v81, %v1147
  %v1149 = vpop.f32.mrf.mxu0
  %v1150 = vadd.f32 %v81, %v1149
  %1151 = vmatmul.bf16.gmra.mxu0 %v1049
  %v1152 = vpop.f32.mrf.mxu0
  %v1153 = vadd.f32 %v81, %v1152
  %v1154 = vpop.f32.mrf.mxu0
  %v1155 = vadd.f32 %v81, %v1154
  %1156 = vmatmul.bf16.gmra.mxu0 %v1050
  %v1157 = vpop.f32.mrf.mxu0
  %v1158 = vadd.f32 %v81, %v1157
  %v1159 = vpop.f32.mrf.mxu0
  %v1160 = vadd.f32 %v81, %v1159
  %1161 = vmatmul.bf16.gmra.mxu0 %v1051
  %v1162 = vpop.f32.mrf.mxu0
  %v1163 = vadd.f32 %v81, %v1162
  %v1164 = vpop.f32.mrf.mxu0
  %v1165 = vadd.f32 %v81, %v1164
  %1166 = vmatmul.bf16.gmra.mxu0 %v1052
  %v1167 = vpop.f32.mrf.mxu0
  %v1168 = vadd.f32 %v81, %v1167
  %v1169 = vpop.f32.mrf.mxu0
  %v1170 = vadd.f32 %v81, %v1169
  %1171 = vmatmul.bf16.gmra.mxu0 %v1053
  %v1172 = vpop.f32.mrf.mxu0
  %v1173 = vadd.f32 %v81, %v1172
  %v1174 = vpop.f32.mrf.mxu0
  %v1175 = vadd.f32 %v81, %v1174
  %1176 = vmatmul.bf16.gmra.mxu0 %v1054
  %v1177 = vpop.f32.mrf.mxu0
  %v1178 = vadd.f32 %v81, %v1177
  %v1179 = vpop.f32.mrf.mxu0
  %v1180 = vadd.f32 %v81, %v1179
  %1181 = vmatmul.bf16.gmra.mxu0 %v1055
  %v1182 = vpop.f32.mrf.mxu0
  %v1183 = vadd.f32 %v81, %v1182
  %v1184 = vpop.f32.mrf.mxu0
  %v1185 = vadd.f32 %v81, %v1184
  %1186 = vmatmul.bf16.gmra.mxu0 %v1056
  %v1187 = vpop.f32.mrf.mxu0
  %v1188 = vadd.f32 %v81, %v1187
  %v1189 = vpop.f32.mrf.mxu0
  %v1190 = vadd.f32 %v81, %v1189
  %1191 = vmatmul.bf16.gmra.mxu0 %v1057
  %v1192 = vpop.f32.mrf.mxu0
  %v1193 = vadd.f32 %v81, %v1192
  %v1194 = vpop.f32.mrf.mxu0
  %v1195 = vadd.f32 %v81, %v1194
  %1196 = vmatmul.bf16.gmra.mxu0 %v1058
  %v1197 = vpop.f32.mrf.mxu0
  %v1198 = vadd.f32 %v81, %v1197
  %v1199 = vpop.f32.mrf.mxu0
  %v1200 = vadd.f32 %v81, %v1199
  %1201 = vmatmul.bf16.gmra.mxu0 %v1059
  %v1202 = vpop.f32.mrf.mxu0
  %v1203 = vadd.f32 %v81, %v1202
  %v1204 = vpop.f32.mrf.mxu0
  %v1205 = vadd.f32 %v81, %v1204
  %1206 = vmatmul.bf16.gmra.mxu0 %v1060
  %v1207 = vpop.f32.mrf.mxu0
  %v1208 = vadd.f32 %v81, %v1207
  %v1209 = vpop.f32.mrf.mxu0
  %v1210 = vadd.f32 %v81, %v1209
  %1211 = vmatmul.bf16.gmra.mxu0 %v1061
  %v1212 = vpop.f32.mrf.mxu0
  %v1213 = vadd.f32 %v81, %v1212
  %v1214 = vpop.f32.mrf.mxu0
  %v1215 = vadd.f32 %v81, %v1214
  %1216 = vmatmul.bf16.gmra.mxu0 %v1062
  %v1217 = vpop.f32.mrf.mxu0
  %v1218 = vadd.f32 %v81, %v1217
  %v1219 = vpop.f32.mrf.mxu0
  %1220 = vdwg.mxu0
  %v1221 = vmax.f32 %v1098, 0.0
  %v1222 = vmax.f32 %v1100, 0.0
  %v1223 = vmax.f32 %v1103, 0.0
  %v1224 = vmax.f32 %v1105, 0.0
  %v1225 = vmax.f32 %v1108, 0.0
  %v1226 = vmax.f32 %v1110, 0.0
  %v1227 = vmax.f32 %v1113, 0.0
  %v1228 = vmax.f32 %v1115, 0.0
  %v1229 = vmax.f32 %v1118, 0.0
  %v1230 = vmax.f32 %v1120, 0.0
  %v1231 = vmax.f32 %v1123, 0.0
  %v1232 = vmax.f32 %v1125, 0.0
  %v1233 = vmax.f32 %v1128, 0.0
  %v1234 = vmax.f32 %v1130, 0.0
  %v1235 = vmax.f32 %v1133, 0.0
  %v1236 = vmax.f32 %v1135, 0.0
  %v1237 = vmax.f32 %v1138, 0.0
  %v1238 = vmax.f32 %v1140, 0.0
  %v1239 = vmax.f32 %v1143, 0.0
  %v1240 = vmax.f32 %v1145, 0.0
  %v1241 = vmax.f32 %v1148, 0.0
  %v1242 = vmax.f32 %v1150, 0.0
  %v1243 = vmax.f32 %v1153, 0.0
  %v1244 = vmax.f32 %v1155, 0.0
  %v1245 = vmax.f32 %v1158, 0.0
  %v1246 = vmax.f32 %v1160, 0.0
  %v1247 = vmax.f32 %v1163, 0.0
  %v1248 = vmax.f32 %v1165, 0.0
  %v1249 = vmax.f32 %v1168, 0.0
  %v1250 = vmax.f32 %v1170, 0.0
  %v1251 = vmax.f32 %v1173, 0.0
  %v1252 = vmax.f32 %v1175, 0.0
  %v1253 = vmax.f32 %v1178, 0.0
  %v1254 = vmax.f32 %v1180, 0.0
  %v1255 = vmax.f32 %v1183, 0.0
  %v1256 = vmax.f32 %v1185, 0.0
  %v1257 = vmax.f32 %v1188, 0.0
  %v1258 = vmax.f32 %v1190, 0.0
  %v1259 = vmax.f32 %v1193, 0.0
  %v1260 = vmax.f32 %v1195, 0.0
  %v1261 = vmax.f32 %v1198, 0.0
  %v1262 = vmax.f32 %v1200, 0.0
  %v1263 = vmax.f32 %v1203, 0.0
  %v1264 = vmax.f32 %v1205, 0.0
  %v1265 = vmax.f32 %v1208, 0.0
  %v1266 = vmax.f32 %v1210, 0.0
  %v1267 = vmax.f32 %v1213, 0.0
  %v1268 = vmax.f32 %v1215, 0.0
  %v1269 = vmax.f32 %v1218, 0.0
  %v1270 = vmax.f32 %v841, %v1221
  %v1271 = vmax.f32 %v842, %v1222
  %v1272 = vmax.f32 %v843, %v1223
  %v1273 = vmax.f32 %v844, %v1224
  %v1274 = vmax.f32 %v845, %v1225
  %v1275 = vmax.f32 %v846, %v1226
  %v1276 = vmax.f32 %v847, %v1227
  %v1277 = vmax.f32 %v848, %v1228
  %v1278 = vmax.f32 %v849, %v1229
  %v1279 = vmax.f32 %v850, %v1230
  %v1280 = vmax.f32 %v851, %v1231
  %v1281 = vmax.f32 %v852, %v1232
  %v1282 = vmax.f32 %v853, %v1233
  %v1283 = vmax.f32 %v854, %v1234
  %v1284 = vmax.f32 %v855, %v1235
  %v1285 = vmax.f32 %v856, %v1236
  %v1286 = vmax.f32 %v857, %v1237
  %v1287 = vmax.f32 %v858, %v1238
  %v1288 = vmax.f32 %v859, %v1239
  %v1289 = vmax.f32 %v860, %v1240
  %v1290 = vmax.f32 %v861, %v1241
  %v1291 = vmax.f32 %v862, %v1242
  %v1292 = vmax.f32 %v863, %v1243
  %v1293 = vmax.f32 %v864, %v1244
  %v1294 = vmax.f32 %v865, %v1245
  %v1295 = vmax.f32 %v866, %v1246
  %v1296 = vmax.f32 %v867, %v1247
  %v1297 = vmax.f32 %v868, %v1248
  %v1298 = vmax.f32 %v869, %v1249
  %v1299 = vmax.f32 %v870, %v1250
  %v1300 = vmax.f32 %v871, %v1251
  %v1301 = vmax.f32 %v872, %v1252
  %v1302 = vmax.f32 %v873, %v1253
  %v1303 = vmax.f32 %v874, %v1254
  %v1304 = vmax.f32 %v875, %v1255
  %v1305 = vmax.f32 %v876, %v1256
  %v1306 = vmax.f32 %v877, %v1257
  %v1307 = vmax.f32 %v878, %v1258
  %v1308 = vmax.f32 %v879, %v1259
  %v1309 = vmax.f32 %v880, %v1260
  %v1310 = vmax.f32 %v881, %v1261
  %v1311 = vmax.f32 %v882, %v1262
  %v1312 = vmax.f32 %v883, %v1263
  %v1313 = vmax.f32 %v884, %v1264
  %v1314 = vmax.f32 %v885, %v1265
  %v1315 = vmax.f32 %v886, %v1266
  %v1316 = vmax.f32 %v887, %v1267
  %v1317 = vmax.f32 %v888, %v1268
  %v1318 = vmax.f32 %v889, %v1269
  %s1319 = scalar_lea.vmem %s0, 588
  %v1320 = vld [vmem:[%s1319] sm:$0xf]
  %v1321 = vld [vmem:[%s1319 + $0x4] sm:$0xf]
  %v1322 = vld [vmem:[%s1319 + $0x8] sm:$0xf]
  %v1323 = vld [vmem:[%s1319 + $0xc] sm:$0xf]
  %v1324 = vld [vmem:[%s1319 + $0x10] sm:$0xf]
  %v1325 = vld [vmem:[%s1319 + $0x14] sm:$0xf]
  %v1326 = vld [vmem:[%s1319 + $0x18] sm:$0xf]
  %v1327 = vld [vmem:[%s1319 + $0x1c] sm:$0xf]
  %v1328 = vld [vmem:[%s1319 + $0x20] sm:$0xf]
  %v1329 = vld [vmem:[%s1319 + $0x24] sm:$0xf]
  %v1330 = vld [vmem:[%s1319 + $0x28] sm:$0xf]
  %v1331 = vld [vmem:[%s1319 + $0x2c] sm:$0xf]
  %v1332 = vld [vmem:[%s1319 + $0x30] sm:$0xf]
  %v1333 = vld [vmem:[%s1319 + $0x34] sm:$0xf]
  %v1334 = vld [vmem:[%s1319 + $0x38] sm:$0xf]
  %v1335 = vld [vmem:[%s1319 + $0x3c] sm:$0xf]
  %v1336 = vld [vmem:[%s1319 + $0x40] sm:$0xf]
  %v1337 = vld [vmem:[%s1319 + $0x44] sm:$0xf]
  %v1338 = vld [vmem:[%s1319 + $0x48] sm:$0xf]
  %v1339 = vld [vmem:[%s1319 + $0x4c] sm:$0xf]
  %v1340 = vld [vmem:[%s1319 + $0x50] sm:$0xf]
  %v1341 = vld [vmem:[%s1319 + $0x54] sm:$0xf]
  %v1342 = vld [vmem:[%s1319 + $0x58] sm:$0xf]
  %v1343 = vld [vmem:[%s1319 + $0x5c] sm:$0xf]
  %v1344 = vld [vmem:[%s1319 + $0x60] sm:$0xf]
  %v1345 = vld [vmem:[%s1319 + $0x64] sm:$0xf]
  %v1346 = vld [vmem:[%s1319 + $0x68] sm:$0xf]
  %v1347 = vld [vmem:[%s1319 + $0x6c] sm:$0xf]
  %v1348 = vld [vmem:[%s1319 + $0x70] sm:$0xf]
  %v1349 = vld [vmem:[%s1319 + $0x74] sm:$0xf]
  %v1350 = vld [vmem:[%s1319 + $0x78] sm:$0xf]
  %v1351 = vld [vmem:[%s1319 + $0x7c] sm:$0xf]
  %v1352 = vld [vmem:[%s1319 + $0x80] sm:$0xf]
  %v1353 = vld [vmem:[%s1319 + $0x84] sm:$0xf]
  %v1354 = vld [vmem:[%s1319 + $0x88] sm:$0xf]
  %v1355 = vld [vmem:[%s1319 + $0x8c] sm:$0xf]
  %v1356 = vld [vmem:[%s1319 + $0x90] sm:$0xf]
  %v1357 = vld [vmem:[%s1319 + $0x94] sm:$0xf]
  %v1358 = vld [vmem:[%s1319 + $0x98] sm:$0xf]
  %v1359 = vld [vmem:[%s1319 + $0x9c] sm:$0xf]
  %v1360 = vld [vmem:[%s1319 + $0xa0] sm:$0xf]
  %v1361 = vld [vmem:[%s1319 + $0xa4] sm:$0xf]
  %v1362 = vld [vmem:[%s1319 + $0xa8] sm:$0xf]
  %v1363 = vld [vmem:[%s1319 + $0xac] sm:$0xf]
  %v1364 = vld [vmem:[%s1319 + $0xb0] sm:$0xf]
  %v1365 = vld [vmem:[%s1319 + $0xb4] sm:$0xf]
  %v1366 = vld [vmem:[%s1319 + $0xb8] sm:$0xf]
  %v1367 = vld [vmem:[%s1319 + $0xbc] sm:$0xf]
  %v1368 = vld [vmem:[%s1319 + $0xc0] sm:$0xf]
  %v1418 = vunpack.c.l.b16 %v1320
  %v1419 = vunpack.c.l.b16 %v1321
  %v1420 = vunpack.c.l.b16 %v1322
  %v1421 = vunpack.c.l.b16 %v1323
  %v1422 = vunpack.c.l.b16 %v1324
  %v1423 = vunpack.c.l.b16 %v1325
  %v1424 = vunpack.c.l.b16 %v1326
  %v1425 = vunpack.c.l.b16 %v1327
  %v1426 = vunpack.c.l.b16 %v1328
  %v1427 = vunpack.c.l.b16 %v1329
  %v1428 = vunpack.c.l.b16 %v1330
  %v1429 = vunpack.c.l.b16 %v1331
  %v1430 = vunpack.c.l.b16 %v1332
  %v1431 = vunpack.c.l.b16 %v1333
  %v1432 = vunpack.c.l.b16 %v1334
  %v1433 = vunpack.c.l.b16 %v1335
  %v1434 = vunpack.c.l.b16 %v1336
  %v1435 = vunpack.c.l.b16 %v1337
  %v1436 = vunpack.c.l.b16 %v1338
  %v1437 = vunpack.c.l.b16 %v1339
  %v1438 = vunpack.c.l.b16 %v1340
  %v1439 = vunpack.c.l.b16 %v1341
  %v1440 = vunpack.c.l.b16 %v1342
  %v1441 = vunpack.c.l.b16 %v1343
  %v1442 = vunpack.c.l.b16 %v1344
  %v1443 = vunpack.c.l.b16 %v1345
  %v1444 = vunpack.c.l.b16 %v1346
  %v1445 = vunpack.c.l.b16 %v1347
  %v1446 = vunpack.c.l.b16 %v1348
  %v1447 = vunpack.c.l.b16 %v1349
  %v1448 = vunpack.c.l.b16 %v1350
  %v1449 = vunpack.c.l.b16 %v1351
  %v1450 = vunpack.c.l.b16 %v1352
  %v1451 = vunpack.c.l.b16 %v1353
  %v1452 = vunpack.c.l.b16 %v1354
  %v1453 = vunpack.c.l.b16 %v1355
  %v1454 = vunpack.c.l.b16 %v1356
  %v1455 = vunpack.c.l.b16 %v1357
  %v1456 = vunpack.c.l.b16 %v1358
  %v1457 = vunpack.c.l.b16 %v1359
  %v1458 = vunpack.c.l.b16 %v1360
  %v1459 = vunpack.c.l.b16 %v1361
  %v1460 = vunpack.c.l.b16 %v1362
  %v1461 = vunpack.c.l.b16 %v1363
  %v1462 = vunpack.c.l.b16 %v1364
  %v1463 = vunpack.c.l.b16 %v1365
  %v1464 = vunpack.c.l.b16 %v1366
  %v1465 = vunpack.c.l.b16 %v1367
  %v1466 = vunpack.c.l.b16 %v1368
  %v1467 = vpack.c.b16 %v1419, %v1418
  %v1468 = vpack.c.b16 %v1421, %v1420
  %v1469 = vpack.c.b16 %v1423, %v1422
  %v1470 = vpack.c.b16 %v1425, %v1424
  %v1471 = vpack.c.b16 %v1427, %v1426
  %v1472 = vpack.c.b16 %v1429, %v1428
  %v1473 = vpack.c.b16 %v1431, %v1430
  %v1474 = vpack.c.b16 %v1433, %v1432
  %v1475 = vpack.c.b16 %v1435, %v1434
  %v1476 = vpack.c.b16 %v1437, %v1436
  %v1477 = vpack.c.b16 %v1439, %v1438
  %v1478 = vpack.c.b16 %v1441, %v1440
  %v1479 = vpack.c.b16 %v1443, %v1442
  %v1480 = vpack.c.b16 %v1445, %v1444
  %v1481 = vpack.c.b16 %v1447, %v1446
  %v1482 = vpack.c.b16 %v1449, %v1448
  %v1483 = vpack.c.b16 %v1451, %v1450
  %v1484 = vpack.c.b16 %v1453, %v1452
  %v1485 = vpack.c.b16 %v1455, %v1454
  %v1486 = vpack.c.b16 %v1457, %v1456
  %v1487 = vpack.c.b16 %v1459, %v1458
  %v1488 = vpack.c.b16 %v1461, %v1460
  %v1489 = vpack.c.b16 %v1463, %v1462
  %v1490 = vpack.c.b16 %v1465, %v1464
  %v1491 = vpack.c.b16 %v1466, %v1466
  %1517 = vmatpush.bf16.msra.mxu0 %v270
  %1518 = vmatpush.bf16.msra.mxu0 %v269
  %1519 = vmatpush.bf16.msra.mxu0 %v268
  %1520 = vmatpush.bf16.msra.mxu0 %v267
  %1521 = vmatpush.bf16.msra.mxu0 %v266
  %1522 = vmatpush.bf16.msra.mxu0 %v265
  %1523 = vmatpush.bf16.msra.mxu0 %v264
  %1524 = vmatpush.bf16.msra.mxu0 %v263
  %1525 = vmatmul.bf16.gmra.mxu0 %v1467
  %v1526 = vpop.f32.mrf.mxu0
  %v1527 = vadd.f32 %v81, %v1526
  %v1528 = vpop.f32.mrf.mxu0
  %v1529 = vadd.f32 %v81, %v1528
  %1530 = vmatmul.bf16.gmra.mxu0 %v1468
  %v1531 = vpop.f32.mrf.mxu0
  %v1532 = vadd.f32 %v81, %v1531
  %v1533 = vpop.f32.mrf.mxu0
  %v1534 = vadd.f32 %v81, %v1533
  %1535 = vmatmul.bf16.gmra.mxu0 %v1469
  %v1536 = vpop.f32.mrf.mxu0
  %v1537 = vadd.f32 %v81, %v1536
  %v1538 = vpop.f32.mrf.mxu0
  %v1539 = vadd.f32 %v81, %v1538
  %1540 = vmatmul.bf16.gmra.mxu0 %v1470
  %v1541 = vpop.f32.mrf.mxu0
  %v1542 = vadd.f32 %v81, %v1541
  %v1543 = vpop.f32.mrf.mxu0
  %v1544 = vadd.f32 %v81, %v1543
  %1545 = vmatmul.bf16.gmra.mxu0 %v1471
  %v1546 = vpop.f32.mrf.mxu0
  %v1547 = vadd.f32 %v81, %v1546
  %v1548 = vpop.f32.mrf.mxu0
  %v1549 = vadd.f32 %v81, %v1548
  %1550 = vmatmul.bf16.gmra.mxu0 %v1472
  %v1551 = vpop.f32.mrf.mxu0
  %v1552 = vadd.f32 %v81, %v1551
  %v1553 = vpop.f32.mrf.mxu0
  %v1554 = vadd.f32 %v81, %v1553
  %1555 = vmatmul.bf16.gmra.mxu0 %v1473
  %v1556 = vpop.f32.mrf.mxu0
  %v1557 = vadd.f32 %v81, %v1556
  %v1558 = vpop.f32.mrf.mxu0
  %v1559 = vadd.f32 %v81, %v1558
  %1560 = vmatmul.bf16.gmra.mxu0 %v1474
  %v1561 = vpop.f32.mrf.mxu0
  %v1562 = vadd.f32 %v81, %v1561
  %v1563 = vpop.f32.mrf.mxu0
  %v1564 = vadd.f32 %v81, %v1563
  %1565 = vmatmul.bf16.gmra.mxu0 %v1475
  %v1566 = vpop.f32.mrf.mxu0
  %v1567 = vadd.f32 %v81, %v1566
  %v1568 = vpop.f32.mrf.mxu0
  %v1569 = vadd.f32 %v81, %v1568
  %1570 = vmatmul.bf16.gmra.mxu0 %v1476
  %v1571 = vpop.f32.mrf.mxu0
  %v1572 = vadd.f32 %v81, %v1571
  %v1573 = vpop.f32.mrf.mxu0
  %v1574 = vadd.f32 %v81, %v1573
  %1575 = vmatmul.bf16.gmra.mxu0 %v1477
  %v1576 = vpop.f32.mrf.mxu0
  %v1577 = vadd.f32 %v81, %v1576
  %v1578 = vpop.f32.mrf.mxu0
  %v1579 = vadd.f32 %v81, %v1578
  %1580 = vmatmul.bf16.gmra.mxu0 %v1478
  %v1581 = vpop.f32.mrf.mxu0
  %v1582 = vadd.f32 %v81, %v1581
  %v1583 = vpop.f32.mrf.mxu0
  %v1584 = vadd.f32 %v81, %v1583
  %1585 = vmatmul.bf16.gmra.mxu0 %v1479
  %v1586 = vpop.f32.mrf.mxu0
  %v1587 = vadd.f32 %v81, %v1586
  %v1588 = vpop.f32.mrf.mxu0
  %v1589 = vadd.f32 %v81, %v1588
  %1590 = vmatmul.bf16.gmra.mxu0 %v1480
  %v1591 = vpop.f32.mrf.mxu0
  %v1592 = vadd.f32 %v81, %v1591
  %v1593 = vpop.f32.mrf.mxu0
  %v1594 = vadd.f32 %v81, %v1593
  %1595 = vmatmul.bf16.gmra.mxu0 %v1481
  %v1596 = vpop.f32.mrf.mxu0
  %v1597 = vadd.f32 %v81, %v1596
  %v1598 = vpop.f32.mrf.mxu0
  %v1599 = vadd.f32 %v81, %v1598
  %1600 = vmatmul.bf16.gmra.mxu0 %v1482
  %v1601 = vpop.f32.mrf.mxu0
  %v1602 = vadd.f32 %v81, %v1601
  %v1603 = vpop.f32.mrf.mxu0
  %v1604 = vadd.f32 %v81, %v1603
  %1605 = vmatmul.bf16.gmra.mxu0 %v1483
  %v1606 = vpop.f32.mrf.mxu0
  %v1607 = vadd.f32 %v81, %v1606
  %v1608 = vpop.f32.mrf.mxu0
  %v1609 = vadd.f32 %v81, %v1608
  %1610 = vmatmul.bf16.gmra.mxu0 %v1484
  %v1611 = vpop.f32.mrf.mxu0
  %v1612 = vadd.f32 %v81, %v1611
  %v1613 = vpop.f32.mrf.mxu0
  %v1614 = vadd.f32 %v81, %v1613
  %1615 = vmatmul.bf16.gmra.mxu0 %v1485
  %v1616 = vpop.f32.mrf.mxu0
  %v1617 = vadd.f32 %v81, %v1616
  %v1618 = vpop.f32.mrf.mxu0
  %v1619 = vadd.f32 %v81, %v1618
  %1620 = vmatmul.bf16.gmra.mxu0 %v1486
  %v1621 = vpop.f32.mrf.mxu0
  %v1622 = vadd.f32 %v81, %v1621
  %v1623 = vpop.f32.mrf.mxu0
  %v1624 = vadd.f32 %v81, %v1623
  %1625 = vmatmul.bf16.gmra.mxu0 %v1487
  %v1626 = vpop.f32.mrf.mxu0
  %v1627 = vadd.f32 %v81, %v1626
  %v1628 = vpop.f32.mrf.mxu0
  %v1629 = vadd.f32 %v81, %v1628
  %1630 = vmatmul.bf16.gmra.mxu0 %v1488
  %v1631 = vpop.f32.mrf.mxu0
  %v1632 = vadd.f32 %v81, %v1631
  %v1633 = vpop.f32.mrf.mxu0
  %v1634 = vadd.f32 %v81, %v1633
  %1635 = vmatmul.bf16.gmra.mxu0 %v1489
  %v1636 = vpop.f32.mrf.mxu0
  %v1637 = vadd.f32 %v81, %v1636
  %v1638 = vpop.f32.mrf.mxu0
  %v1639 = vadd.f32 %v81, %v1638
  %1640 = vmatmul.bf16.gmra.mxu0 %v1490
  %v1641 = vpop.f32.mrf.mxu0
  %v1642 = vadd.f32 %v81, %v1641
  %v1643 = vpop.f32.mrf.mxu0
  %v1644 = vadd.f32 %v81, %v1643
  %1645 = vmatmul.bf16.gmra.mxu0 %v1491
  %v1646 = vpop.f32.mrf.mxu0
  %v1647 = vadd.f32 %v81, %v1646
  %v1648 = vpop.f32.mrf.mxu0
  %1649 = vdwg.mxu0
  %v1650 = vmax.f32 %v1527, 0.0
  %v1651 = vmax.f32 %v1529, 0.0
  %v1652 = vmax.f32 %v1532, 0.0
  %v1653 = vmax.f32 %v1534, 0.0
  %v1654 = vmax.f32 %v1537, 0.0
  %v1655 = vmax.f32 %v1539, 0.0
  %v1656 = vmax.f32 %v1542, 0.0
  %v1657 = vmax.f32 %v1544, 0.0
  %v1658 = vmax.f32 %v1547, 0.0
  %v1659 = vmax.f32 %v1549, 0.0
  %v1660 = vmax.f32 %v1552, 0.0
  %v1661 = vmax.f32 %v1554, 0.0
  %v1662 = vmax.f32 %v1557, 0.0
  %v1663 = vmax.f32 %v1559, 0.0
  %v1664 = vmax.f32 %v1562, 0.0
  %v1665 = vmax.f32 %v1564, 0.0
  %v1666 = vmax.f32 %v1567, 0.0
  %v1667 = vmax.f32 %v1569, 0.0
  %v1668 = vmax.f32 %v1572, 0.0
  %v1669 = vmax.f32 %v1574, 0.0
  %v1670 = vmax.f32 %v1577, 0.0
  %v1671 = vmax.f32 %v1579, 0.0
  %v1672 = vmax.f32 %v1582, 0.0
  %v1673 = vmax.f32 %v1584, 0.0
  %v1674 = vmax.f32 %v1587, 0.0
  %v1675 = vmax.f32 %v1589, 0.0
  %v1676 = vmax.f32 %v1592, 0.0
  %v1677 = vmax.f32 %v1594, 0.0
  %v1678 = vmax.f32 %v1597, 0.0
  %v1679 = vmax.f32 %v1599, 0.0
  %v1680 = vmax.f32 %v1602, 0.0
  %v1681 = vmax.f32 %v1604, 0.0
  %v1682 = vmax.f32 %v1607, 0.0
  %v1683 = vmax.f32 %v1609, 0.0
  %v1684 = vmax.f32 %v1612, 0.0
  %v1685 = vmax.f32 %v1614, 0.0
  %v1686 = vmax.f32 %v1617, 0.0
  %v1687 = vmax.f32 %v1619, 0.0
  %v1688 = vmax.f32 %v1622, 0.0
  %v1689 = vmax.f32 %v1624, 0.0
  %v1690 = vmax.f32 %v1627, 0.0
  %v1691 = vmax.f32 %v1629, 0.0
  %v1692 = vmax.f32 %v1632, 0.0
  %v1693 = vmax.f32 %v1634, 0.0
  %v1694 = vmax.f32 %v1637, 0.0
  %v1695 = vmax.f32 %v1639, 0.0
  %v1696 = vmax.f32 %v1642, 0.0
  %v1697 = vmax.f32 %v1644, 0.0
  %v1698 = vmax.f32 %v1647, 0.0
  %v1699 = vmax.f32 %v1270, %v1650
  %v1700 = vmax.f32 %v1271, %v1651
  %v1701 = vmax.f32 %v1272, %v1652
  %v1702 = vmax.f32 %v1273, %v1653
  %v1703 = vmax.f32 %v1274, %v1654
  %v1704 = vmax.f32 %v1275, %v1655
  %v1705 = vmax.f32 %v1276, %v1656
  %v1706 = vmax.f32 %v1277, %v1657
  %v1707 = vmax.f32 %v1278, %v1658
  %v1708 = vmax.f32 %v1279, %v1659
  %v1709 = vmax.f32 %v1280, %v1660
  %v1710 = vmax.f32 %v1281, %v1661
  %v1711 = vmax.f32 %v1282, %v1662
  %v1712 = vmax.f32 %v1283, %v1663
  %v1713 = vmax.f32 %v1284, %v1664
  %v1714 = vmax.f32 %v1285, %v1665
  %v1715 = vmax.f32 %v1286, %v1666
  %v1716 = vmax.f32 %v1287, %v1667
  %v1717 = vmax.f32 %v1288, %v1668
  %v1718 = vmax.f32 %v1289, %v1669
  %v1719 = vmax.f32 %v1290, %v1670
  %v1720 = vmax.f32 %v1291, %v1671
  %v1721 = vmax.f32 %v1292, %v1672
  %v1722 = vmax.f32 %v1293, %v1673
  %v1723 = vmax.f32 %v1294, %v1674
  %v1724 = vmax.f32 %v1295, %v1675
  %v1725 = vmax.f32 %v1296, %v1676
  %v1726 = vmax.f32 %v1297, %v1677
  %v1727 = vmax.f32 %v1298, %v1678
  %v1728 = vmax.f32 %v1299, %v1679
  %v1729 = vmax.f32 %v1300, %v1680
  %v1730 = vmax.f32 %v1301, %v1681
  %v1731 = vmax.f32 %v1302, %v1682
  %v1732 = vmax.f32 %v1303, %v1683
  %v1733 = vmax.f32 %v1304, %v1684
  %v1734 = vmax.f32 %v1305, %v1685
  %v1735 = vmax.f32 %v1306, %v1686
  %v1736 = vmax.f32 %v1307, %v1687
  %v1737 = vmax.f32 %v1308, %v1688
  %v1738 = vmax.f32 %v1309, %v1689
  %v1739 = vmax.f32 %v1310, %v1690
  %v1740 = vmax.f32 %v1311, %v1691
  %v1741 = vmax.f32 %v1312, %v1692
  %v1742 = vmax.f32 %v1313, %v1693
  %v1743 = vmax.f32 %v1314, %v1694
  %v1744 = vmax.f32 %v1315, %v1695
  %v1745 = vmax.f32 %v1316, %v1696
  %v1746 = vmax.f32 %v1317, %v1697
  %v1747 = vmax.f32 %v1318, %v1698
  %v1748 = vpack.c.bf16 %v1699, %v1699
  %v1749 = vpack.c.bf16 %v1700, %v1700
  %v1750 = vpack.c.bf16 %v1701, %v1701
  %v1751 = vpack.c.bf16 %v1702, %v1702
  %v1752 = vpack.c.bf16 %v1703, %v1703
  %v1753 = vpack.c.bf16 %v1704, %v1704
  %v1754 = vpack.c.bf16 %v1705, %v1705
  %v1755 = vpack.c.bf16 %v1706, %v1706
  %v1756 = vpack.c.bf16 %v1707, %v1707
  %v1757 = vpack.c.bf16 %v1708, %v1708
  %v1758 = vpack.c.bf16 %v1709, %v1709
  %v1759 = vpack.c.bf16 %v1710, %v1710
  %v1760 = vpack.c.bf16 %v1711, %v1711
  %v1761 = vpack.c.bf16 %v1712, %v1712
  %v1762 = vpack.c.bf16 %v1713, %v1713
  %v1763 = vpack.c.bf16 %v1714, %v1714
  %v1764 = vpack.c.bf16 %v1715, %v1715
  %v1765 = vpack.c.bf16 %v1716, %v1716
  %v1766 = vpack.c.bf16 %v1717, %v1717
  %v1767 = vpack.c.bf16 %v1718, %v1718
  %v1768 = vpack.c.bf16 %v1719, %v1719
  %v1769 = vpack.c.bf16 %v1720, %v1720
  %v1770 = vpack.c.bf16 %v1721, %v1721
  %v1771 = vpack.c.bf16 %v1722, %v1722
  %v1772 = vpack.c.bf16 %v1723, %v1723
  %v1773 = vpack.c.bf16 %v1724, %v1724
  %v1774 = vpack.c.bf16 %v1725, %v1725
  %v1775 = vpack.c.bf16 %v1726, %v1726
  %v1776 = vpack.c.bf16 %v1727, %v1727
  %v1777 = vpack.c.bf16 %v1728, %v1728
  %v1778 = vpack.c.bf16 %v1729, %v1729
  %v1779 = vpack.c.bf16 %v1730, %v1730
  %v1780 = vpack.c.bf16 %v1731, %v1731
  %v1781 = vpack.c.bf16 %v1732, %v1732
  %v1782 = vpack.c.bf16 %v1733, %v1733
  %v1783 = vpack.c.bf16 %v1734, %v1734
  %v1784 = vpack.c.bf16 %v1735, %v1735
  %v1785 = vpack.c.bf16 %v1736, %v1736
  %v1786 = vpack.c.bf16 %v1737, %v1737
  %v1787 = vpack.c.bf16 %v1738, %v1738
  %v1788 = vpack.c.bf16 %v1739, %v1739
  %v1789 = vpack.c.bf16 %v1740, %v1740
  %v1790 = vpack.c.bf16 %v1741, %v1741
  %v1791 = vpack.c.bf16 %v1742, %v1742
  %v1792 = vpack.c.bf16 %v1743, %v1743
  %v1793 = vpack.c.bf16 %v1744, %v1744
  %v1794 = vpack.c.bf16 %v1745, %v1745
  %v1795 = vpack.c.bf16 %v1746, %v1746
  %v1796 = vpack.c.bf16 %v1747, %v1747
  %1797 = vst [vmem:[%s3] sm:$0xf] %v1748
  %1798 = vst [vmem:[%s3 + $0x4] sm:$0xf] %v1749
  %1799 = vst [vmem:[%s3 + $0x8] sm:$0xf] %v1750
  %1800 = vst [vmem:[%s3 + $0xc] sm:$0xf] %v1751
  %1801 = vst [vmem:[%s3 + $0x10] sm:$0xf] %v1752
  %1802 = vst [vmem:[%s3 + $0x14] sm:$0xf] %v1753
  %1803 = vst [vmem:[%s3 + $0x18] sm:$0xf] %v1754
  %1804 = vst [vmem:[%s3 + $0x1c] sm:$0xf] %v1755
  %1805 = vst [vmem:[%s3 + $0x20] sm:$0xf] %v1756
  %1806 = vst [vmem:[%s3 + $0x24] sm:$0xf] %v1757
  %1807 = vst [vmem:[%s3 + $0x28] sm:$0xf] %v1758
  %1808 = vst [vmem:[%s3 + $0x2c] sm:$0xf] %v1759
  %1809 = vst [vmem:[%s3 + $0x30] sm:$0xf] %v1760
  %1810 = vst [vmem:[%s3 + $0x34] sm:$0xf] %v1761
  %1811 = vst [vmem:[%s3 + $0x38] sm:$0xf] %v1762
  %1812 = vst [vmem:[%s3 + $0x3c] sm:$0xf] %v1763
  %1813 = vst [vmem:[%s3 + $0x40] sm:$0xf] %v1764
  %1814 = vst [vmem:[%s3 + $0x44] sm:$0xf] %v1765
  %1815 = vst [vmem:[%s3 + $0x48] sm:$0xf] %v1766
  %1816 = vst [vmem:[%s3 + $0x4c] sm:$0xf] %v1767
  %1817 = vst [vmem:[%s3 + $0x50] sm:$0xf] %v1768
  %1818 = vst [vmem:[%s3 + $0x54] sm:$0xf] %v1769
  %1819 = vst [vmem:[%s3 + $0x58] sm:$0xf] %v1770
  %1820 = vst [vmem:[%s3 + $0x5c] sm:$0xf] %v1771
  %1821 = vst [vmem:[%s3 + $0x60] sm:$0xf] %v1772
  %1822 = vst [vmem:[%s3 + $0x64] sm:$0xf] %v1773
  %1823 = vst [vmem:[%s3 + $0x68] sm:$0xf] %v1774
  %1824 = vst [vmem:[%s3 + $0x6c] sm:$0xf] %v1775
  %1825 = vst [vmem:[%s3 + $0x70] sm:$0xf] %v1776
  %1826 = vst [vmem:[%s3 + $0x74] sm:$0xf] %v1777
  %1827 = vst [vmem:[%s3 + $0x78] sm:$0xf] %v1778
  %1828 = vst [vmem:[%s3 + $0x7c] sm:$0xf] %v1779
  %1829 = vst [vmem:[%s3 + $0x80] sm:$0xf] %v1780
  %1830 = vst [vmem:[%s3 + $0x84] sm:$0xf] %v1781
  %1831 = vst [vmem:[%s3 + $0x88] sm:$0xf] %v1782
  %1832 = vst [vmem:[%s3 + $0x8c] sm:$0xf] %v1783
  %1833 = vst [vmem:[%s3 + $0x90] sm:$0xf] %v1784
  %1834 = vst [vmem:[%s3 + $0x94] sm:$0xf] %v1785
  %1835 = vst [vmem:[%s3 + $0x98] sm:$0xf] %v1786
  %1836 = vst [vmem:[%s3 + $0x9c] sm:$0xf] %v1787
  %1837 = vst [vmem:[%s3 + $0xa0] sm:$0xf] %v1788
  %1838 = vst [vmem:[%s3 + $0xa4] sm:$0xf] %v1789
  %1839 = vst [vmem:[%s3 + $0xa8] sm:$0xf] %v1790
  %1840 = vst [vmem:[%s3 + $0xac] sm:$0xf] %v1791
  %1841 = vst [vmem:[%s3 + $0xb0] sm:$0xf] %v1792
  %1842 = vst [vmem:[%s3 + $0xb4] sm:$0xf] %v1793
  %1843 = vst [vmem:[%s3 + $0xb8] sm:$0xf] %v1794
  %1844 = vst [vmem:[%s3 + $0xbc] sm:$0xf] %v1795
  %1845 = vst [vmem:[%s3 + $0xc0] sm:$0xf] %v1796
  // Predicated region
  $region14: #{forward.3} parent=0 // pred_check
    _
  $region15: #{forward.3} parent=0 // pred_check_branch
    %1847 = sbr.rel (0) target = $region17
  $region16: #{forward.3} parent=0 // pred_region
    _
  $region17: #{forward.3} parent=0 // pred_fallthru
    _
  // Predicated region
  $region18: #{forward.3} parent=0 // pred_check
    _
  $region19: #{forward.3} parent=0 // pred_check_branch
    %1849 = sbr.rel (0) target = $region21
  $region20: #{forward.3} parent=0 // pred_region
    _
  $region21: #{forward.3} parent=0 // pred_fallthru
    _

// kernel: forward.4
$region0: #{forward.4}
  #allocation0 [shape = 'u32[]', space=smem, size = 0x4, offset = 0x4, fixed_abs, tag = 'smem constant byte address 0x4 - core index']
  #allocation1 [shape = 'u32[72,128]{1,0:T(1,128)}', space=vmem, size = 0x9000, scoped, tag = 'internal scratch']
  %s0 = inlined_call_operand.vmem [shape: bf16[4,50,384], index: 0, kind: input, shape index: {}]
  %s1 = inlined_call_operand.vmem [shape: bf16[384,128], index: 1, kind: input, shape index: {}]
  %s2 = inlined_call_operand.vmem [shape: f32[1,128], index: 2, kind: input, shape index: {}]
  %s3 = inlined_call_operand.vmem [shape: bf16[50,128], index: 3, kind: output, shape index: {}]
  %s4 = sld [smem:[#allocation0]]
  $region22: #{forward.4} parent=0
    _
  %s6 = ssub.s32 1, %s4
  %s7 = scalar_select 0, %s6, %s4
  // Predicated region
  $region2: #{forward.4} parent=0 // pred_check
    _
  $region3: #{forward.4} parent=0 // pred_check_branch
    %9 = sbr.rel (0) target = $region5
  $region4: #{forward.4} parent=0 // pred_region
    _
  $region5: #{forward.4} parent=0 // pred_fallthru
    _
  // Predicated region
  $region6: #{forward.4} parent=0 // pred_check
    _
  $region7: #{forward.4} parent=0 // pred_check_branch
    %11 = sbr.rel (0) target = $region9
  $region8: #{forward.4} parent=0 // pred_region
    _
  $region9: #{forward.4} parent=0 // pred_fallthru
    _
  // Predicated region
  $region10: #{forward.4} parent=0 // pred_check
    _
  $region11: #{forward.4} parent=0 // pred_check_branch
    %13 = sbr.rel (0) target = $region13
  $region12: #{forward.4} parent=0 // pred_region
    _
  $region13: #{forward.4} parent=0 // pred_fallthru
    _
  %v14 = vld [vmem:[%s1] sm:$0xf]
  %v15 = vld [vmem:[%s1 + $0x4] sm:$0xf]
  %v16 = vld [vmem:[%s1 + $0x8] sm:$0xf]
  %v17 = vld [vmem:[%s1 + $0xc] sm:$0xf]
  %v18 = vld [vmem:[%s1 + $0x10] sm:$0xf]
  %v19 = vld [vmem:[%s1 + $0x14] sm:$0xf]
  %v20 = vld [vmem:[%s1 + $0x18] sm:$0xf]
  %v21 = vld [vmem:[%s1 + $0x1c] sm:$0xf]
  %v22 = vld [vmem:[%s1 + $0x20] sm:$0xf]
  %v23 = vld [vmem:[%s1 + $0x24] sm:$0xf]
  %v24 = vld [vmem:[%s1 + $0x28] sm:$0xf]
  %v25 = vld [vmem:[%s1 + $0x2c] sm:$0xf]
  %v26 = vld [vmem:[%s1 + $0x30] sm:$0xf]
  %v27 = vld [vmem:[%s1 + $0x34] sm:$0xf]
  %v28 = vld [vmem:[%s1 + $0x38] sm:$0xf]
  %v29 = vld [vmem:[%s1 + $0x3c] sm:$0xf]
  %v30 = vld [vmem:[%s1 + $0x40] sm:$0xf]
  %v31 = vld [vmem:[%s1 + $0x44] sm:$0xf]
  %v32 = vld [vmem:[%s1 + $0x48] sm:$0xf]
  %v33 = vld [vmem:[%s1 + $0x4c] sm:$0xf]
  %v34 = vld [vmem:[%s1 + $0x50] sm:$0xf]
  %v35 = vld [vmem:[%s1 + $0x54] sm:$0xf]
  %v36 = vld [vmem:[%s1 + $0x58] sm:$0xf]
  %v37 = vld [vmem:[%s1 + $0x5c] sm:$0xf]
  %v38 = vld [vmem:[%s1 + $0x60] sm:$0xf]
  %v39 = vld [vmem:[%s1 + $0x64] sm:$0xf]
  %v40 = vld [vmem:[%s1 + $0x68] sm:$0xf]
  %v41 = vld [vmem:[%s1 + $0x6c] sm:$0xf]
  %v42 = vld [vmem:[%s1 + $0x70] sm:$0xf]
  %v43 = vld [vmem:[%s1 + $0x74] sm:$0xf]
  %v44 = vld [vmem:[%s1 + $0x78] sm:$0xf]
  %v45 = vld [vmem:[%s1 + $0x7c] sm:$0xf]
  %v46 = vld [vmem:[%s1 + $0x80] sm:$0xf]
  %v47 = vld [vmem:[%s1 + $0x84] sm:$0xf]
  %v48 = vld [vmem:[%s1 + $0x88] sm:$0xf]
  %v49 = vld [vmem:[%s1 + $0x8c] sm:$0xf]
  %v50 = vld [vmem:[%s1 + $0x90] sm:$0xf]
  %v51 = vld [vmem:[%s1 + $0x94] sm:$0xf]
  %v52 = vld [vmem:[%s1 + $0x98] sm:$0xf]
  %v53 = vld [vmem:[%s1 + $0x9c] sm:$0xf]
  %v54 = vld [vmem:[%s1 + $0xa0] sm:$0xf]
  %v55 = vld [vmem:[%s1 + $0xa4] sm:$0xf]
  %v56 = vld [vmem:[%s1 + $0xa8] sm:$0xf]
  %v57 = vld [vmem:[%s1 + $0xac] sm:$0xf]
  %v58 = vld [vmem:[%s1 + $0xb0] sm:$0xf]
  %v59 = vld [vmem:[%s1 + $0xb4] sm:$0xf]
  %v60 = vld [vmem:[%s1 + $0xb8] sm:$0xf]
  %v61 = vld [vmem:[%s1 + $0xbc] sm:$0xf]
  %v62 = vld [vmem:[%s2] sm:$0x1]
  %v63 = vld [vmem:[%s0] sm:$0xff]
  %v64 = vld [vmem:[%s0 + $0x8] sm:$0xf]
  %v65 = vld [vmem:[%s0 + $0xc] sm:$0xff]
  %v66 = vld [vmem:[%s0 + $0x14] sm:$0xf]
  %v67 = vld [vmem:[%s0 + $0x18] sm:$0xff]
  %v68 = vld [vmem:[%s0 + $0x20] sm:$0xf]
  %v69 = vld [vmem:[%s0 + $0x24] sm:$0xff]
  %v70 = vld [vmem:[%s0 + $0x2c] sm:$0xf]
  %v71 = vld [vmem:[%s0 + $0x30] sm:$0xff]
  %v72 = vld [vmem:[%s0 + $0x38] sm:$0xf]
  %v73 = vld [vmem:[%s0 + $0x3c] sm:$0xff]
  %v74 = vld [vmem:[%s0 + $0x44] sm:$0xf]
  %v75 = vld [vmem:[%s0 + $0x48] sm:$0x11]
  %v76 = vld [vmem:[%s0 + $0x50] sm:$0x1]
  %v78 = vperm.slane %v62, 0
  %v94 = vunpack.c.l.b16 %v63
  %v95 = vunpack.c.h.b16 %v63
  %v96 = vunpack.c.l.b16 %v64
  %v97 = vunpack.c.l.b16 %v65
  %v98 = vunpack.c.h.b16 %v65
  %v99 = vunpack.c.l.b16 %v66
  %v100 = vunpack.c.l.b16 %v67
  %v101 = vunpack.c.h.b16 %v67
  %v102 = vunpack.c.l.b16 %v68
  %v103 = vunpack.c.l.b16 %v69
  %v104 = vunpack.c.h.b16 %v69
  %v105 = vunpack.c.l.b16 %v70
  %v106 = vunpack.c.l.b16 %v71
  %v107 = vunpack.c.h.b16 %v71
  %v108 = vunpack.c.l.b16 %v72
  %v109 = vunpack.c.l.b16 %v73
  %v110 = vunpack.c.h.b16 %v73
  %v111 = vunpack.c.l.b16 %v74
  %v112 = vunpack.c.l.b16 %v75
  %v113 = vunpack.c.h.b16 %v75
  %v114 = vunpack.c.l.b16 %v76
  %v115 = vpack.c.b16 %v97, %v94
  %v116 = vpack.c.b16 %v98, %v95
  %v117 = vpack.c.b16 %v99, %v96
  %v118 = vpack.c.b16 %v103, %v100
  %v119 = vpack.c.b16 %v104, %v101
  %v120 = vpack.c.b16 %v105, %v102
  %v121 = vpack.c.b16 %v109, %v106
  %v122 = vpack.c.b16 %v110, %v107
  %v123 = vpack.c.b16 %v111, %v108
  %v124 = vpack.c.b16 %v112, %v112
  %v125 = vpack.c.b16 %v113, %v113
  %v126 = vpack.c.b16 %v114, %v114
  %v187 = vunpack.c.l.b16 %v14
  %v188 = vunpack.c.l.b16 %v15
  %v189 = vunpack.c.l.b16 %v16
  %v190 = vunpack.c.l.b16 %v17
  %v191 = vunpack.c.l.b16 %v18
  %v192 = vunpack.c.l.b16 %v19
  %v193 = vunpack.c.l.b16 %v20
  %v194 = vunpack.c.l.b16 %v21
  %v195 = vunpack.c.l.b16 %v22
  %v196 = vunpack.c.l.b16 %v23
  %v197 = vunpack.c.l.b16 %v24
  %v198 = vunpack.c.l.b16 %v25
  %v199 = vunpack.c.l.b16 %v26
  %v200 = vunpack.c.l.b16 %v27
  %v201 = vunpack.c.l.b16 %v28
  %v202 = vunpack.c.l.b16 %v29
  %v203 = vunpack.c.l.b16 %v30
  %v204 = vunpack.c.l.b16 %v31
  %v205 = vunpack.c.l.b16 %v32
  %v206 = vunpack.c.l.b16 %v33
  %v207 = vunpack.c.l.b16 %v34
  %v208 = vunpack.c.l.b16 %v35
  %v209 = vunpack.c.l.b16 %v36
  %v210 = vunpack.c.l.b16 %v37
  %v211 = vunpack.c.l.b16 %v38
  %v212 = vunpack.c.l.b16 %v39
  %v213 = vunpack.c.l.b16 %v40
  %v214 = vunpack.c.l.b16 %v41
  %v215 = vunpack.c.l.b16 %v42
  %v216 = vunpack.c.l.b16 %v43
  %v217 = vunpack.c.l.b16 %v44
  %v218 = vunpack.c.l.b16 %v45
  %v219 = vunpack.c.l.b16 %v46
  %v220 = vunpack.c.l.b16 %v47
  %v221 = vunpack.c.l.b16 %v48
  %v222 = vunpack.c.l.b16 %v49
  %v223 = vunpack.c.l.b16 %v50
  %v224 = vunpack.c.l.b16 %v51
  %v225 = vunpack.c.l.b16 %v52
  %v226 = vunpack.c.l.b16 %v53
  %v227 = vunpack.c.l.b16 %v54
  %v228 = vunpack.c.l.b16 %v55
  %v229 = vunpack.c.l.b16 %v56
  %v230 = vunpack.c.l.b16 %v57
  %v231 = vunpack.c.l.b16 %v58
  %v232 = vunpack.c.l.b16 %v59
  %v233 = vunpack.c.l.b16 %v60
  %v234 = vunpack.c.l.b16 %v61
  %v235 = vpack.c.b16 %v188, %v187
  %v236 = vpack.c.b16 %v190, %v189
  %v237 = vpack.c.b16 %v192, %v191
  %v238 = vpack.c.b16 %v194, %v193
  %v239 = vpack.c.b16 %v196, %v195
  %v240 = vpack.c.b16 %v198, %v197
  %v241 = vpack.c.b16 %v200, %v199
  %v242 = vpack.c.b16 %v202, %v201
  %v243 = vpack.c.b16 %v204, %v203
  %v244 = vpack.c.b16 %v206, %v205
  %v245 = vpack.c.b16 %v208, %v207
  %v246 = vpack.c.b16 %v210, %v209
  %v247 = vpack.c.b16 %v212, %v211
  %v248 = vpack.c.b16 %v214, %v213
  %v249 = vpack.c.b16 %v216, %v215
  %v250 = vpack.c.b16 %v218, %v217
  %v251 = vpack.c.b16 %v220, %v219
  %v252 = vpack.c.b16 %v222, %v221
  %v253 = vpack.c.b16 %v224, %v223
  %v254 = vpack.c.b16 %v226, %v225
  %v255 = vpack.c.b16 %v228, %v227
  %v256 = vpack.c.b16 %v230, %v229
  %v257 = vpack.c.b16 %v232, %v231
  %v258 = vpack.c.b16 %v234, %v233
  %283 = vmatpush.bf16.msra.mxu0 %v242
  %284 = vmatpush.bf16.msra.mxu0 %v241
  %285 = vmatpush.bf16.msra.mxu0 %v240
  %286 = vmatpush.bf16.msra.mxu0 %v239
  %287 = vmatpush.bf16.msra.mxu0 %v238
  %288 = vmatpush.bf16.msra.mxu0 %v237
  %289 = vmatpush.bf16.msra.mxu0 %v236
  %290 = vmatpush.bf16.msra.mxu0 %v235
  %291 = vmatmul.bf16.gmra.mxu0 %v115
  %v292 = vpop.f32.mrf.mxu0
  %v293 = vadd.f32 %v78, %v292
  %v294 = vpop.f32.mrf.mxu0
  %v295 = vadd.f32 %v78, %v294
  %296 = vmatmul.bf16.gmra.mxu0 %v118
  %v297 = vpop.f32.mrf.mxu0
  %v298 = vadd.f32 %v78, %v297
  %v299 = vpop.f32.mrf.mxu0
  %v300 = vadd.f32 %v78, %v299
  %301 = vmatmul.bf16.gmra.mxu0 %v121
  %v302 = vpop.f32.mrf.mxu0
  %v303 = vadd.f32 %v78, %v302
  %v304 = vpop.f32.mrf.mxu0
  %v305 = vadd.f32 %v78, %v304
  %306 = vmatmul.bf16.gmra.mxu0 %v124
  %v307 = vpop.f32.mrf.mxu0
  %v308 = vadd.f32 %v78, %v307
  %v309 = vpop.f32.mrf.mxu0
  %310 = vdwg.mxu0
  %311 = vmatpush.bf16.msra.mxu0 %v250
  %312 = vmatpush.bf16.msra.mxu0 %v249
  %313 = vmatpush.bf16.msra.mxu0 %v248
  %314 = vmatpush.bf16.msra.mxu0 %v247
  %315 = vmatpush.bf16.msra.mxu0 %v246
  %316 = vmatpush.bf16.msra.mxu0 %v245
  %317 = vmatpush.bf16.msra.mxu0 %v244
  %318 = vmatpush.bf16.msra.mxu0 %v243
  %319 = vmatmul.bf16.gmra.mxu0 %v116
  %v320 = vpop.f32.mrf.mxu0
  %v321 = vadd.f32 %v293, %v320
  %v322 = vpop.f32.mrf.mxu0
  %v323 = vadd.f32 %v295, %v322
  %324 = vmatmul.bf16.gmra.mxu0 %v119
  %v325 = vpop.f32.mrf.mxu0
  %v326 = vadd.f32 %v298, %v325
  %v327 = vpop.f32.mrf.mxu0
  %v328 = vadd.f32 %v300, %v327
  %329 = vmatmul.bf16.gmra.mxu0 %v122
  %v330 = vpop.f32.mrf.mxu0
  %v331 = vadd.f32 %v303, %v330
  %v332 = vpop.f32.mrf.mxu0
  %v333 = vadd.f32 %v305, %v332
  %334 = vmatmul.bf16.gmra.mxu0 %v125
  %v335 = vpop.f32.mrf.mxu0
  %v336 = vadd.f32 %v308, %v335
  %v337 = vpop.f32.mrf.mxu0
  %338 = vdwg.mxu0
  %339 = vmatpush.bf16.msra.mxu0 %v258
  %340 = vmatpush.bf16.msra.mxu0 %v257
  %341 = vmatpush.bf16.msra.mxu0 %v256
  %342 = vmatpush.bf16.msra.mxu0 %v255
  %343 = vmatpush.bf16.msra.mxu0 %v254
  %344 = vmatpush.bf16.msra.mxu0 %v253
  %345 = vmatpush.bf16.msra.mxu0 %v252
  %346 = vmatpush.bf16.msra.mxu0 %v251
  %347 = vmatmul.bf16.gmra.mxu0 %v117
  %v348 = vpop.f32.mrf.mxu0
  %v349 = vadd.f32 %v321, %v348
  %v350 = vpop.f32.mrf.mxu0
  %v351 = vadd.f32 %v323, %v350
  %352 = vmatmul.bf16.gmra.mxu0 %v120
  %v353 = vpop.f32.mrf.mxu0
  %v354 = vadd.f32 %v326, %v353
  %v355 = vpop.f32.mrf.mxu0
  %v356 = vadd.f32 %v328, %v355
  %357 = vmatmul.bf16.gmra.mxu0 %v123
  %v358 = vpop.f32.mrf.mxu0
  %v359 = vadd.f32 %v331, %v358
  %v360 = vpop.f32.mrf.mxu0
  %v361 = vadd.f32 %v333, %v360
  %362 = vmatmul.bf16.gmra.mxu0 %v126
  %v363 = vpop.f32.mrf.mxu0
  %v364 = vadd.f32 %v336, %v363
  %v365 = vpop.f32.mrf.mxu0
  %366 = vdwg.mxu0
  %v367 = vmax.f32 %v349, 0.0
  %v368 = vmax.f32 %v351, 0.0
  %v369 = vmax.f32 %v354, 0.0
  %v370 = vmax.f32 %v356, 0.0
  %v371 = vmax.f32 %v359, 0.0
  %v372 = vmax.f32 %v361, 0.0
  %v373 = vmax.f32 %v364, 0.0
  %s374 = scalar_lea.vmem %s0, 84
  %v375 = vld [vmem:[%s374] sm:$0xff]
  %v376 = vld [vmem:[%s374 + $0x8] sm:$0xf]
  %v377 = vld [vmem:[%s374 + $0xc] sm:$0xff]
  %v378 = vld [vmem:[%s374 + $0x14] sm:$0xf]
  %v379 = vld [vmem:[%s374 + $0x18] sm:$0xff]
  %v380 = vld [vmem:[%s374 + $0x20] sm:$0xf]
  %v381 = vld [vmem:[%s374 + $0x24] sm:$0xff]
  %v382 = vld [vmem:[%s374 + $0x2c] sm:$0xf]
  %v383 = vld [vmem:[%s374 + $0x30] sm:$0xff]
  %v384 = vld [vmem:[%s374 + $0x38] sm:$0xf]
  %v385 = vld [vmem:[%s374 + $0x3c] sm:$0xff]
  %v386 = vld [vmem:[%s374 + $0x44] sm:$0xf]
  %v387 = vld [vmem:[%s374 + $0x48] sm:$0x11]
  %v388 = vld [vmem:[%s374 + $0x50] sm:$0x1]
  %v403 = vunpack.c.l.b16 %v375
  %v404 = vunpack.c.h.b16 %v375
  %v405 = vunpack.c.l.b16 %v376
  %v406 = vunpack.c.l.b16 %v377
  %v407 = vunpack.c.h.b16 %v377
  %v408 = vunpack.c.l.b16 %v378
  %v409 = vunpack.c.l.b16 %v379
  %v410 = vunpack.c.h.b16 %v379
  %v411 = vunpack.c.l.b16 %v380
  %v412 = vunpack.c.l.b16 %v381
  %v413 = vunpack.c.h.b16 %v381
  %v414 = vunpack.c.l.b16 %v382
  %v415 = vunpack.c.l.b16 %v383
  %v416 = vunpack.c.h.b16 %v383
  %v417 = vunpack.c.l.b16 %v384
  %v418 = vunpack.c.l.b16 %v385
  %v419 = vunpack.c.h.b16 %v385
  %v420 = vunpack.c.l.b16 %v386
  %v421 = vunpack.c.l.b16 %v387
  %v422 = vunpack.c.h.b16 %v387
  %v423 = vunpack.c.l.b16 %v388
  %v424 = vpack.c.b16 %v406, %v403
  %v425 = vpack.c.b16 %v407, %v404
  %v426 = vpack.c.b16 %v408, %v405
  %v427 = vpack.c.b16 %v412, %v409
  %v428 = vpack.c.b16 %v413, %v410
  %v429 = vpack.c.b16 %v414, %v411
  %v430 = vpack.c.b16 %v418, %v415
  %v431 = vpack.c.b16 %v419, %v416
  %v432 = vpack.c.b16 %v420, %v417
  %v433 = vpack.c.b16 %v421, %v421
  %v434 = vpack.c.b16 %v422, %v422
  %v435 = vpack.c.b16 %v423, %v423
  %448 = vmatpush.bf16.msra.mxu0 %v242
  %449 = vmatpush.bf16.msra.mxu0 %v241
  %450 = vmatpush.bf16.msra.mxu0 %v240
  %451 = vmatpush.bf16.msra.mxu0 %v239
  %452 = vmatpush.bf16.msra.mxu0 %v238
  %453 = vmatpush.bf16.msra.mxu0 %v237
  %454 = vmatpush.bf16.msra.mxu0 %v236
  %455 = vmatpush.bf16.msra.mxu0 %v235
  %456 = vmatmul.bf16.gmra.mxu0 %v424
  %v457 = vpop.f32.mrf.mxu0
  %v458 = vadd.f32 %v78, %v457
  %v459 = vpop.f32.mrf.mxu0
  %v460 = vadd.f32 %v78, %v459
  %461 = vmatmul.bf16.gmra.mxu0 %v427
  %v462 = vpop.f32.mrf.mxu0
  %v463 = vadd.f32 %v78, %v462
  %v464 = vpop.f32.mrf.mxu0
  %v465 = vadd.f32 %v78, %v464
  %466 = vmatmul.bf16.gmra.mxu0 %v430
  %v467 = vpop.f32.mrf.mxu0
  %v468 = vadd.f32 %v78, %v467
  %v469 = vpop.f32.mrf.mxu0
  %v470 = vadd.f32 %v78, %v469
  %471 = vmatmul.bf16.gmra.mxu0 %v433
  %v472 = vpop.f32.mrf.mxu0
  %v473 = vadd.f32 %v78, %v472
  %v474 = vpop.f32.mrf.mxu0
  %475 = vdwg.mxu0
  %476 = vmatpush.bf16.msra.mxu0 %v250
  %477 = vmatpush.bf16.msra.mxu0 %v249
  %478 = vmatpush.bf16.msra.mxu0 %v248
  %479 = vmatpush.bf16.msra.mxu0 %v247
  %480 = vmatpush.bf16.msra.mxu0 %v246
  %481 = vmatpush.bf16.msra.mxu0 %v245
  %482 = vmatpush.bf16.msra.mxu0 %v244
  %483 = vmatpush.bf16.msra.mxu0 %v243
  %484 = vmatmul.bf16.gmra.mxu0 %v425
  %v485 = vpop.f32.mrf.mxu0
  %v486 = vadd.f32 %v458, %v485
  %v487 = vpop.f32.mrf.mxu0
  %v488 = vadd.f32 %v460, %v487
  %489 = vmatmul.bf16.gmra.mxu0 %v428
  %v490 = vpop.f32.mrf.mxu0
  %v491 = vadd.f32 %v463, %v490
  %v492 = vpop.f32.mrf.mxu0
  %v493 = vadd.f32 %v465, %v492
  %494 = vmatmul.bf16.gmra.mxu0 %v431
  %v495 = vpop.f32.mrf.mxu0
  %v496 = vadd.f32 %v468, %v495
  %v497 = vpop.f32.mrf.mxu0
  %v498 = vadd.f32 %v470, %v497
  %499 = vmatmul.bf16.gmra.mxu0 %v434
  %v500 = vpop.f32.mrf.mxu0
  %v501 = vadd.f32 %v473, %v500
  %v502 = vpop.f32.mrf.mxu0
  %503 = vdwg.mxu0
  %504 = vmatpush.bf16.msra.mxu0 %v258
  %505 = vmatpush.bf16.msra.mxu0 %v257
  %506 = vmatpush.bf16.msra.mxu0 %v256
  %507 = vmatpush.bf16.msra.mxu0 %v255
  %508 = vmatpush.bf16.msra.mxu0 %v254
  %509 = vmatpush.bf16.msra.mxu0 %v253
  %510 = vmatpush.bf16.msra.mxu0 %v252
  %511 = vmatpush.bf16.msra.mxu0 %v251
  %512 = vmatmul.bf16.gmra.mxu0 %v426
  %v513 = vpop.f32.mrf.mxu0
  %v514 = vadd.f32 %v486, %v513
  %v515 = vpop.f32.mrf.mxu0
  %v516 = vadd.f32 %v488, %v515
  %517 = vmatmul.bf16.gmra.mxu0 %v429
  %v518 = vpop.f32.mrf.mxu0
  %v519 = vadd.f32 %v491, %v518
  %v520 = vpop.f32.mrf.mxu0
  %v521 = vadd.f32 %v493, %v520
  %522 = vmatmul.bf16.gmra.mxu0 %v432
  %v523 = vpop.f32.mrf.mxu0
  %v524 = vadd.f32 %v496, %v523
  %v525 = vpop.f32.mrf.mxu0
  %v526 = vadd.f32 %v498, %v525
  %527 = vmatmul.bf16.gmra.mxu0 %v435
  %v528 = vpop.f32.mrf.mxu0
  %v529 = vadd.f32 %v501, %v528
  %v530 = vpop.f32.mrf.mxu0
  %531 = vdwg.mxu0
  %v532 = vmax.f32 %v514, 0.0
  %v533 = vmax.f32 %v516, 0.0
  %v534 = vmax.f32 %v519, 0.0
  %v535 = vmax.f32 %v521, 0.0
  %v536 = vmax.f32 %v524, 0.0
  %v537 = vmax.f32 %v526, 0.0
  %v538 = vmax.f32 %v529, 0.0
  %v539 = vmax.f32 %v367, %v532
  %v540 = vmax.f32 %v368, %v533
  %v541 = vmax.f32 %v369, %v534
  %v542 = vmax.f32 %v370, %v535
  %v543 = vmax.f32 %v371, %v536
  %v544 = vmax.f32 %v372, %v537
  %v545 = vmax.f32 %v373, %v538
  %s546 = scalar_lea.vmem %s0, 168
  %v547 = vld [vmem:[%s546] sm:$0xff]
  %v548 = vld [vmem:[%s546 + $0x8] sm:$0xf]
  %v549 = vld [vmem:[%s546 + $0xc] sm:$0xff]
  %v550 = vld [vmem:[%s546 + $0x14] sm:$0xf]
  %v551 = vld [vmem:[%s546 + $0x18] sm:$0xff]
  %v552 = vld [vmem:[%s546 + $0x20] sm:$0xf]
  %v553 = vld [vmem:[%s546 + $0x24] sm:$0xff]
  %v554 = vld [vmem:[%s546 + $0x2c] sm:$0xf]
  %v555 = vld [vmem:[%s546 + $0x30] sm:$0xff]
  %v556 = vld [vmem:[%s546 + $0x38] sm:$0xf]
  %v557 = vld [vmem:[%s546 + $0x3c] sm:$0xff]
  %v558 = vld [vmem:[%s546 + $0x44] sm:$0xf]
  %v559 = vld [vmem:[%s546 + $0x48] sm:$0x11]
  %v560 = vld [vmem:[%s546 + $0x50] sm:$0x1]
  %v575 = vunpack.c.l.b16 %v547
  %v576 = vunpack.c.h.b16 %v547
  %v577 = vunpack.c.l.b16 %v548
  %v578 = vunpack.c.l.b16 %v549
  %v579 = vunpack.c.h.b16 %v549
  %v580 = vunpack.c.l.b16 %v550
  %v581 = vunpack.c.l.b16 %v551
  %v582 = vunpack.c.h.b16 %v551
  %v583 = vunpack.c.l.b16 %v552
  %v584 = vunpack.c.l.b16 %v553
  %v585 = vunpack.c.h.b16 %v553
  %v586 = vunpack.c.l.b16 %v554
  %v587 = vunpack.c.l.b16 %v555
  %v588 = vunpack.c.h.b16 %v555
  %v589 = vunpack.c.l.b16 %v556
  %v590 = vunpack.c.l.b16 %v557
  %v591 = vunpack.c.h.b16 %v557
  %v592 = vunpack.c.l.b16 %v558
  %v593 = vunpack.c.l.b16 %v559
  %v594 = vunpack.c.h.b16 %v559
  %v595 = vunpack.c.l.b16 %v560
  %v596 = vpack.c.b16 %v578, %v575
  %v597 = vpack.c.b16 %v579, %v576
  %v598 = vpack.c.b16 %v580, %v577
  %v599 = vpack.c.b16 %v584, %v581
  %v600 = vpack.c.b16 %v585, %v582
  %v601 = vpack.c.b16 %v586, %v583
  %v602 = vpack.c.b16 %v590, %v587
  %v603 = vpack.c.b16 %v591, %v588
  %v604 = vpack.c.b16 %v592, %v589
  %v605 = vpack.c.b16 %v593, %v593
  %v606 = vpack.c.b16 %v594, %v594
  %v607 = vpack.c.b16 %v595, %v595
  %620 = vmatpush.bf16.msra.mxu0 %v242
  %621 = vmatpush.bf16.msra.mxu0 %v241
  %622 = vmatpush.bf16.msra.mxu0 %v240
  %623 = vmatpush.bf16.msra.mxu0 %v239
  %624 = vmatpush.bf16.msra.mxu0 %v238
  %625 = vmatpush.bf16.msra.mxu0 %v237
  %626 = vmatpush.bf16.msra.mxu0 %v236
  %627 = vmatpush.bf16.msra.mxu0 %v235
  %628 = vmatmul.bf16.gmra.mxu0 %v596
  %v629 = vpop.f32.mrf.mxu0
  %v630 = vadd.f32 %v78, %v629
  %v631 = vpop.f32.mrf.mxu0
  %v632 = vadd.f32 %v78, %v631
  %633 = vmatmul.bf16.gmra.mxu0 %v599
  %v634 = vpop.f32.mrf.mxu0
  %v635 = vadd.f32 %v78, %v634
  %v636 = vpop.f32.mrf.mxu0
  %v637 = vadd.f32 %v78, %v636
  %638 = vmatmul.bf16.gmra.mxu0 %v602
  %v639 = vpop.f32.mrf.mxu0
  %v640 = vadd.f32 %v78, %v639
  %v641 = vpop.f32.mrf.mxu0
  %v642 = vadd.f32 %v78, %v641
  %643 = vmatmul.bf16.gmra.mxu0 %v605
  %v644 = vpop.f32.mrf.mxu0
  %v645 = vadd.f32 %v78, %v644
  %v646 = vpop.f32.mrf.mxu0
  %647 = vdwg.mxu0
  %648 = vmatpush.bf16.msra.mxu0 %v250
  %649 = vmatpush.bf16.msra.mxu0 %v249
  %650 = vmatpush.bf16.msra.mxu0 %v248
  %651 = vmatpush.bf16.msra.mxu0 %v247
  %652 = vmatpush.bf16.msra.mxu0 %v246
  %653 = vmatpush.bf16.msra.mxu0 %v245
  %654 = vmatpush.bf16.msra.mxu0 %v244
  %655 = vmatpush.bf16.msra.mxu0 %v243
  %656 = vmatmul.bf16.gmra.mxu0 %v597
  %v657 = vpop.f32.mrf.mxu0
  %v658 = vadd.f32 %v630, %v657
  %v659 = vpop.f32.mrf.mxu0
  %v660 = vadd.f32 %v632, %v659
  %661 = vmatmul.bf16.gmra.mxu0 %v600
  %v662 = vpop.f32.mrf.mxu0
  %v663 = vadd.f32 %v635, %v662
  %v664 = vpop.f32.mrf.mxu0
  %v665 = vadd.f32 %v637, %v664
  %666 = vmatmul.bf16.gmra.mxu0 %v603
  %v667 = vpop.f32.mrf.mxu0
  %v668 = vadd.f32 %v640, %v667
  %v669 = vpop.f32.mrf.mxu0
  %v670 = vadd.f32 %v642, %v669
  %671 = vmatmul.bf16.gmra.mxu0 %v606
  %v672 = vpop.f32.mrf.mxu0
  %v673 = vadd.f32 %v645, %v672
  %v674 = vpop.f32.mrf.mxu0
  %675 = vdwg.mxu0
  %676 = vmatpush.bf16.msra.mxu0 %v258
  %677 = vmatpush.bf16.msra.mxu0 %v257
  %678 = vmatpush.bf16.msra.mxu0 %v256
  %679 = vmatpush.bf16.msra.mxu0 %v255
  %680 = vmatpush.bf16.msra.mxu0 %v254
  %681 = vmatpush.bf16.msra.mxu0 %v253
  %682 = vmatpush.bf16.msra.mxu0 %v252
  %683 = vmatpush.bf16.msra.mxu0 %v251
  %684 = vmatmul.bf16.gmra.mxu0 %v598
  %v685 = vpop.f32.mrf.mxu0
  %v686 = vadd.f32 %v658, %v685
  %v687 = vpop.f32.mrf.mxu0
  %v688 = vadd.f32 %v660, %v687
  %689 = vmatmul.bf16.gmra.mxu0 %v601
  %v690 = vpop.f32.mrf.mxu0
  %v691 = vadd.f32 %v663, %v690
  %v692 = vpop.f32.mrf.mxu0
  %v693 = vadd.f32 %v665, %v692
  %694 = vmatmul.bf16.gmra.mxu0 %v604
  %v695 = vpop.f32.mrf.mxu0
  %v696 = vadd.f32 %v668, %v695
  %v697 = vpop.f32.mrf.mxu0
  %v698 = vadd.f32 %v670, %v697
  %699 = vmatmul.bf16.gmra.mxu0 %v607
  %v700 = vpop.f32.mrf.mxu0
  %v701 = vadd.f32 %v673, %v700
  %v702 = vpop.f32.mrf.mxu0
  %703 = vdwg.mxu0
  %v704 = vmax.f32 %v686, 0.0
  %v705 = vmax.f32 %v688, 0.0
  %v706 = vmax.f32 %v691, 0.0
  %v707 = vmax.f32 %v693, 0.0
  %v708 = vmax.f32 %v696, 0.0
  %v709 = vmax.f32 %v698, 0.0
  %v710 = vmax.f32 %v701, 0.0
  %v711 = vmax.f32 %v539, %v704
  %v712 = vmax.f32 %v540, %v705
  %v713 = vmax.f32 %v541, %v706
  %v714 = vmax.f32 %v542, %v707
  %v715 = vmax.f32 %v543, %v708
  %v716 = vmax.f32 %v544, %v709
  %v717 = vmax.f32 %v545, %v710
  %s718 = scalar_lea.vmem %s0, 252
  %v719 = vld [vmem:[%s718] sm:$0xff]
  %v720 = vld [vmem:[%s718 + $0x8] sm:$0xf]
  %v721 = vld [vmem:[%s718 + $0xc] sm:$0xff]
  %v722 = vld [vmem:[%s718 + $0x14] sm:$0xf]
  %v723 = vld [vmem:[%s718 + $0x18] sm:$0xff]
  %v724 = vld [vmem:[%s718 + $0x20] sm:$0xf]
  %v725 = vld [vmem:[%s718 + $0x24] sm:$0xff]
  %v726 = vld [vmem:[%s718 + $0x2c] sm:$0xf]
  %v727 = vld [vmem:[%s718 + $0x30] sm:$0xff]
  %v728 = vld [vmem:[%s718 + $0x38] sm:$0xf]
  %v729 = vld [vmem:[%s718 + $0x3c] sm:$0xff]
  %v730 = vld [vmem:[%s718 + $0x44] sm:$0xf]
  %v731 = vld [vmem:[%s718 + $0x48] sm:$0x11]
  %v732 = vld [vmem:[%s718 + $0x50] sm:$0x1]
  %v747 = vunpack.c.l.b16 %v719
  %v748 = vunpack.c.h.b16 %v719
  %v749 = vunpack.c.l.b16 %v720
  %v750 = vunpack.c.l.b16 %v721
  %v751 = vunpack.c.h.b16 %v721
  %v752 = vunpack.c.l.b16 %v722
  %v753 = vunpack.c.l.b16 %v723
  %v754 = vunpack.c.h.b16 %v723
  %v755 = vunpack.c.l.b16 %v724
  %v756 = vunpack.c.l.b16 %v725
  %v757 = vunpack.c.h.b16 %v725
  %v758 = vunpack.c.l.b16 %v726
  %v759 = vunpack.c.l.b16 %v727
  %v760 = vunpack.c.h.b16 %v727
  %v761 = vunpack.c.l.b16 %v728
  %v762 = vunpack.c.l.b16 %v729
  %v763 = vunpack.c.h.b16 %v729
  %v764 = vunpack.c.l.b16 %v730
  %v765 = vunpack.c.l.b16 %v731
  %v766 = vunpack.c.h.b16 %v731
  %v767 = vunpack.c.l.b16 %v732
  %v768 = vpack.c.b16 %v750, %v747
  %v769 = vpack.c.b16 %v751, %v748
  %v770 = vpack.c.b16 %v752, %v749
  %v771 = vpack.c.b16 %v756, %v753
  %v772 = vpack.c.b16 %v757, %v754
  %v773 = vpack.c.b16 %v758, %v755
  %v774 = vpack.c.b16 %v762, %v759
  %v775 = vpack.c.b16 %v763, %v760
  %v776 = vpack.c.b16 %v764, %v761
  %v777 = vpack.c.b16 %v765, %v765
  %v778 = vpack.c.b16 %v766, %v766
  %v779 = vpack.c.b16 %v767, %v767
  %792 = vmatpush.bf16.msra.mxu0 %v242
  %793 = vmatpush.bf16.msra.mxu0 %v241
  %794 = vmatpush.bf16.msra.mxu0 %v240
  %795 = vmatpush.bf16.msra.mxu0 %v239
  %796 = vmatpush.bf16.msra.mxu0 %v238
  %797 = vmatpush.bf16.msra.mxu0 %v237
  %798 = vmatpush.bf16.msra.mxu0 %v236
  %799 = vmatpush.bf16.msra.mxu0 %v235
  %800 = vmatmul.bf16.gmra.mxu0 %v768
  %v801 = vpop.f32.mrf.mxu0
  %v802 = vadd.f32 %v78, %v801
  %v803 = vpop.f32.mrf.mxu0
  %v804 = vadd.f32 %v78, %v803
  %805 = vmatmul.bf16.gmra.mxu0 %v771
  %v806 = vpop.f32.mrf.mxu0
  %v807 = vadd.f32 %v78, %v806
  %v808 = vpop.f32.mrf.mxu0
  %v809 = vadd.f32 %v78, %v808
  %810 = vmatmul.bf16.gmra.mxu0 %v774
  %v811 = vpop.f32.mrf.mxu0
  %v812 = vadd.f32 %v78, %v811
  %v813 = vpop.f32.mrf.mxu0
  %v814 = vadd.f32 %v78, %v813
  %815 = vmatmul.bf16.gmra.mxu0 %v777
  %v816 = vpop.f32.mrf.mxu0
  %v817 = vadd.f32 %v78, %v816
  %v818 = vpop.f32.mrf.mxu0
  %819 = vdwg.mxu0
  %820 = vmatpush.bf16.msra.mxu0 %v250
  %821 = vmatpush.bf16.msra.mxu0 %v249
  %822 = vmatpush.bf16.msra.mxu0 %v248
  %823 = vmatpush.bf16.msra.mxu0 %v247
  %824 = vmatpush.bf16.msra.mxu0 %v246
  %825 = vmatpush.bf16.msra.mxu0 %v245
  %826 = vmatpush.bf16.msra.mxu0 %v244
  %827 = vmatpush.bf16.msra.mxu0 %v243
  %828 = vmatmul.bf16.gmra.mxu0 %v769
  %v829 = vpop.f32.mrf.mxu0
  %v830 = vadd.f32 %v802, %v829
  %v831 = vpop.f32.mrf.mxu0
  %v832 = vadd.f32 %v804, %v831
  %833 = vmatmul.bf16.gmra.mxu0 %v772
  %v834 = vpop.f32.mrf.mxu0
  %v835 = vadd.f32 %v807, %v834
  %v836 = vpop.f32.mrf.mxu0
  %v837 = vadd.f32 %v809, %v836
  %838 = vmatmul.bf16.gmra.mxu0 %v775
  %v839 = vpop.f32.mrf.mxu0
  %v840 = vadd.f32 %v812, %v839
  %v841 = vpop.f32.mrf.mxu0
  %v842 = vadd.f32 %v814, %v841
  %843 = vmatmul.bf16.gmra.mxu0 %v778
  %v844 = vpop.f32.mrf.mxu0
  %v845 = vadd.f32 %v817, %v844
  %v846 = vpop.f32.mrf.mxu0
  %847 = vdwg.mxu0
  %848 = vmatpush.bf16.msra.mxu0 %v258
  %849 = vmatpush.bf16.msra.mxu0 %v257
  %850 = vmatpush.bf16.msra.mxu0 %v256
  %851 = vmatpush.bf16.msra.mxu0 %v255
  %852 = vmatpush.bf16.msra.mxu0 %v254
  %853 = vmatpush.bf16.msra.mxu0 %v253
  %854 = vmatpush.bf16.msra.mxu0 %v252
  %855 = vmatpush.bf16.msra.mxu0 %v251
  %856 = vmatmul.bf16.gmra.mxu0 %v770
  %v857 = vpop.f32.mrf.mxu0
  %v858 = vadd.f32 %v830, %v857
  %v859 = vpop.f32.mrf.mxu0
  %v860 = vadd.f32 %v832, %v859
  %861 = vmatmul.bf16.gmra.mxu0 %v773
  %v862 = vpop.f32.mrf.mxu0
  %v863 = vadd.f32 %v835, %v862
  %v864 = vpop.f32.mrf.mxu0
  %v865 = vadd.f32 %v837, %v864
  %866 = vmatmul.bf16.gmra.mxu0 %v776
  %v867 = vpop.f32.mrf.mxu0
  %v868 = vadd.f32 %v840, %v867
  %v869 = vpop.f32.mrf.mxu0
  %v870 = vadd.f32 %v842, %v869
  %871 = vmatmul.bf16.gmra.mxu0 %v779
  %v872 = vpop.f32.mrf.mxu0
  %v873 = vadd.f32 %v845, %v872
  %v874 = vpop.f32.mrf.mxu0
  %875 = vdwg.mxu0
  %v876 = vmax.f32 %v858, 0.0
  %v877 = vmax.f32 %v860, 0.0
  %v878 = vmax.f32 %v863, 0.0
  %v879 = vmax.f32 %v865, 0.0
  %v880 = vmax.f32 %v868, 0.0
  %v881 = vmax.f32 %v870, 0.0
  %v882 = vmax.f32 %v873, 0.0
  %v883 = vmax.f32 %v711, %v876
  %v884 = vmax.f32 %v712, %v877
  %v885 = vmax.f32 %v713, %v878
  %v886 = vmax.f32 %v714, %v879
  %v887 = vmax.f32 %v715, %v880
  %v888 = vmax.f32 %v716, %v881
  %v889 = vmax.f32 %v717, %v882
  %v890 = vpack.c.bf16 %v883, %v883
  %v891 = vpack.c.bf16 %v884, %v884
  %v892 = vpack.c.bf16 %v885, %v885
  %v893 = vpack.c.bf16 %v886, %v886
  %v894 = vpack.c.bf16 %v887, %v887
  %v895 = vpack.c.bf16 %v888, %v888
  %v896 = vpack.c.bf16 %v889, %v889
  %897 = vst [vmem:[%s3] sm:$0xf] %v890
  %898 = vst [vmem:[%s3 + $0x4] sm:$0xf] %v891
  %899 = vst [vmem:[%s3 + $0x8] sm:$0xf] %v892
  %900 = vst [vmem:[%s3 + $0xc] sm:$0xf] %v893
  %901 = vst [vmem:[%s3 + $0x10] sm:$0xf] %v894
  %902 = vst [vmem:[%s3 + $0x14] sm:$0xf] %v895
  %903 = vst [vmem:[%s3 + $0x18] sm:$0x1] %v896
  // Predicated region
  $region14: #{forward.4} parent=0 // pred_check
    _
  $region15: #{forward.4} parent=0 // pred_check_branch
    %905 = sbr.rel (0) target = $region17
  $region16: #{forward.4} parent=0 // pred_region
    _
  $region17: #{forward.4} parent=0 // pred_fallthru
    _
  // Predicated region
  $region18: #{forward.4} parent=0 // pred_check
    _
  $region19: #{forward.4} parent=0 // pred_check_branch
    %907 = sbr.rel (0) target = $region21
  $region20: #{forward.4} parent=0 // pred_region
    _
  $region21: #{forward.4} parent=0 // pred_fallthru
    _

// kernel: forward.5
$region0: #{forward.5}
  #allocation0 [shape = 'u32[]', space=smem, size = 0x4, offset = 0x4, fixed_abs, tag = 'smem constant byte address 0x4 - core index']
  #allocation1 [shape = 'u32[72,128]{1,0:T(1,128)}', space=vmem, size = 0x9000, scoped, tag = 'internal scratch']
  %s0 = inlined_call_operand.vmem [shape: bf16[2,3200], index: 0, kind: input, shape index: {}]
  %s1 = inlined_call_operand.vmem [shape: bf16[3200,128], index: 1, kind: input, shape index: {}]
  %s2 = inlined_call_operand.vmem [shape: f32[1,128], index: 2, kind: input, shape index: {}]
  %s3 = inlined_call_operand.vmem [shape: bf16[128,128], index: 3, kind: input, shape index: {}]
  %s4 = inlined_call_operand.vmem [shape: f32[1,128], index: 4, kind: input, shape index: {}]
  %s5 = inlined_call_operand.vmem [shape: bf16[128,128], index: 5, kind: input, shape index: {}]
  %s6 = inlined_call_operand.vmem [shape: f32[1,128], index: 6, kind: input, shape index: {}]
  %s7 = inlined_call_operand.hbm [shape: f32[2,128], index: 7, kind: output, shape index: {}]
  %s8 = sld [smem:[#allocation0]]
  $region38: #{forward.5} parent=0
    _
  %s10 = ssub.s32 1, %s8
  %s11 = scalar_select 0, %s10, %s8
  $region1: #{forward.5} parent=0
    #allocation2 [shape = 'u8[1024]{0}', space=vmem, size = 0x400, scoped, tag = 'output window, operand 0, single buffered']
    #allocation3 [shape = 's32[1]{0}', space=sflag, size = 0x4, scoped, tag = 'scoped memory for forward.5']
    %12 = vsyncpa [#allocation3], 0
    // Predicated region
    $region2: #{forward.5} parent=1 // pred_check
      _
    $region3: #{forward.5} parent=1 // pred_check_branch
      %14 = sbr.rel (0) target = $region5
    $region4: #{forward.5} parent=1 // pred_region
      _
    $region5: #{forward.5} parent=1 // pred_fallthru
      _
    // Predicated region
    $region6: #{forward.5} parent=1 // pred_check
      _
    $region7: #{forward.5} parent=1 // pred_check_branch
      %16 = sbr.rel (0) target = $region9
    $region8: #{forward.5} parent=1 // pred_region
      _
    $region9: #{forward.5} parent=1 // pred_fallthru
      _
    // Predicated region
    $region10: #{forward.5} parent=1 // pred_check
      _
    $region11: #{forward.5} parent=1 // pred_check_branch
      %18 = sbr.rel (0) target = $region13
    $region12: #{forward.5} parent=1 // pred_region
      _
    $region13: #{forward.5} parent=1 // pred_fallthru
      _
    // Predicated region
    $region14: #{forward.5} parent=1 // pred_check
      _
    $region15: #{forward.5} parent=1 // pred_check_branch
      %20 = sbr.rel (0) target = $region17
    $region16: #{forward.5} parent=1 // pred_region
      _
    $region17: #{forward.5} parent=1 // pred_fallthru
      _
    // Predicated region
    $region18: #{forward.5} parent=1 // pred_check
      _
    $region19: #{forward.5} parent=1 // pred_check_branch
      %22 = sbr.rel (0) target = $region21
    $region20: #{forward.5} parent=1 // pred_region
      _
    $region21: #{forward.5} parent=1 // pred_fallthru
      _
    // Predicated region
    $region22: #{forward.5} parent=1 // pred_check
      _
    $region23: #{forward.5} parent=1 // pred_check_branch
      %24 = sbr.rel (0) target = $region25
    $region24: #{forward.5} parent=1 // pred_region
      _
    $region25: #{forward.5} parent=1 // pred_fallthru
      _
    // Predicated region
    $region26: #{forward.5} parent=1 // pred_check
      _
    $region27: #{forward.5} parent=1 // pred_check_branch
      %26 = sbr.rel (0) target = $region29
    $region28: #{forward.5} parent=1 // pred_region
      _
    $region29: #{forward.5} parent=1 // pred_fallthru
      _
    %v27 = vld [vmem:[%s0] sm:$0xff]
    %v28 = vld [vmem:[%s0 + $0x8] sm:$0xff]
    %v29 = vld [vmem:[%s0 + $0x10] sm:$0xff]
    %v30 = vld [vmem:[%s0 + $0x18] sm:$0x1]
    %v31 = vld [vmem:[%s1] sm:$0xf]
    %v32 = vld [vmem:[%s1 + $0x4] sm:$0xf]
    %v33 = vld [vmem:[%s1 + $0x8] sm:$0xf]
    %v34 = vld [vmem:[%s1 + $0xc] sm:$0xf]
    %v35 = vld [vmem:[%s1 + $0x10] sm:$0xf]
    %v36 = vld [vmem:[%s1 + $0x14] sm:$0xf]
    %v37 = vld [vmem:[%s1 + $0x18] sm:$0xf]
    %v38 = vld [vmem:[%s1 + $0x1c] sm:$0xf]
    %v39 = vld [vmem:[%s1 + $0x20] sm:$0xf]
    %v40 = vld [vmem:[%s1 + $0x24] sm:$0xf]
    %v41 = vld [vmem:[%s1 + $0x28] sm:$0xf]
    %v42 = vld [vmem:[%s1 + $0x2c] sm:$0xf]
    %v43 = vld [vmem:[%s1 + $0x30] sm:$0xf]
    %v44 = vld [vmem:[%s1 + $0x34] sm:$0xf]
    %v45 = vld [vmem:[%s1 + $0x38] sm:$0xf]
    %v46 = vld [vmem:[%s1 + $0x3c] sm:$0xf]
    %v47 = vld [vmem:[%s1 + $0x40] sm:$0xf]
    %v48 = vld [vmem:[%s1 + $0x44] sm:$0xf]
    %v49 = vld [vmem:[%s1 + $0x48] sm:$0xf]
    %v50 = vld [vmem:[%s1 + $0x4c] sm:$0xf]
    %v51 = vld [vmem:[%s1 + $0x50] sm:$0xf]
    %v52 = vld [vmem:[%s1 + $0x54] sm:$0xf]
    %v53 = vld [vmem:[%s1 + $0x58] sm:$0xf]
    %v54 = vld [vmem:[%s1 + $0x5c] sm:$0xf]
    %v55 = vld [vmem:[%s1 + $0x60] sm:$0xf]
    %v56 = vld [vmem:[%s1 + $0x64] sm:$0xf]
    %v57 = vld [vmem:[%s1 + $0x68] sm:$0xf]
    %v58 = vld [vmem:[%s1 + $0x6c] sm:$0xf]
    %v59 = vld [vmem:[%s1 + $0x70] sm:$0xf]
    %v60 = vld [vmem:[%s1 + $0x74] sm:$0xf]
    %v61 = vld [vmem:[%s1 + $0x78] sm:$0xf]
    %v62 = vld [vmem:[%s1 + $0x7c] sm:$0xf]
    %v63 = vld [vmem:[%s1 + $0x80] sm:$0xf]
    %v64 = vld [vmem:[%s1 + $0x84] sm:$0xf]
    %v65 = vld [vmem:[%s1 + $0x88] sm:$0xf]
    %v66 = vld [vmem:[%s1 + $0x8c] sm:$0xf]
    %v67 = vld [vmem:[%s1 + $0x90] sm:$0xf]
    %v68 = vld [vmem:[%s1 + $0x94] sm:$0xf]
    %v69 = vld [vmem:[%s1 + $0x98] sm:$0xf]
    %v70 = vld [vmem:[%s1 + $0x9c] sm:$0xf]
    %v71 = vld [vmem:[%s1 + $0xa0] sm:$0xf]
    %v72 = vld [vmem:[%s1 + $0xa4] sm:$0xf]
    %v73 = vld [vmem:[%s1 + $0xa8] sm:$0xf]
    %v74 = vld [vmem:[%s1 + $0xac] sm:$0xf]
    %v75 = vld [vmem:[%s1 + $0xb0] sm:$0xf]
    %v76 = vld [vmem:[%s1 + $0xb4] sm:$0xf]
    %v77 = vld [vmem:[%s1 + $0xb8] sm:$0xf]
    %v78 = vld [vmem:[%s1 + $0xbc] sm:$0xf]
    %v79 = vld [vmem:[%s1 + $0xc0] sm:$0xf]
    %v80 = vld [vmem:[%s1 + $0xc4] sm:$0xf]
    %v81 = vld [vmem:[%s1 + $0xc8] sm:$0xf]
    %v82 = vld [vmem:[%s1 + $0xcc] sm:$0xf]
    %v83 = vld [vmem:[%s1 + $0xd0] sm:$0xf]
    %v84 = vld [vmem:[%s1 + $0xd4] sm:$0xf]
    %v85 = vld [vmem:[%s1 + $0xd8] sm:$0xf]
    %v86 = vld [vmem:[%s1 + $0xdc] sm:$0xf]
    %v87 = vld [vmem:[%s1 + $0xe0] sm:$0xf]
    %v88 = vld [vmem:[%s1 + $0xe4] sm:$0xf]
    %v89 = vld [vmem:[%s1 + $0xe8] sm:$0xf]
    %v90 = vld [vmem:[%s1 + $0xec] sm:$0xf]
    %v91 = vld [vmem:[%s1 + $0xf0] sm:$0xf]
    %v92 = vld [vmem:[%s1 + $0xf4] sm:$0xf]
    %v93 = vld [vmem:[%s1 + $0xf8] sm:$0xf]
    %v94 = vld [vmem:[%s1 + $0xfc] sm:$0xf]
    %v95 = vld [vmem:[%s1 + $0x100] sm:$0xf]
    %v96 = vld [vmem:[%s1 + $0x104] sm:$0xf]
    %v97 = vld [vmem:[%s1 + $0x108] sm:$0xf]
    %v98 = vld [vmem:[%s1 + $0x10c] sm:$0xf]
    %v99 = vld [vmem:[%s1 + $0x110] sm:$0xf]
    %v100 = vld [vmem:[%s1 + $0x114] sm:$0xf]
    %v101 = vld [vmem:[%s1 + $0x118] sm:$0xf]
    %v102 = vld [vmem:[%s1 + $0x11c] sm:$0xf]
    %v103 = vld [vmem:[%s1 + $0x120] sm:$0xf]
    %v104 = vld [vmem:[%s1 + $0x124] sm:$0xf]
    %v105 = vld [vmem:[%s1 + $0x128] sm:$0xf]
    %v106 = vld [vmem:[%s1 + $0x12c] sm:$0xf]
    %v107 = vld [vmem:[%s1 + $0x130] sm:$0xf]
    %v108 = vld [vmem:[%s1 + $0x134] sm:$0xf]
    %v109 = vld [vmem:[%s1 + $0x138] sm:$0xf]
    %v110 = vld [vmem:[%s1 + $0x13c] sm:$0xf]
    %v111 = vld [vmem:[%s1 + $0x140] sm:$0xf]
    %v112 = vld [vmem:[%s1 + $0x144] sm:$0xf]
    %v113 = vld [vmem:[%s1 + $0x148] sm:$0xf]
    %v114 = vld [vmem:[%s1 + $0x14c] sm:$0xf]
    %v115 = vld [vmem:[%s1 + $0x150] sm:$0xf]
    %v116 = vld [vmem:[%s1 + $0x154] sm:$0xf]
    %v117 = vld [vmem:[%s1 + $0x158] sm:$0xf]
    %v118 = vld [vmem:[%s1 + $0x15c] sm:$0xf]
    %v119 = vld [vmem:[%s1 + $0x160] sm:$0xf]
    %v120 = vld [vmem:[%s1 + $0x164] sm:$0xf]
    %v121 = vld [vmem:[%s1 + $0x168] sm:$0xf]
    %v122 = vld [vmem:[%s1 + $0x16c] sm:$0xf]
    %v123 = vld [vmem:[%s1 + $0x170] sm:$0xf]
    %v124 = vld [vmem:[%s1 + $0x174] sm:$0xf]
    %v125 = vld [vmem:[%s1 + $0x178] sm:$0xf]
    %v126 = vld [vmem:[%s1 + $0x17c] sm:$0xf]
    %v127 = vld [vmem:[%s1 + $0x180] sm:$0xf]
    %v128 = vld [vmem:[%s1 + $0x184] sm:$0xf]
    %v129 = vld [vmem:[%s1 + $0x188] sm:$0xf]
    %v130 = vld [vmem:[%s1 + $0x18c] sm:$0xf]
    %v131 = vld [vmem:[%s1 + $0x190] sm:$0xf]
    %v132 = vld [vmem:[%s1 + $0x194] sm:$0xf]
    %v133 = vld [vmem:[%s1 + $0x198] sm:$0xf]
    %v134 = vld [vmem:[%s1 + $0x19c] sm:$0xf]
    %v135 = vld [vmem:[%s1 + $0x1a0] sm:$0xf]
    %v136 = vld [vmem:[%s1 + $0x1a4] sm:$0xf]
    %v137 = vld [vmem:[%s1 + $0x1a8] sm:$0xf]
    %v138 = vld [vmem:[%s1 + $0x1ac] sm:$0xf]
    %v139 = vld [vmem:[%s1 + $0x1b0] sm:$0xf]
    %v140 = vld [vmem:[%s1 + $0x1b4] sm:$0xf]
    %v141 = vld [vmem:[%s1 + $0x1b8] sm:$0xf]
    %v142 = vld [vmem:[%s1 + $0x1bc] sm:$0xf]
    %v143 = vld [vmem:[%s1 + $0x1c0] sm:$0xf]
    %v144 = vld [vmem:[%s1 + $0x1c4] sm:$0xf]
    %v145 = vld [vmem:[%s1 + $0x1c8] sm:$0xf]
    %v146 = vld [vmem:[%s1 + $0x1cc] sm:$0xf]
    %v147 = vld [vmem:[%s1 + $0x1d0] sm:$0xf]
    %v148 = vld [vmem:[%s1 + $0x1d4] sm:$0xf]
    %v149 = vld [vmem:[%s1 + $0x1d8] sm:$0xf]
    %v150 = vld [vmem:[%s1 + $0x1dc] sm:$0xf]
    %v151 = vld [vmem:[%s1 + $0x1e0] sm:$0xf]
    %v152 = vld [vmem:[%s1 + $0x1e4] sm:$0xf]
    %v153 = vld [vmem:[%s1 + $0x1e8] sm:$0xf]
    %v154 = vld [vmem:[%s1 + $0x1ec] sm:$0xf]
    %v155 = vld [vmem:[%s1 + $0x1f0] sm:$0xf]
    %v156 = vld [vmem:[%s1 + $0x1f4] sm:$0xf]
    %v157 = vld [vmem:[%s1 + $0x1f8] sm:$0xf]
    %v158 = vld [vmem:[%s1 + $0x1fc] sm:$0xf]
    %v159 = vld [vmem:[%s1 + $0x200] sm:$0xf]
    %v160 = vld [vmem:[%s1 + $0x204] sm:$0xf]
    %v161 = vld [vmem:[%s1 + $0x208] sm:$0xf]
    %v162 = vld [vmem:[%s1 + $0x20c] sm:$0xf]
    %v163 = vld [vmem:[%s1 + $0x210] sm:$0xf]
    %v164 = vld [vmem:[%s1 + $0x214] sm:$0xf]
    %v165 = vld [vmem:[%s1 + $0x218] sm:$0xf]
    %v166 = vld [vmem:[%s1 + $0x21c] sm:$0xf]
    %v167 = vld [vmem:[%s1 + $0x220] sm:$0xf]
    %v168 = vld [vmem:[%s1 + $0x224] sm:$0xf]
    %v169 = vld [vmem:[%s1 + $0x228] sm:$0xf]
    %v170 = vld [vmem:[%s1 + $0x22c] sm:$0xf]
    %v171 = vld [vmem:[%s1 + $0x230] sm:$0xf]
    %v172 = vld [vmem:[%s1 + $0x234] sm:$0xf]
    %v173 = vld [vmem:[%s1 + $0x238] sm:$0xf]
    %v174 = vld [vmem:[%s1 + $0x23c] sm:$0xf]
    %v175 = vld [vmem:[%s1 + $0x240] sm:$0xf]
    %v176 = vld [vmem:[%s1 + $0x244] sm:$0xf]
    %v177 = vld [vmem:[%s1 + $0x248] sm:$0xf]
    %v178 = vld [vmem:[%s1 + $0x24c] sm:$0xf]
    %v179 = vld [vmem:[%s1 + $0x250] sm:$0xf]
    %v180 = vld [vmem:[%s1 + $0x254] sm:$0xf]
    %v181 = vld [vmem:[%s1 + $0x258] sm:$0xf]
    %v182 = vld [vmem:[%s1 + $0x25c] sm:$0xf]
    %v183 = vld [vmem:[%s1 + $0x260] sm:$0xf]
    %v184 = vld [vmem:[%s1 + $0x264] sm:$0xf]
    %v185 = vld [vmem:[%s1 + $0x268] sm:$0xf]
    %v186 = vld [vmem:[%s1 + $0x26c] sm:$0xf]
    %v187 = vld [vmem:[%s1 + $0x270] sm:$0xf]
    %v188 = vld [vmem:[%s1 + $0x274] sm:$0xf]
    %v189 = vld [vmem:[%s1 + $0x278] sm:$0xf]
    %v190 = vld [vmem:[%s1 + $0x27c] sm:$0xf]
    %v191 = vld [vmem:[%s1 + $0x280] sm:$0xf]
    %v192 = vld [vmem:[%s1 + $0x284] sm:$0xf]
    %v193 = vld [vmem:[%s1 + $0x288] sm:$0xf]
    %v194 = vld [vmem:[%s1 + $0x28c] sm:$0xf]
    %v195 = vld [vmem:[%s1 + $0x290] sm:$0xf]
    %v196 = vld [vmem:[%s1 + $0x294] sm:$0xf]
    %v197 = vld [vmem:[%s1 + $0x298] sm:$0xf]
    %v198 = vld [vmem:[%s1 + $0x29c] sm:$0xf]
    %v199 = vld [vmem:[%s1 + $0x2a0] sm:$0xf]
    %v200 = vld [vmem:[%s1 + $0x2a4] sm:$0xf]
    %v201 = vld [vmem:[%s1 + $0x2a8] sm:$0xf]
    %v202 = vld [vmem:[%s1 + $0x2ac] sm:$0xf]
    %v203 = vld [vmem:[%s1 + $0x2b0] sm:$0xf]
    %v204 = vld [vmem:[%s1 + $0x2b4] sm:$0xf]
    %v205 = vld [vmem:[%s1 + $0x2b8] sm:$0xf]
    %v206 = vld [vmem:[%s1 + $0x2bc] sm:$0xf]
    %v207 = vld [vmem:[%s1 + $0x2c0] sm:$0xf]
    %v208 = vld [vmem:[%s1 + $0x2c4] sm:$0xf]
    %v209 = vld [vmem:[%s1 + $0x2c8] sm:$0xf]
    %v210 = vld [vmem:[%s1 + $0x2cc] sm:$0xf]
    %v211 = vld [vmem:[%s1 + $0x2d0] sm:$0xf]
    %v212 = vld [vmem:[%s1 + $0x2d4] sm:$0xf]
    %v213 = vld [vmem:[%s1 + $0x2d8] sm:$0xf]
    %v214 = vld [vmem:[%s1 + $0x2dc] sm:$0xf]
    %v215 = vld [vmem:[%s1 + $0x2e0] sm:$0xf]
    %v216 = vld [vmem:[%s1 + $0x2e4] sm:$0xf]
    %v217 = vld [vmem:[%s1 + $0x2e8] sm:$0xf]
    %v218 = vld [vmem:[%s1 + $0x2ec] sm:$0xf]
    %v219 = vld [vmem:[%s1 + $0x2f0] sm:$0xf]
    %v220 = vld [vmem:[%s1 + $0x2f4] sm:$0xf]
    %v221 = vld [vmem:[%s1 + $0x2f8] sm:$0xf]
    %v222 = vld [vmem:[%s1 + $0x2fc] sm:$0xf]
    %v223 = vld [vmem:[%s1 + $0x300] sm:$0xf]
    %v224 = vld [vmem:[%s1 + $0x304] sm:$0xf]
    %v225 = vld [vmem:[%s1 + $0x308] sm:$0xf]
    %v226 = vld [vmem:[%s1 + $0x30c] sm:$0xf]
    %v227 = vld [vmem:[%s1 + $0x310] sm:$0xf]
    %v228 = vld [vmem:[%s1 + $0x314] sm:$0xf]
    %v229 = vld [vmem:[%s1 + $0x318] sm:$0xf]
    %v230 = vld [vmem:[%s1 + $0x31c] sm:$0xf]
    %v231 = vld [vmem:[%s1 + $0x320] sm:$0xf]
    %v232 = vld [vmem:[%s1 + $0x324] sm:$0xf]
    %v233 = vld [vmem:[%s1 + $0x328] sm:$0xf]
    %v234 = vld [vmem:[%s1 + $0x32c] sm:$0xf]
    %v235 = vld [vmem:[%s1 + $0x330] sm:$0xf]
    %v236 = vld [vmem:[%s1 + $0x334] sm:$0xf]
    %v237 = vld [vmem:[%s1 + $0x338] sm:$0xf]
    %v238 = vld [vmem:[%s1 + $0x33c] sm:$0xf]
    %v239 = vld [vmem:[%s1 + $0x340] sm:$0xf]
    %v240 = vld [vmem:[%s1 + $0x344] sm:$0xf]
    %v241 = vld [vmem:[%s1 + $0x348] sm:$0xf]
    %v242 = vld [vmem:[%s1 + $0x34c] sm:$0xf]
    %v243 = vld [vmem:[%s1 + $0x350] sm:$0xf]
    %v244 = vld [vmem:[%s1 + $0x354] sm:$0xf]
    %v245 = vld [vmem:[%s1 + $0x358] sm:$0xf]
    %v246 = vld [vmem:[%s1 + $0x35c] sm:$0xf]
    %v247 = vld [vmem:[%s1 + $0x360] sm:$0xf]
    %v248 = vld [vmem:[%s1 + $0x364] sm:$0xf]
    %v249 = vld [vmem:[%s1 + $0x368] sm:$0xf]
    %v250 = vld [vmem:[%s1 + $0x36c] sm:$0xf]
    %v251 = vld [vmem:[%s1 + $0x370] sm:$0xf]
    %v252 = vld [vmem:[%s1 + $0x374] sm:$0xf]
    %v253 = vld [vmem:[%s1 + $0x378] sm:$0xf]
    %v254 = vld [vmem:[%s1 + $0x37c] sm:$0xf]
    %v255 = vld [vmem:[%s1 + $0x380] sm:$0xf]
    %v256 = vld [vmem:[%s1 + $0x384] sm:$0xf]
    %v257 = vld [vmem:[%s1 + $0x388] sm:$0xf]
    %v258 = vld [vmem:[%s1 + $0x38c] sm:$0xf]
    %v259 = vld [vmem:[%s1 + $0x390] sm:$0xf]
    %v260 = vld [vmem:[%s1 + $0x394] sm:$0xf]
    %v261 = vld [vmem:[%s1 + $0x398] sm:$0xf]
    %v262 = vld [vmem:[%s1 + $0x39c] sm:$0xf]
    %v263 = vld [vmem:[%s1 + $0x3a0] sm:$0xf]
    %v264 = vld [vmem:[%s1 + $0x3a4] sm:$0xf]
    %v265 = vld [vmem:[%s1 + $0x3a8] sm:$0xf]
    %v266 = vld [vmem:[%s1 + $0x3ac] sm:$0xf]
    %v267 = vld [vmem:[%s1 + $0x3b0] sm:$0xf]
    %v268 = vld [vmem:[%s1 + $0x3b4] sm:$0xf]
    %v269 = vld [vmem:[%s1 + $0x3b8] sm:$0xf]
    %v270 = vld [vmem:[%s1 + $0x3bc] sm:$0xf]
    %v271 = vld [vmem:[%s1 + $0x3c0] sm:$0xf]
    %v272 = vld [vmem:[%s1 + $0x3c4] sm:$0xf]
    %v273 = vld [vmem:[%s1 + $0x3c8] sm:$0xf]
    %v274 = vld [vmem:[%s1 + $0x3cc] sm:$0xf]
    %v275 = vld [vmem:[%s1 + $0x3d0] sm:$0xf]
    %v276 = vld [vmem:[%s1 + $0x3d4] sm:$0xf]
    %v277 = vld [vmem:[%s1 + $0x3d8] sm:$0xf]
    %v278 = vld [vmem:[%s1 + $0x3dc] sm:$0xf]
    %v279 = vld [vmem:[%s1 + $0x3e0] sm:$0xf]
    %v280 = vld [vmem:[%s1 + $0x3e4] sm:$0xf]
    %v281 = vld [vmem:[%s1 + $0x3e8] sm:$0xf]
    %v282 = vld [vmem:[%s1 + $0x3ec] sm:$0xf]
    %v283 = vld [vmem:[%s1 + $0x3f0] sm:$0xf]
    %v284 = vld [vmem:[%s1 + $0x3f4] sm:$0xf]
    %v285 = vld [vmem:[%s1 + $0x3f8] sm:$0xf]
    %v286 = vld [vmem:[%s1 + $0x3fc] sm:$0xf]
    %v287 = vld [vmem:[%s1 + $0x400] sm:$0xf]
    %v288 = vld [vmem:[%s1 + $0x404] sm:$0xf]
    %v289 = vld [vmem:[%s1 + $0x408] sm:$0xf]
    %v290 = vld [vmem:[%s1 + $0x40c] sm:$0xf]
    %v291 = vld [vmem:[%s1 + $0x410] sm:$0xf]
    %v292 = vld [vmem:[%s1 + $0x414] sm:$0xf]
    %v293 = vld [vmem:[%s1 + $0x418] sm:$0xf]
    %v294 = vld [vmem:[%s1 + $0x41c] sm:$0xf]
    %v295 = vld [vmem:[%s1 + $0x420] sm:$0xf]
    %v296 = vld [vmem:[%s1 + $0x424] sm:$0xf]
    %v297 = vld [vmem:[%s1 + $0x428] sm:$0xf]
    %v298 = vld [vmem:[%s1 + $0x42c] sm:$0xf]
    %v299 = vld [vmem:[%s1 + $0x430] sm:$0xf]
    %v300 = vld [vmem:[%s1 + $0x434] sm:$0xf]
    %v301 = vld [vmem:[%s1 + $0x438] sm:$0xf]
    %v302 = vld [vmem:[%s1 + $0x43c] sm:$0xf]
    %v303 = vld [vmem:[%s1 + $0x440] sm:$0xf]
    %v304 = vld [vmem:[%s1 + $0x444] sm:$0xf]
    %v305 = vld [vmem:[%s1 + $0x448] sm:$0xf]
    %v306 = vld [vmem:[%s1 + $0x44c] sm:$0xf]
    %v307 = vld [vmem:[%s1 + $0x450] sm:$0xf]
    %v308 = vld [vmem:[%s1 + $0x454] sm:$0xf]
    %v309 = vld [vmem:[%s1 + $0x458] sm:$0xf]
    %v310 = vld [vmem:[%s1 + $0x45c] sm:$0xf]
    %v311 = vld [vmem:[%s1 + $0x460] sm:$0xf]
    %v312 = vld [vmem:[%s1 + $0x464] sm:$0xf]
    %v313 = vld [vmem:[%s1 + $0x468] sm:$0xf]
    %v314 = vld [vmem:[%s1 + $0x46c] sm:$0xf]
    %v315 = vld [vmem:[%s1 + $0x470] sm:$0xf]
    %v316 = vld [vmem:[%s1 + $0x474] sm:$0xf]
    %v317 = vld [vmem:[%s1 + $0x478] sm:$0xf]
    %v318 = vld [vmem:[%s1 + $0x47c] sm:$0xf]
    %v319 = vld [vmem:[%s1 + $0x480] sm:$0xf]
    %v320 = vld [vmem:[%s1 + $0x484] sm:$0xf]
    %v321 = vld [vmem:[%s1 + $0x488] sm:$0xf]
    %v322 = vld [vmem:[%s1 + $0x48c] sm:$0xf]
    %v323 = vld [vmem:[%s1 + $0x490] sm:$0xf]
    %v324 = vld [vmem:[%s1 + $0x494] sm:$0xf]
    %v325 = vld [vmem:[%s1 + $0x498] sm:$0xf]
    %v326 = vld [vmem:[%s1 + $0x49c] sm:$0xf]
    %v327 = vld [vmem:[%s1 + $0x4a0] sm:$0xf]
    %v328 = vld [vmem:[%s1 + $0x4a4] sm:$0xf]
    %v329 = vld [vmem:[%s1 + $0x4a8] sm:$0xf]
    %v330 = vld [vmem:[%s1 + $0x4ac] sm:$0xf]
    %v331 = vld [vmem:[%s1 + $0x4b0] sm:$0xf]
    %v332 = vld [vmem:[%s1 + $0x4b4] sm:$0xf]
    %v333 = vld [vmem:[%s1 + $0x4b8] sm:$0xf]
    %v334 = vld [vmem:[%s1 + $0x4bc] sm:$0xf]
    %v335 = vld [vmem:[%s1 + $0x4c0] sm:$0xf]
    %v336 = vld [vmem:[%s1 + $0x4c4] sm:$0xf]
    %v337 = vld [vmem:[%s1 + $0x4c8] sm:$0xf]
    %v338 = vld [vmem:[%s1 + $0x4cc] sm:$0xf]
    %v339 = vld [vmem:[%s1 + $0x4d0] sm:$0xf]
    %v340 = vld [vmem:[%s1 + $0x4d4] sm:$0xf]
    %v341 = vld [vmem:[%s1 + $0x4d8] sm:$0xf]
    %v342 = vld [vmem:[%s1 + $0x4dc] sm:$0xf]
    %v343 = vld [vmem:[%s1 + $0x4e0] sm:$0xf]
    %v344 = vld [vmem:[%s1 + $0x4e4] sm:$0xf]
    %v345 = vld [vmem:[%s1 + $0x4e8] sm:$0xf]
    %v346 = vld [vmem:[%s1 + $0x4ec] sm:$0xf]
    %v347 = vld [vmem:[%s1 + $0x4f0] sm:$0xf]
    %v348 = vld [vmem:[%s1 + $0x4f4] sm:$0xf]
    %v349 = vld [vmem:[%s1 + $0x4f8] sm:$0xf]
    %v350 = vld [vmem:[%s1 + $0x4fc] sm:$0xf]
    %v351 = vld [vmem:[%s1 + $0x500] sm:$0xf]
    %v352 = vld [vmem:[%s1 + $0x504] sm:$0xf]
    %v353 = vld [vmem:[%s1 + $0x508] sm:$0xf]
    %v354 = vld [vmem:[%s1 + $0x50c] sm:$0xf]
    %v355 = vld [vmem:[%s1 + $0x510] sm:$0xf]
    %v356 = vld [vmem:[%s1 + $0x514] sm:$0xf]
    %v357 = vld [vmem:[%s1 + $0x518] sm:$0xf]
    %v358 = vld [vmem:[%s1 + $0x51c] sm:$0xf]
    %v359 = vld [vmem:[%s1 + $0x520] sm:$0xf]
    %v360 = vld [vmem:[%s1 + $0x524] sm:$0xf]
    %v361 = vld [vmem:[%s1 + $0x528] sm:$0xf]
    %v362 = vld [vmem:[%s1 + $0x52c] sm:$0xf]
    %v363 = vld [vmem:[%s1 + $0x530] sm:$0xf]
    %v364 = vld [vmem:[%s1 + $0x534] sm:$0xf]
    %v365 = vld [vmem:[%s1 + $0x538] sm:$0xf]
    %v366 = vld [vmem:[%s1 + $0x53c] sm:$0xf]
    %v367 = vld [vmem:[%s1 + $0x540] sm:$0xf]
    %v368 = vld [vmem:[%s1 + $0x544] sm:$0xf]
    %v369 = vld [vmem:[%s1 + $0x548] sm:$0xf]
    %v370 = vld [vmem:[%s1 + $0x54c] sm:$0xf]
    %v371 = vld [vmem:[%s1 + $0x550] sm:$0xf]
    %v372 = vld [vmem:[%s1 + $0x554] sm:$0xf]
    %v373 = vld [vmem:[%s1 + $0x558] sm:$0xf]
    %v374 = vld [vmem:[%s1 + $0x55c] sm:$0xf]
    %v375 = vld [vmem:[%s1 + $0x560] sm:$0xf]
    %v376 = vld [vmem:[%s1 + $0x564] sm:$0xf]
    %v377 = vld [vmem:[%s1 + $0x568] sm:$0xf]
    %v378 = vld [vmem:[%s1 + $0x56c] sm:$0xf]
    %v379 = vld [vmem:[%s1 + $0x570] sm:$0xf]
    %v380 = vld [vmem:[%s1 + $0x574] sm:$0xf]
    %v381 = vld [vmem:[%s1 + $0x578] sm:$0xf]
    %v382 = vld [vmem:[%s1 + $0x57c] sm:$0xf]
    %v383 = vld [vmem:[%s1 + $0x580] sm:$0xf]
    %v384 = vld [vmem:[%s1 + $0x584] sm:$0xf]
    %v385 = vld [vmem:[%s1 + $0x588] sm:$0xf]
    %v386 = vld [vmem:[%s1 + $0x58c] sm:$0xf]
    %v387 = vld [vmem:[%s1 + $0x590] sm:$0xf]
    %v388 = vld [vmem:[%s1 + $0x594] sm:$0xf]
    %v389 = vld [vmem:[%s1 + $0x598] sm:$0xf]
    %v390 = vld [vmem:[%s1 + $0x59c] sm:$0xf]
    %v391 = vld [vmem:[%s1 + $0x5a0] sm:$0xf]
    %v392 = vld [vmem:[%s1 + $0x5a4] sm:$0xf]
    %v393 = vld [vmem:[%s1 + $0x5a8] sm:$0xf]
    %v394 = vld [vmem:[%s1 + $0x5ac] sm:$0xf]
    %v395 = vld [vmem:[%s1 + $0x5b0] sm:$0xf]
    %v396 = vld [vmem:[%s1 + $0x5b4] sm:$0xf]
    %v397 = vld [vmem:[%s1 + $0x5b8] sm:$0xf]
    %v398 = vld [vmem:[%s1 + $0x5bc] sm:$0xf]
    %v399 = vld [vmem:[%s1 + $0x5c0] sm:$0xf]
    %v400 = vld [vmem:[%s1 + $0x5c4] sm:$0xf]
    %v401 = vld [vmem:[%s1 + $0x5c8] sm:$0xf]
    %v402 = vld [vmem:[%s1 + $0x5cc] sm:$0xf]
    %v403 = vld [vmem:[%s1 + $0x5d0] sm:$0xf]
    %v404 = vld [vmem:[%s1 + $0x5d4] sm:$0xf]
    %v405 = vld [vmem:[%s1 + $0x5d8] sm:$0xf]
    %v406 = vld [vmem:[%s1 + $0x5dc] sm:$0xf]
    %v407 = vld [vmem:[%s1 + $0x5e0] sm:$0xf]
    %v408 = vld [vmem:[%s1 + $0x5e4] sm:$0xf]
    %v409 = vld [vmem:[%s1 + $0x5e8] sm:$0xf]
    %v410 = vld [vmem:[%s1 + $0x5ec] sm:$0xf]
    %v411 = vld [vmem:[%s1 + $0x5f0] sm:$0xf]
    %v412 = vld [vmem:[%s1 + $0x5f4] sm:$0xf]
    %v413 = vld [vmem:[%s1 + $0x5f8] sm:$0xf]
    %v414 = vld [vmem:[%s1 + $0x5fc] sm:$0xf]
    %v415 = vld [vmem:[%s1 + $0x600] sm:$0xf]
    %v416 = vld [vmem:[%s1 + $0x604] sm:$0xf]
    %v417 = vld [vmem:[%s1 + $0x608] sm:$0xf]
    %v418 = vld [vmem:[%s1 + $0x60c] sm:$0xf]
    %v419 = vld [vmem:[%s1 + $0x610] sm:$0xf]
    %v420 = vld [vmem:[%s1 + $0x614] sm:$0xf]
    %v421 = vld [vmem:[%s1 + $0x618] sm:$0xf]
    %v422 = vld [vmem:[%s1 + $0x61c] sm:$0xf]
    %v423 = vld [vmem:[%s1 + $0x620] sm:$0xf]
    %v424 = vld [vmem:[%s1 + $0x624] sm:$0xf]
    %v425 = vld [vmem:[%s1 + $0x628] sm:$0xf]
    %v426 = vld [vmem:[%s1 + $0x62c] sm:$0xf]
    %v427 = vld [vmem:[%s1 + $0x630] sm:$0xf]
    %v428 = vld [vmem:[%s1 + $0x634] sm:$0xf]
    %v429 = vld [vmem:[%s1 + $0x638] sm:$0xf]
    %v430 = vld [vmem:[%s1 + $0x63c] sm:$0xf]
    %v431 = vld [vmem:[%s2] sm:$0x1]
    %v433 = vperm.slane %v431, 0
    %436 = vst [vmem:[#allocation1] ss:$9 sm:$0xff] %v27
    %v437 = vld [vmem:[#allocation1] sm:$0xff]
    %v438 = vld [vmem:[#allocation1 + $0x9] sm:$0xff]
    %v439 = vld [vmem:[#allocation1 + $0x12] sm:$0xff]
    %v440 = vld [vmem:[#allocation1 + $0x1b] sm:$0xff]
    %v441 = vld [vmem:[#allocation1 + $0x24] sm:$0xff]
    %v442 = vld [vmem:[#allocation1 + $0x2d] sm:$0xff]
    %v443 = vld [vmem:[#allocation1 + $0x36] sm:$0xff]
    %v444 = vld [vmem:[#allocation1 + $0x3f] sm:$0xff]
    %446 = vst [vmem:[#allocation1] ss:$9 sm:$0xff] %v28
    %v447 = vld [vmem:[#allocation1] sm:$0xff]
    %v448 = vld [vmem:[#allocation1 + $0x9] sm:$0xff]
    %v449 = vld [vmem:[#allocation1 + $0x12] sm:$0xff]
    %v450 = vld [vmem:[#allocation1 + $0x1b] sm:$0xff]
    %v451 = vld [vmem:[#allocation1 + $0x24] sm:$0xff]
    %v452 = vld [vmem:[#allocation1 + $0x2d] sm:$0xff]
    %v453 = vld [vmem:[#allocation1 + $0x36] sm:$0xff]
    %v454 = vld [vmem:[#allocation1 + $0x3f] sm:$0xff]
    %456 = vst [vmem:[#allocation1] ss:$9 sm:$0xff] %v29
    %v457 = vld [vmem:[#allocation1] sm:$0xff]
    %v458 = vld [vmem:[#allocation1 + $0x9] sm:$0xff]
    %v459 = vld [vmem:[#allocation1 + $0x12] sm:$0xff]
    %v460 = vld [vmem:[#allocation1 + $0x1b] sm:$0xff]
    %v461 = vld [vmem:[#allocation1 + $0x24] sm:$0xff]
    %v462 = vld [vmem:[#allocation1 + $0x2d] sm:$0xff]
    %v463 = vld [vmem:[#allocation1 + $0x36] sm:$0xff]
    %v464 = vld [vmem:[#allocation1 + $0x3f] sm:$0xff]
    %466 = vst [vmem:[#allocation1] ss:$9 sm:$0xff] %v30
    %v467 = vld [vmem:[#allocation1] sm:$0xff]
    %v893 = vunpack.c.l.b16 %v31
    %v894 = vunpack.c.l.b16 %v32
    %v895 = vunpack.c.l.b16 %v33
    %v896 = vunpack.c.l.b16 %v34
    %v897 = vunpack.c.l.b16 %v35
    %v898 = vunpack.c.l.b16 %v36
    %v899 = vunpack.c.l.b16 %v37
    %v900 = vunpack.c.l.b16 %v38
    %v901 = vunpack.c.l.b16 %v39
    %v902 = vunpack.c.l.b16 %v40
    %v903 = vunpack.c.l.b16 %v41
    %v904 = vunpack.c.l.b16 %v42
    %v905 = vunpack.c.l.b16 %v43
    %v906 = vunpack.c.l.b16 %v44
    %v907 = vunpack.c.l.b16 %v45
    %v908 = vunpack.c.l.b16 %v46
    %v909 = vunpack.c.l.b16 %v47
    %v910 = vunpack.c.l.b16 %v48
    %v911 = vunpack.c.l.b16 %v49
    %v912 = vunpack.c.l.b16 %v50
    %v913 = vunpack.c.l.b16 %v51
    %v914 = vunpack.c.l.b16 %v52
    %v915 = vunpack.c.l.b16 %v53
    %v916 = vunpack.c.l.b16 %v54
    %v917 = vunpack.c.l.b16 %v55
    %v918 = vunpack.c.l.b16 %v56
    %v919 = vunpack.c.l.b16 %v57
    %v920 = vunpack.c.l.b16 %v58
    %v921 = vunpack.c.l.b16 %v59
    %v922 = vunpack.c.l.b16 %v60
    %v923 = vunpack.c.l.b16 %v61
    %v924 = vunpack.c.l.b16 %v62
    %v925 = vunpack.c.l.b16 %v63
    %v926 = vunpack.c.l.b16 %v64
    %v927 = vunpack.c.l.b16 %v65
    %v928 = vunpack.c.l.b16 %v66
    %v929 = vunpack.c.l.b16 %v67
    %v930 = vunpack.c.l.b16 %v68
    %v931 = vunpack.c.l.b16 %v69
    %v932 = vunpack.c.l.b16 %v70
    %v933 = vunpack.c.l.b16 %v71
    %v934 = vunpack.c.l.b16 %v72
    %v935 = vunpack.c.l.b16 %v73
    %v936 = vunpack.c.l.b16 %v74
    %v937 = vunpack.c.l.b16 %v75
    %v938 = vunpack.c.l.b16 %v76
    %v939 = vunpack.c.l.b16 %v77
    %v940 = vunpack.c.l.b16 %v78
    %v941 = vunpack.c.l.b16 %v79
    %v942 = vunpack.c.l.b16 %v80
    %v943 = vunpack.c.l.b16 %v81
    %v944 = vunpack.c.l.b16 %v82
    %v945 = vunpack.c.l.b16 %v83
    %v946 = vunpack.c.l.b16 %v84
    %v947 = vunpack.c.l.b16 %v85
    %v948 = vunpack.c.l.b16 %v86
    %v949 = vunpack.c.l.b16 %v87
    %v950 = vunpack.c.l.b16 %v88
    %v951 = vunpack.c.l.b16 %v89
    %v952 = vunpack.c.l.b16 %v90
    %v953 = vunpack.c.l.b16 %v91
    %v954 = vunpack.c.l.b16 %v92
    %v955 = vunpack.c.l.b16 %v93
    %v956 = vunpack.c.l.b16 %v94
    %v957 = vunpack.c.l.b16 %v95
    %v958 = vunpack.c.l.b16 %v96
    %v959 = vunpack.c.l.b16 %v97
    %v960 = vunpack.c.l.b16 %v98
    %v961 = vunpack.c.l.b16 %v99
    %v962 = vunpack.c.l.b16 %v100
    %v963 = vunpack.c.l.b16 %v101
    %v964 = vunpack.c.l.b16 %v102
    %v965 = vunpack.c.l.b16 %v103
    %v966 = vunpack.c.l.b16 %v104
    %v967 = vunpack.c.l.b16 %v105
    %v968 = vunpack.c.l.b16 %v106
    %v969 = vunpack.c.l.b16 %v107
    %v970 = vunpack.c.l.b16 %v108
    %v971 = vunpack.c.l.b16 %v109
    %v972 = vunpack.c.l.b16 %v110
    %v973 = vunpack.c.l.b16 %v111
    %v974 = vunpack.c.l.b16 %v112
    %v975 = vunpack.c.l.b16 %v113
    %v976 = vunpack.c.l.b16 %v114
    %v977 = vunpack.c.l.b16 %v115
    %v978 = vunpack.c.l.b16 %v116
    %v979 = vunpack.c.l.b16 %v117
    %v980 = vunpack.c.l.b16 %v118
    %v981 = vunpack.c.l.b16 %v119
    %v982 = vunpack.c.l.b16 %v120
    %v983 = vunpack.c.l.b16 %v121
    %v984 = vunpack.c.l.b16 %v122
    %v985 = vunpack.c.l.b16 %v123
    %v986 = vunpack.c.l.b16 %v124
    %v987 = vunpack.c.l.b16 %v125
    %v988 = vunpack.c.l.b16 %v126
    %v989 = vunpack.c.l.b16 %v127
    %v990 = vunpack.c.l.b16 %v128
    %v991 = vunpack.c.l.b16 %v129
    %v992 = vunpack.c.l.b16 %v130
    %v993 = vunpack.c.l.b16 %v131
    %v994 = vunpack.c.l.b16 %v132
    %v995 = vunpack.c.l.b16 %v133
    %v996 = vunpack.c.l.b16 %v134
    %v997 = vunpack.c.l.b16 %v135
    %v998 = vunpack.c.l.b16 %v136
    %v999 = vunpack.c.l.b16 %v137
    %v1000 = vunpack.c.l.b16 %v138
    %v1001 = vunpack.c.l.b16 %v139
    %v1002 = vunpack.c.l.b16 %v140
    %v1003 = vunpack.c.l.b16 %v141
    %v1004 = vunpack.c.l.b16 %v142
    %v1005 = vunpack.c.l.b16 %v143
    %v1006 = vunpack.c.l.b16 %v144
    %v1007 = vunpack.c.l.b16 %v145
    %v1008 = vunpack.c.l.b16 %v146
    %v1009 = vunpack.c.l.b16 %v147
    %v1010 = vunpack.c.l.b16 %v148
    %v1011 = vunpack.c.l.b16 %v149
    %v1012 = vunpack.c.l.b16 %v150
    %v1013 = vunpack.c.l.b16 %v151
    %v1014 = vunpack.c.l.b16 %v152
    %v1015 = vunpack.c.l.b16 %v153
    %v1016 = vunpack.c.l.b16 %v154
    %v1017 = vunpack.c.l.b16 %v155
    %v1018 = vunpack.c.l.b16 %v156
    %v1019 = vunpack.c.l.b16 %v157
    %v1020 = vunpack.c.l.b16 %v158
    %v1021 = vunpack.c.l.b16 %v159
    %v1022 = vunpack.c.l.b16 %v160
    %v1023 = vunpack.c.l.b16 %v161
    %v1024 = vunpack.c.l.b16 %v162
    %v1025 = vunpack.c.l.b16 %v163
    %v1026 = vunpack.c.l.b16 %v164
    %v1027 = vunpack.c.l.b16 %v165
    %v1028 = vunpack.c.l.b16 %v166
    %v1029 = vunpack.c.l.b16 %v167
    %v1030 = vunpack.c.l.b16 %v168
    %v1031 = vunpack.c.l.b16 %v169
    %v1032 = vunpack.c.l.b16 %v170
    %v1033 = vunpack.c.l.b16 %v171
    %v1034 = vunpack.c.l.b16 %v172
    %v1035 = vunpack.c.l.b16 %v173
    %v1036 = vunpack.c.l.b16 %v174
    %v1037 = vunpack.c.l.b16 %v175
    %v1038 = vunpack.c.l.b16 %v176
    %v1039 = vunpack.c.l.b16 %v177
    %v1040 = vunpack.c.l.b16 %v178
    %v1041 = vunpack.c.l.b16 %v179
    %v1042 = vunpack.c.l.b16 %v180
    %v1043 = vunpack.c.l.b16 %v181
    %v1044 = vunpack.c.l.b16 %v182
    %v1045 = vunpack.c.l.b16 %v183
    %v1046 = vunpack.c.l.b16 %v184
    %v1047 = vunpack.c.l.b16 %v185
    %v1048 = vunpack.c.l.b16 %v186
    %v1049 = vunpack.c.l.b16 %v187
    %v1050 = vunpack.c.l.b16 %v188
    %v1051 = vunpack.c.l.b16 %v189
    %v1052 = vunpack.c.l.b16 %v190
    %v1053 = vunpack.c.l.b16 %v191
    %v1054 = vunpack.c.l.b16 %v192
    %v1055 = vunpack.c.l.b16 %v193
    %v1056 = vunpack.c.l.b16 %v194
    %v1057 = vunpack.c.l.b16 %v195
    %v1058 = vunpack.c.l.b16 %v196
    %v1059 = vunpack.c.l.b16 %v197
    %v1060 = vunpack.c.l.b16 %v198
    %v1061 = vunpack.c.l.b16 %v199
    %v1062 = vunpack.c.l.b16 %v200
    %v1063 = vunpack.c.l.b16 %v201
    %v1064 = vunpack.c.l.b16 %v202
    %v1065 = vunpack.c.l.b16 %v203
    %v1066 = vunpack.c.l.b16 %v204
    %v1067 = vunpack.c.l.b16 %v205
    %v1068 = vunpack.c.l.b16 %v206
    %v1069 = vunpack.c.l.b16 %v207
    %v1070 = vunpack.c.l.b16 %v208
    %v1071 = vunpack.c.l.b16 %v209
    %v1072 = vunpack.c.l.b16 %v210
    %v1073 = vunpack.c.l.b16 %v211
    %v1074 = vunpack.c.l.b16 %v212
    %v1075 = vunpack.c.l.b16 %v213
    %v1076 = vunpack.c.l.b16 %v214
    %v1077 = vunpack.c.l.b16 %v215
    %v1078 = vunpack.c.l.b16 %v216
    %v1079 = vunpack.c.l.b16 %v217
    %v1080 = vunpack.c.l.b16 %v218
    %v1081 = vunpack.c.l.b16 %v219
    %v1082 = vunpack.c.l.b16 %v220
    %v1083 = vunpack.c.l.b16 %v221
    %v1084 = vunpack.c.l.b16 %v222
    %v1085 = vunpack.c.l.b16 %v223
    %v1086 = vunpack.c.l.b16 %v224
    %v1087 = vunpack.c.l.b16 %v225
    %v1088 = vunpack.c.l.b16 %v226
    %v1089 = vunpack.c.l.b16 %v227
    %v1090 = vunpack.c.l.b16 %v228
    %v1091 = vunpack.c.l.b16 %v229
    %v1092 = vunpack.c.l.b16 %v230
    %v1093 = vunpack.c.l.b16 %v231
    %v1094 = vunpack.c.l.b16 %v232
    %v1095 = vunpack.c.l.b16 %v233
    %v1096 = vunpack.c.l.b16 %v234
    %v1097 = vunpack.c.l.b16 %v235
    %v1098 = vunpack.c.l.b16 %v236
    %v1099 = vunpack.c.l.b16 %v237
    %v1100 = vunpack.c.l.b16 %v238
    %v1101 = vunpack.c.l.b16 %v239
    %v1102 = vunpack.c.l.b16 %v240
    %v1103 = vunpack.c.l.b16 %v241
    %v1104 = vunpack.c.l.b16 %v242
    %v1105 = vunpack.c.l.b16 %v243
    %v1106 = vunpack.c.l.b16 %v244
    %v1107 = vunpack.c.l.b16 %v245
    %v1108 = vunpack.c.l.b16 %v246
    %v1109 = vunpack.c.l.b16 %v247
    %v1110 = vunpack.c.l.b16 %v248
    %v1111 = vunpack.c.l.b16 %v249
    %v1112 = vunpack.c.l.b16 %v250
    %v1113 = vunpack.c.l.b16 %v251
    %v1114 = vunpack.c.l.b16 %v252
    %v1115 = vunpack.c.l.b16 %v253
    %v1116 = vunpack.c.l.b16 %v254
    %v1117 = vunpack.c.l.b16 %v255
    %v1118 = vunpack.c.l.b16 %v256
    %v1119 = vunpack.c.l.b16 %v257
    %v1120 = vunpack.c.l.b16 %v258
    %v1121 = vunpack.c.l.b16 %v259
    %v1122 = vunpack.c.l.b16 %v260
    %v1123 = vunpack.c.l.b16 %v261
    %v1124 = vunpack.c.l.b16 %v262
    %v1125 = vunpack.c.l.b16 %v263
    %v1126 = vunpack.c.l.b16 %v264
    %v1127 = vunpack.c.l.b16 %v265
    %v1128 = vunpack.c.l.b16 %v266
    %v1129 = vunpack.c.l.b16 %v267
    %v1130 = vunpack.c.l.b16 %v268
    %v1131 = vunpack.c.l.b16 %v269
    %v1132 = vunpack.c.l.b16 %v270
    %v1133 = vunpack.c.l.b16 %v271
    %v1134 = vunpack.c.l.b16 %v272
    %v1135 = vunpack.c.l.b16 %v273
    %v1136 = vunpack.c.l.b16 %v274
    %v1137 = vunpack.c.l.b16 %v275
    %v1138 = vunpack.c.l.b16 %v276
    %v1139 = vunpack.c.l.b16 %v277
    %v1140 = vunpack.c.l.b16 %v278
    %v1141 = vunpack.c.l.b16 %v279
    %v1142 = vunpack.c.l.b16 %v280
    %v1143 = vunpack.c.l.b16 %v281
    %v1144 = vunpack.c.l.b16 %v282
    %v1145 = vunpack.c.l.b16 %v283
    %v1146 = vunpack.c.l.b16 %v284
    %v1147 = vunpack.c.l.b16 %v285
    %v1148 = vunpack.c.l.b16 %v286
    %v1149 = vunpack.c.l.b16 %v287
    %v1150 = vunpack.c.l.b16 %v288
    %v1151 = vunpack.c.l.b16 %v289
    %v1152 = vunpack.c.l.b16 %v290
    %v1153 = vunpack.c.l.b16 %v291
    %v1154 = vunpack.c.l.b16 %v292
    %v1155 = vunpack.c.l.b16 %v293
    %v1156 = vunpack.c.l.b16 %v294
    %v1157 = vunpack.c.l.b16 %v295
    %v1158 = vunpack.c.l.b16 %v296
    %v1159 = vunpack.c.l.b16 %v297
    %v1160 = vunpack.c.l.b16 %v298
    %v1161 = vunpack.c.l.b16 %v299
    %v1162 = vunpack.c.l.b16 %v300
    %v1163 = vunpack.c.l.b16 %v301
    %v1164 = vunpack.c.l.b16 %v302
    %v1165 = vunpack.c.l.b16 %v303
    %v1166 = vunpack.c.l.b16 %v304
    %v1167 = vunpack.c.l.b16 %v305
    %v1168 = vunpack.c.l.b16 %v306
    %v1169 = vunpack.c.l.b16 %v307
    %v1170 = vunpack.c.l.b16 %v308
    %v1171 = vunpack.c.l.b16 %v309
    %v1172 = vunpack.c.l.b16 %v310
    %v1173 = vunpack.c.l.b16 %v311
    %v1174 = vunpack.c.l.b16 %v312
    %v1175 = vunpack.c.l.b16 %v313
    %v1176 = vunpack.c.l.b16 %v314
    %v1177 = vunpack.c.l.b16 %v315
    %v1178 = vunpack.c.l.b16 %v316
    %v1179 = vunpack.c.l.b16 %v317
    %v1180 = vunpack.c.l.b16 %v318
    %v1181 = vunpack.c.l.b16 %v319
    %v1182 = vunpack.c.l.b16 %v320
    %v1183 = vunpack.c.l.b16 %v321
    %v1184 = vunpack.c.l.b16 %v322
    %v1185 = vunpack.c.l.b16 %v323
    %v1186 = vunpack.c.l.b16 %v324
    %v1187 = vunpack.c.l.b16 %v325
    %v1188 = vunpack.c.l.b16 %v326
    %v1189 = vunpack.c.l.b16 %v327
    %v1190 = vunpack.c.l.b16 %v328
    %v1191 = vunpack.c.l.b16 %v329
    %v1192 = vunpack.c.l.b16 %v330
    %v1193 = vunpack.c.l.b16 %v331
    %v1194 = vunpack.c.l.b16 %v332
    %v1195 = vunpack.c.l.b16 %v333
    %v1196 = vunpack.c.l.b16 %v334
    %v1197 = vunpack.c.l.b16 %v335
    %v1198 = vunpack.c.l.b16 %v336
    %v1199 = vunpack.c.l.b16 %v337
    %v1200 = vunpack.c.l.b16 %v338
    %v1201 = vunpack.c.l.b16 %v339
    %v1202 = vunpack.c.l.b16 %v340
    %v1203 = vunpack.c.l.b16 %v341
    %v1204 = vunpack.c.l.b16 %v342
    %v1205 = vunpack.c.l.b16 %v343
    %v1206 = vunpack.c.l.b16 %v344
    %v1207 = vunpack.c.l.b16 %v345
    %v1208 = vunpack.c.l.b16 %v346
    %v1209 = vunpack.c.l.b16 %v347
    %v1210 = vunpack.c.l.b16 %v348
    %v1211 = vunpack.c.l.b16 %v349
    %v1212 = vunpack.c.l.b16 %v350
    %v1213 = vunpack.c.l.b16 %v351
    %v1214 = vunpack.c.l.b16 %v352
    %v1215 = vunpack.c.l.b16 %v353
    %v1216 = vunpack.c.l.b16 %v354
    %v1217 = vunpack.c.l.b16 %v355
    %v1218 = vunpack.c.l.b16 %v356
    %v1219 = vunpack.c.l.b16 %v357
    %v1220 = vunpack.c.l.b16 %v358
    %v1221 = vunpack.c.l.b16 %v359
    %v1222 = vunpack.c.l.b16 %v360
    %v1223 = vunpack.c.l.b16 %v361
    %v1224 = vunpack.c.l.b16 %v362
    %v1225 = vunpack.c.l.b16 %v363
    %v1226 = vunpack.c.l.b16 %v364
    %v1227 = vunpack.c.l.b16 %v365
    %v1228 = vunpack.c.l.b16 %v366
    %v1229 = vunpack.c.l.b16 %v367
    %v1230 = vunpack.c.l.b16 %v368
    %v1231 = vunpack.c.l.b16 %v369
    %v1232 = vunpack.c.l.b16 %v370
    %v1233 = vunpack.c.l.b16 %v371
    %v1234 = vunpack.c.l.b16 %v372
    %v1235 = vunpack.c.l.b16 %v373
    %v1236 = vunpack.c.l.b16 %v374
    %v1237 = vunpack.c.l.b16 %v375
    %v1238 = vunpack.c.l.b16 %v376
    %v1239 = vunpack.c.l.b16 %v377
    %v1240 = vunpack.c.l.b16 %v378
    %v1241 = vunpack.c.l.b16 %v379
    %v1242 = vunpack.c.l.b16 %v380
    %v1243 = vunpack.c.l.b16 %v381
    %v1244 = vunpack.c.l.b16 %v382
    %v1245 = vunpack.c.l.b16 %v383
    %v1246 = vunpack.c.l.b16 %v384
    %v1247 = vunpack.c.l.b16 %v385
    %v1248 = vunpack.c.l.b16 %v386
    %v1249 = vunpack.c.l.b16 %v387
    %v1250 = vunpack.c.l.b16 %v388
    %v1251 = vunpack.c.l.b16 %v389
    %v1252 = vunpack.c.l.b16 %v390
    %v1253 = vunpack.c.l.b16 %v391
    %v1254 = vunpack.c.l.b16 %v392
    %v1255 = vunpack.c.l.b16 %v393
    %v1256 = vunpack.c.l.b16 %v394
    %v1257 = vunpack.c.l.b16 %v395
    %v1258 = vunpack.c.l.b16 %v396
    %v1259 = vunpack.c.l.b16 %v397
    %v1260 = vunpack.c.l.b16 %v398
    %v1261 = vunpack.c.l.b16 %v399
    %v1262 = vunpack.c.l.b16 %v400
    %v1263 = vunpack.c.l.b16 %v401
    %v1264 = vunpack.c.l.b16 %v402
    %v1265 = vunpack.c.l.b16 %v403
    %v1266 = vunpack.c.l.b16 %v404
    %v1267 = vunpack.c.l.b16 %v405
    %v1268 = vunpack.c.l.b16 %v406
    %v1269 = vunpack.c.l.b16 %v407
    %v1270 = vunpack.c.l.b16 %v408
    %v1271 = vunpack.c.l.b16 %v409
    %v1272 = vunpack.c.l.b16 %v410
    %v1273 = vunpack.c.l.b16 %v411
    %v1274 = vunpack.c.l.b16 %v412
    %v1275 = vunpack.c.l.b16 %v413
    %v1276 = vunpack.c.l.b16 %v414
    %v1277 = vunpack.c.l.b16 %v415
    %v1278 = vunpack.c.l.b16 %v416
    %v1279 = vunpack.c.l.b16 %v417
    %v1280 = vunpack.c.l.b16 %v418
    %v1281 = vunpack.c.l.b16 %v419
    %v1282 = vunpack.c.l.b16 %v420
    %v1283 = vunpack.c.l.b16 %v421
    %v1284 = vunpack.c.l.b16 %v422
    %v1285 = vunpack.c.l.b16 %v423
    %v1286 = vunpack.c.l.b16 %v424
    %v1287 = vunpack.c.l.b16 %v425
    %v1288 = vunpack.c.l.b16 %v426
    %v1289 = vunpack.c.l.b16 %v427
    %v1290 = vunpack.c.l.b16 %v428
    %v1291 = vunpack.c.l.b16 %v429
    %v1292 = vunpack.c.l.b16 %v430
    %v1293 = vpack.c.b16 %v894, %v893
    %v1294 = vpack.c.b16 %v896, %v895
    %v1295 = vpack.c.b16 %v898, %v897
    %v1296 = vpack.c.b16 %v900, %v899
    %v1297 = vpack.c.b16 %v902, %v901
    %v1298 = vpack.c.b16 %v904, %v903
    %v1299 = vpack.c.b16 %v906, %v905
    %v1300 = vpack.c.b16 %v908, %v907
    %v1301 = vpack.c.b16 %v910, %v909
    %v1302 = vpack.c.b16 %v912, %v911
    %v1303 = vpack.c.b16 %v914, %v913
    %v1304 = vpack.c.b16 %v916, %v915
    %v1305 = vpack.c.b16 %v918, %v917
    %v1306 = vpack.c.b16 %v920, %v919
    %v1307 = vpack.c.b16 %v922, %v921
    %v1308 = vpack.c.b16 %v924, %v923
    %v1309 = vpack.c.b16 %v926, %v925
    %v1310 = vpack.c.b16 %v928, %v927
    %v1311 = vpack.c.b16 %v930, %v929
    %v1312 = vpack.c.b16 %v932, %v931
    %v1313 = vpack.c.b16 %v934, %v933
    %v1314 = vpack.c.b16 %v936, %v935
    %v1315 = vpack.c.b16 %v938, %v937
    %v1316 = vpack.c.b16 %v940, %v939
    %v1317 = vpack.c.b16 %v942, %v941
    %v1318 = vpack.c.b16 %v944, %v943
    %v1319 = vpack.c.b16 %v946, %v945
    %v1320 = vpack.c.b16 %v948, %v947
    %v1321 = vpack.c.b16 %v950, %v949
    %v1322 = vpack.c.b16 %v952, %v951
    %v1323 = vpack.c.b16 %v954, %v953
    %v1324 = vpack.c.b16 %v956, %v955
    %v1325 = vpack.c.b16 %v958, %v957
    %v1326 = vpack.c.b16 %v960, %v959
    %v1327 = vpack.c.b16 %v962, %v961
    %v1328 = vpack.c.b16 %v964, %v963
    %v1329 = vpack.c.b16 %v966, %v965
    %v1330 = vpack.c.b16 %v968, %v967
    %v1331 = vpack.c.b16 %v970, %v969
    %v1332 = vpack.c.b16 %v972, %v971
    %v1333 = vpack.c.b16 %v974, %v973
    %v1334 = vpack.c.b16 %v976, %v975
    %v1335 = vpack.c.b16 %v978, %v977
    %v1336 = vpack.c.b16 %v980, %v979
    %v1337 = vpack.c.b16 %v982, %v981
    %v1338 = vpack.c.b16 %v984, %v983
    %v1339 = vpack.c.b16 %v986, %v985
    %v1340 = vpack.c.b16 %v988, %v987
    %v1341 = vpack.c.b16 %v990, %v989
    %v1342 = vpack.c.b16 %v992, %v991
    %v1343 = vpack.c.b16 %v994, %v993
    %v1344 = vpack.c.b16 %v996, %v995
    %v1345 = vpack.c.b16 %v998, %v997
    %v1346 = vpack.c.b16 %v1000, %v999
    %v1347 = vpack.c.b16 %v1002, %v1001
    %v1348 = vpack.c.b16 %v1004, %v1003
    %v1349 = vpack.c.b16 %v1006, %v1005
    %v1350 = vpack.c.b16 %v1008, %v1007
    %v1351 = vpack.c.b16 %v1010, %v1009
    %v1352 = vpack.c.b16 %v1012, %v1011
    %v1353 = vpack.c.b16 %v1014, %v1013
    %v1354 = vpack.c.b16 %v1016, %v1015
    %v1355 = vpack.c.b16 %v1018, %v1017
    %v1356 = vpack.c.b16 %v1020, %v1019
    %v1357 = vpack.c.b16 %v1022, %v1021
    %v1358 = vpack.c.b16 %v1024, %v1023
    %v1359 = vpack.c.b16 %v1026, %v1025
    %v1360 = vpack.c.b16 %v1028, %v1027
    %v1361 = vpack.c.b16 %v1030, %v1029
    %v1362 = vpack.c.b16 %v1032, %v1031
    %v1363 = vpack.c.b16 %v1034, %v1033
    %v1364 = vpack.c.b16 %v1036, %v1035
    %v1365 = vpack.c.b16 %v1038, %v1037
    %v1366 = vpack.c.b16 %v1040, %v1039
    %v1367 = vpack.c.b16 %v1042, %v1041
    %v1368 = vpack.c.b16 %v1044, %v1043
    %v1369 = vpack.c.b16 %v1046, %v1045
    %v1370 = vpack.c.b16 %v1048, %v1047
    %v1371 = vpack.c.b16 %v1050, %v1049
    %v1372 = vpack.c.b16 %v1052, %v1051
    %v1373 = vpack.c.b16 %v1054, %v1053
    %v1374 = vpack.c.b16 %v1056, %v1055
    %v1375 = vpack.c.b16 %v1058, %v1057
    %v1376 = vpack.c.b16 %v1060, %v1059
    %v1377 = vpack.c.b16 %v1062, %v1061
    %v1378 = vpack.c.b16 %v1064, %v1063
    %v1379 = vpack.c.b16 %v1066, %v1065
    %v1380 = vpack.c.b16 %v1068, %v1067
    %v1381 = vpack.c.b16 %v1070, %v1069
    %v1382 = vpack.c.b16 %v1072, %v1071
    %v1383 = vpack.c.b16 %v1074, %v1073
    %v1384 = vpack.c.b16 %v1076, %v1075
    %v1385 = vpack.c.b16 %v1078, %v1077
    %v1386 = vpack.c.b16 %v1080, %v1079
    %v1387 = vpack.c.b16 %v1082, %v1081
    %v1388 = vpack.c.b16 %v1084, %v1083
    %v1389 = vpack.c.b16 %v1086, %v1085
    %v1390 = vpack.c.b16 %v1088, %v1087
    %v1391 = vpack.c.b16 %v1090, %v1089
    %v1392 = vpack.c.b16 %v1092, %v1091
    %v1393 = vpack.c.b16 %v1094, %v1093
    %v1394 = vpack.c.b16 %v1096, %v1095
    %v1395 = vpack.c.b16 %v1098, %v1097
    %v1396 = vpack.c.b16 %v1100, %v1099
    %v1397 = vpack.c.b16 %v1102, %v1101
    %v1398 = vpack.c.b16 %v1104, %v1103
    %v1399 = vpack.c.b16 %v1106, %v1105
    %v1400 = vpack.c.b16 %v1108, %v1107
    %v1401 = vpack.c.b16 %v1110, %v1109
    %v1402 = vpack.c.b16 %v1112, %v1111
    %v1403 = vpack.c.b16 %v1114, %v1113
    %v1404 = vpack.c.b16 %v1116, %v1115
    %v1405 = vpack.c.b16 %v1118, %v1117
    %v1406 = vpack.c.b16 %v1120, %v1119
    %v1407 = vpack.c.b16 %v1122, %v1121
    %v1408 = vpack.c.b16 %v1124, %v1123
    %v1409 = vpack.c.b16 %v1126, %v1125
    %v1410 = vpack.c.b16 %v1128, %v1127
    %v1411 = vpack.c.b16 %v1130, %v1129
    %v1412 = vpack.c.b16 %v1132, %v1131
    %v1413 = vpack.c.b16 %v1134, %v1133
    %v1414 = vpack.c.b16 %v1136, %v1135
    %v1415 = vpack.c.b16 %v1138, %v1137
    %v1416 = vpack.c.b16 %v1140, %v1139
    %v1417 = vpack.c.b16 %v1142, %v1141
    %v1418 = vpack.c.b16 %v1144, %v1143
    %v1419 = vpack.c.b16 %v1146, %v1145
    %v1420 = vpack.c.b16 %v1148, %v1147
    %v1421 = vpack.c.b16 %v1150, %v1149
    %v1422 = vpack.c.b16 %v1152, %v1151
    %v1423 = vpack.c.b16 %v1154, %v1153
    %v1424 = vpack.c.b16 %v1156, %v1155
    %v1425 = vpack.c.b16 %v1158, %v1157
    %v1426 = vpack.c.b16 %v1160, %v1159
    %v1427 = vpack.c.b16 %v1162, %v1161
    %v1428 = vpack.c.b16 %v1164, %v1163
    %v1429 = vpack.c.b16 %v1166, %v1165
    %v1430 = vpack.c.b16 %v1168, %v1167
    %v1431 = vpack.c.b16 %v1170, %v1169
    %v1432 = vpack.c.b16 %v1172, %v1171
    %v1433 = vpack.c.b16 %v1174, %v1173
    %v1434 = vpack.c.b16 %v1176, %v1175
    %v1435 = vpack.c.b16 %v1178, %v1177
    %v1436 = vpack.c.b16 %v1180, %v1179
    %v1437 = vpack.c.b16 %v1182, %v1181
    %v1438 = vpack.c.b16 %v1184, %v1183
    %v1439 = vpack.c.b16 %v1186, %v1185
    %v1440 = vpack.c.b16 %v1188, %v1187
    %v1441 = vpack.c.b16 %v1190, %v1189
    %v1442 = vpack.c.b16 %v1192, %v1191
    %v1443 = vpack.c.b16 %v1194, %v1193
    %v1444 = vpack.c.b16 %v1196, %v1195
    %v1445 = vpack.c.b16 %v1198, %v1197
    %v1446 = vpack.c.b16 %v1200, %v1199
    %v1447 = vpack.c.b16 %v1202, %v1201
    %v1448 = vpack.c.b16 %v1204, %v1203
    %v1449 = vpack.c.b16 %v1206, %v1205
    %v1450 = vpack.c.b16 %v1208, %v1207
    %v1451 = vpack.c.b16 %v1210, %v1209
    %v1452 = vpack.c.b16 %v1212, %v1211
    %v1453 = vpack.c.b16 %v1214, %v1213
    %v1454 = vpack.c.b16 %v1216, %v1215
    %v1455 = vpack.c.b16 %v1218, %v1217
    %v1456 = vpack.c.b16 %v1220, %v1219
    %v1457 = vpack.c.b16 %v1222, %v1221
    %v1458 = vpack.c.b16 %v1224, %v1223
    %v1459 = vpack.c.b16 %v1226, %v1225
    %v1460 = vpack.c.b16 %v1228, %v1227
    %v1461 = vpack.c.b16 %v1230, %v1229
    %v1462 = vpack.c.b16 %v1232, %v1231
    %v1463 = vpack.c.b16 %v1234, %v1233
    %v1464 = vpack.c.b16 %v1236, %v1235
    %v1465 = vpack.c.b16 %v1238, %v1237
    %v1466 = vpack.c.b16 %v1240, %v1239
    %v1467 = vpack.c.b16 %v1242, %v1241
    %v1468 = vpack.c.b16 %v1244, %v1243
    %v1469 = vpack.c.b16 %v1246, %v1245
    %v1470 = vpack.c.b16 %v1248, %v1247
    %v1471 = vpack.c.b16 %v1250, %v1249
    %v1472 = vpack.c.b16 %v1252, %v1251
    %v1473 = vpack.c.b16 %v1254, %v1253
    %v1474 = vpack.c.b16 %v1256, %v1255
    %v1475 = vpack.c.b16 %v1258, %v1257
    %v1476 = vpack.c.b16 %v1260, %v1259
    %v1477 = vpack.c.b16 %v1262, %v1261
    %v1478 = vpack.c.b16 %v1264, %v1263
    %v1479 = vpack.c.b16 %v1266, %v1265
    %v1480 = vpack.c.b16 %v1268, %v1267
    %v1481 = vpack.c.b16 %v1270, %v1269
    %v1482 = vpack.c.b16 %v1272, %v1271
    %v1483 = vpack.c.b16 %v1274, %v1273
    %v1484 = vpack.c.b16 %v1276, %v1275
    %v1485 = vpack.c.b16 %v1278, %v1277
    %v1486 = vpack.c.b16 %v1280, %v1279
    %v1487 = vpack.c.b16 %v1282, %v1281
    %v1488 = vpack.c.b16 %v1284, %v1283
    %v1489 = vpack.c.b16 %v1286, %v1285
    %v1490 = vpack.c.b16 %v1288, %v1287
    %v1491 = vpack.c.b16 %v1290, %v1289
    %v1492 = vpack.c.b16 %v1292, %v1291
    %1693 = vmatpush.bf16.msra.mxu0 %v1300
    %1694 = vmatpush.bf16.msra.mxu0 %v1299
    %1695 = vmatpush.bf16.msra.mxu0 %v1298
    %1696 = vmatpush.bf16.msra.mxu0 %v1297
    %1697 = vmatpush.bf16.msra.mxu0 %v1296
    %1698 = vmatpush.bf16.msra.mxu0 %v1295
    %1699 = vmatpush.bf16.msra.mxu0 %v1294
    %1700 = vmatpush.bf16.msra.mxu0 %v1293
    %1701 = vmatmul.bf16.gmra.mxu0 %v437
    %v1702 = vpop.f32.mrf.mxu0
    %v1703 = vadd.f32 %v433, %v1702
    %v1704 = vpop.f32.mrf.mxu0
    %1705 = vdwg.mxu0
    %1706 = vmatpush.bf16.msra.mxu0 %v1308
    %1707 = vmatpush.bf16.msra.mxu0 %v1307
    %1708 = vmatpush.bf16.msra.mxu0 %v1306
    %1709 = vmatpush.bf16.msra.mxu0 %v1305
    %1710 = vmatpush.bf16.msra.mxu0 %v1304
    %1711 = vmatpush.bf16.msra.mxu0 %v1303
    %1712 = vmatpush.bf16.msra.mxu0 %v1302
    %1713 = vmatpush.bf16.msra.mxu0 %v1301
    %1714 = vmatmul.bf16.gmra.mxu0 %v438
    %v1715 = vpop.f32.mrf.mxu0
    %v1716 = vadd.f32 %v1703, %v1715
    %v1717 = vpop.f32.mrf.mxu0
    %1718 = vdwg.mxu0
    %1719 = vmatpush.bf16.msra.mxu0 %v1316
    %1720 = vmatpush.bf16.msra.mxu0 %v1315
    %1721 = vmatpush.bf16.msra.mxu0 %v1314
    %1722 = vmatpush.bf16.msra.mxu0 %v1313
    %1723 = vmatpush.bf16.msra.mxu0 %v1312
    %1724 = vmatpush.bf16.msra.mxu0 %v1311
    %1725 = vmatpush.bf16.msra.mxu0 %v1310
    %1726 = vmatpush.bf16.msra.mxu0 %v1309
    %1727 = vmatmul.bf16.gmra.mxu0 %v439
    %v1728 = vpop.f32.mrf.mxu0
    %v1729 = vadd.f32 %v1716, %v1728
    %v1730 = vpop.f32.mrf.mxu0
    %1731 = vdwg.mxu0
    %1732 = vmatpush.bf16.msra.mxu0 %v1324
    %1733 = vmatpush.bf16.msra.mxu0 %v1323
    %1734 = vmatpush.bf16.msra.mxu0 %v1322
    %1735 = vmatpush.bf16.msra.mxu0 %v1321
    %1736 = vmatpush.bf16.msra.mxu0 %v1320
    %1737 = vmatpush.bf16.msra.mxu0 %v1319
    %1738 = vmatpush.bf16.msra.mxu0 %v1318
    %1739 = vmatpush.bf16.msra.mxu0 %v1317
    %1740 = vmatmul.bf16.gmra.mxu0 %v440
    %v1741 = vpop.f32.mrf.mxu0
    %v1742 = vadd.f32 %v1729, %v1741
    %v1743 = vpop.f32.mrf.mxu0
    %1744 = vdwg.mxu0
    %1745 = vmatpush.bf16.msra.mxu0 %v1332
    %1746 = vmatpush.bf16.msra.mxu0 %v1331
    %1747 = vmatpush.bf16.msra.mxu0 %v1330
    %1748 = vmatpush.bf16.msra.mxu0 %v1329
    %1749 = vmatpush.bf16.msra.mxu0 %v1328
    %1750 = vmatpush.bf16.msra.mxu0 %v1327
    %1751 = vmatpush.bf16.msra.mxu0 %v1326
    %1752 = vmatpush.bf16.msra.mxu0 %v1325
    %1753 = vmatmul.bf16.gmra.mxu0 %v441
    %v1754 = vpop.f32.mrf.mxu0
    %v1755 = vadd.f32 %v1742, %v1754
    %v1756 = vpop.f32.mrf.mxu0
    %1757 = vdwg.mxu0
    %1758 = vmatpush.bf16.msra.mxu0 %v1340
    %1759 = vmatpush.bf16.msra.mxu0 %v1339
    %1760 = vmatpush.bf16.msra.mxu0 %v1338
    %1761 = vmatpush.bf16.msra.mxu0 %v1337
    %1762 = vmatpush.bf16.msra.mxu0 %v1336
    %1763 = vmatpush.bf16.msra.mxu0 %v1335
    %1764 = vmatpush.bf16.msra.mxu0 %v1334
    %1765 = vmatpush.bf16.msra.mxu0 %v1333
    %1766 = vmatmul.bf16.gmra.mxu0 %v442
    %v1767 = vpop.f32.mrf.mxu0
    %v1768 = vadd.f32 %v1755, %v1767
    %v1769 = vpop.f32.mrf.mxu0
    %1770 = vdwg.mxu0
    %1771 = vmatpush.bf16.msra.mxu0 %v1348
    %1772 = vmatpush.bf16.msra.mxu0 %v1347
    %1773 = vmatpush.bf16.msra.mxu0 %v1346
    %1774 = vmatpush.bf16.msra.mxu0 %v1345
    %1775 = vmatpush.bf16.msra.mxu0 %v1344
    %1776 = vmatpush.bf16.msra.mxu0 %v1343
    %1777 = vmatpush.bf16.msra.mxu0 %v1342
    %1778 = vmatpush.bf16.msra.mxu0 %v1341
    %1779 = vmatmul.bf16.gmra.mxu0 %v443
    %v1780 = vpop.f32.mrf.mxu0
    %v1781 = vadd.f32 %v1768, %v1780
    %v1782 = vpop.f32.mrf.mxu0
    %1783 = vdwg.mxu0
    %1784 = vmatpush.bf16.msra.mxu0 %v1356
    %1785 = vmatpush.bf16.msra.mxu0 %v1355
    %1786 = vmatpush.bf16.msra.mxu0 %v1354
    %1787 = vmatpush.bf16.msra.mxu0 %v1353
    %1788 = vmatpush.bf16.msra.mxu0 %v1352
    %1789 = vmatpush.bf16.msra.mxu0 %v1351
    %1790 = vmatpush.bf16.msra.mxu0 %v1350
    %1791 = vmatpush.bf16.msra.mxu0 %v1349
    %1792 = vmatmul.bf16.gmra.mxu0 %v444
    %v1793 = vpop.f32.mrf.mxu0
    %v1794 = vadd.f32 %v1781, %v1793
    %v1795 = vpop.f32.mrf.mxu0
    %1796 = vdwg.mxu0
    %1797 = vmatpush.bf16.msra.mxu0 %v1364
    %1798 = vmatpush.bf16.msra.mxu0 %v1363
    %1799 = vmatpush.bf16.msra.mxu0 %v1362
    %1800 = vmatpush.bf16.msra.mxu0 %v1361
    %1801 = vmatpush.bf16.msra.mxu0 %v1360
    %1802 = vmatpush.bf16.msra.mxu0 %v1359
    %1803 = vmatpush.bf16.msra.mxu0 %v1358
    %1804 = vmatpush.bf16.msra.mxu0 %v1357
    %1805 = vmatmul.bf16.gmra.mxu0 %v447
    %v1806 = vpop.f32.mrf.mxu0
    %v1807 = vadd.f32 %v1794, %v1806
    %v1808 = vpop.f32.mrf.mxu0
    %1809 = vdwg.mxu0
    %1810 = vmatpush.bf16.msra.mxu0 %v1372
    %1811 = vmatpush.bf16.msra.mxu0 %v1371
    %1812 = vmatpush.bf16.msra.mxu0 %v1370
    %1813 = vmatpush.bf16.msra.mxu0 %v1369
    %1814 = vmatpush.bf16.msra.mxu0 %v1368
    %1815 = vmatpush.bf16.msra.mxu0 %v1367
    %1816 = vmatpush.bf16.msra.mxu0 %v1366
    %1817 = vmatpush.bf16.msra.mxu0 %v1365
    %1818 = vmatmul.bf16.gmra.mxu0 %v448
    %v1819 = vpop.f32.mrf.mxu0
    %v1820 = vadd.f32 %v1807, %v1819
    %v1821 = vpop.f32.mrf.mxu0
    %1822 = vdwg.mxu0
    %1823 = vmatpush.bf16.msra.mxu0 %v1380
    %1824 = vmatpush.bf16.msra.mxu0 %v1379
    %1825 = vmatpush.bf16.msra.mxu0 %v1378
    %1826 = vmatpush.bf16.msra.mxu0 %v1377
    %1827 = vmatpush.bf16.msra.mxu0 %v1376
    %1828 = vmatpush.bf16.msra.mxu0 %v1375
    %1829 = vmatpush.bf16.msra.mxu0 %v1374
    %1830 = vmatpush.bf16.msra.mxu0 %v1373
    %1831 = vmatmul.bf16.gmra.mxu0 %v449
    %v1832 = vpop.f32.mrf.mxu0
    %v1833 = vadd.f32 %v1820, %v1832
    %v1834 = vpop.f32.mrf.mxu0
    %1835 = vdwg.mxu0
    %1836 = vmatpush.bf16.msra.mxu0 %v1388
    %1837 = vmatpush.bf16.msra.mxu0 %v1387
    %1838 = vmatpush.bf16.msra.mxu0 %v1386
    %1839 = vmatpush.bf16.msra.mxu0 %v1385
    %1840 = vmatpush.bf16.msra.mxu0 %v1384
    %1841 = vmatpush.bf16.msra.mxu0 %v1383
    %1842 = vmatpush.bf16.msra.mxu0 %v1382
    %1843 = vmatpush.bf16.msra.mxu0 %v1381
    %1844 = vmatmul.bf16.gmra.mxu0 %v450
    %v1845 = vpop.f32.mrf.mxu0
    %v1846 = vadd.f32 %v1833, %v1845
    %v1847 = vpop.f32.mrf.mxu0
    %1848 = vdwg.mxu0
    %1849 = vmatpush.bf16.msra.mxu0 %v1396
    %1850 = vmatpush.bf16.msra.mxu0 %v1395
    %1851 = vmatpush.bf16.msra.mxu0 %v1394
    %1852 = vmatpush.bf16.msra.mxu0 %v1393
    %1853 = vmatpush.bf16.msra.mxu0 %v1392
    %1854 = vmatpush.bf16.msra.mxu0 %v1391
    %1855 = vmatpush.bf16.msra.mxu0 %v1390
    %1856 = vmatpush.bf16.msra.mxu0 %v1389
    %1857 = vmatmul.bf16.gmra.mxu0 %v451
    %v1858 = vpop.f32.mrf.mxu0
    %v1859 = vadd.f32 %v1846, %v1858
    %v1860 = vpop.f32.mrf.mxu0
    %1861 = vdwg.mxu0
    %1862 = vmatpush.bf16.msra.mxu0 %v1404
    %1863 = vmatpush.bf16.msra.mxu0 %v1403
    %1864 = vmatpush.bf16.msra.mxu0 %v1402
    %1865 = vmatpush.bf16.msra.mxu0 %v1401
    %1866 = vmatpush.bf16.msra.mxu0 %v1400
    %1867 = vmatpush.bf16.msra.mxu0 %v1399
    %1868 = vmatpush.bf16.msra.mxu0 %v1398
    %1869 = vmatpush.bf16.msra.mxu0 %v1397
    %1870 = vmatmul.bf16.gmra.mxu0 %v452
    %v1871 = vpop.f32.mrf.mxu0
    %v1872 = vadd.f32 %v1859, %v1871
    %v1873 = vpop.f32.mrf.mxu0
    %1874 = vdwg.mxu0
    %1875 = vmatpush.bf16.msra.mxu0 %v1412
    %1876 = vmatpush.bf16.msra.mxu0 %v1411
    %1877 = vmatpush.bf16.msra.mxu0 %v1410
    %1878 = vmatpush.bf16.msra.mxu0 %v1409
    %1879 = vmatpush.bf16.msra.mxu0 %v1408
    %1880 = vmatpush.bf16.msra.mxu0 %v1407
    %1881 = vmatpush.bf16.msra.mxu0 %v1406
    %1882 = vmatpush.bf16.msra.mxu0 %v1405
    %1883 = vmatmul.bf16.gmra.mxu0 %v453
    %v1884 = vpop.f32.mrf.mxu0
    %v1885 = vadd.f32 %v1872, %v1884
    %v1886 = vpop.f32.mrf.mxu0
    %1887 = vdwg.mxu0
    %1888 = vmatpush.bf16.msra.mxu0 %v1420
    %1889 = vmatpush.bf16.msra.mxu0 %v1419
    %1890 = vmatpush.bf16.msra.mxu0 %v1418
    %1891 = vmatpush.bf16.msra.mxu0 %v1417
    %1892 = vmatpush.bf16.msra.mxu0 %v1416
    %1893 = vmatpush.bf16.msra.mxu0 %v1415
    %1894 = vmatpush.bf16.msra.mxu0 %v1414
    %1895 = vmatpush.bf16.msra.mxu0 %v1413
    %1896 = vmatmul.bf16.gmra.mxu0 %v454
    %v1897 = vpop.f32.mrf.mxu0
    %v1898 = vadd.f32 %v1885, %v1897
    %v1899 = vpop.f32.mrf.mxu0
    %1900 = vdwg.mxu0
    %1901 = vmatpush.bf16.msra.mxu0 %v1428
    %1902 = vmatpush.bf16.msra.mxu0 %v1427
    %1903 = vmatpush.bf16.msra.mxu0 %v1426
    %1904 = vmatpush.bf16.msra.mxu0 %v1425
    %1905 = vmatpush.bf16.msra.mxu0 %v1424
    %1906 = vmatpush.bf16.msra.mxu0 %v1423
    %1907 = vmatpush.bf16.msra.mxu0 %v1422
    %1908 = vmatpush.bf16.msra.mxu0 %v1421
    %1909 = vmatmul.bf16.gmra.mxu0 %v457
    %v1910 = vpop.f32.mrf.mxu0
    %v1911 = vadd.f32 %v1898, %v1910
    %v1912 = vpop.f32.mrf.mxu0
    %1913 = vdwg.mxu0
    %1914 = vmatpush.bf16.msra.mxu0 %v1436
    %1915 = vmatpush.bf16.msra.mxu0 %v1435
    %1916 = vmatpush.bf16.msra.mxu0 %v1434
    %1917 = vmatpush.bf16.msra.mxu0 %v1433
    %1918 = vmatpush.bf16.msra.mxu0 %v1432
    %1919 = vmatpush.bf16.msra.mxu0 %v1431
    %1920 = vmatpush.bf16.msra.mxu0 %v1430
    %1921 = vmatpush.bf16.msra.mxu0 %v1429
    %1922 = vmatmul.bf16.gmra.mxu0 %v458
    %v1923 = vpop.f32.mrf.mxu0
    %v1924 = vadd.f32 %v1911, %v1923
    %v1925 = vpop.f32.mrf.mxu0
    %1926 = vdwg.mxu0
    %1927 = vmatpush.bf16.msra.mxu0 %v1444
    %1928 = vmatpush.bf16.msra.mxu0 %v1443
    %1929 = vmatpush.bf16.msra.mxu0 %v1442
    %1930 = vmatpush.bf16.msra.mxu0 %v1441
    %1931 = vmatpush.bf16.msra.mxu0 %v1440
    %1932 = vmatpush.bf16.msra.mxu0 %v1439
    %1933 = vmatpush.bf16.msra.mxu0 %v1438
    %1934 = vmatpush.bf16.msra.mxu0 %v1437
    %1935 = vmatmul.bf16.gmra.mxu0 %v459
    %v1936 = vpop.f32.mrf.mxu0
    %v1937 = vadd.f32 %v1924, %v1936
    %v1938 = vpop.f32.mrf.mxu0
    %1939 = vdwg.mxu0
    %1940 = vmatpush.bf16.msra.mxu0 %v1452
    %1941 = vmatpush.bf16.msra.mxu0 %v1451
    %1942 = vmatpush.bf16.msra.mxu0 %v1450
    %1943 = vmatpush.bf16.msra.mxu0 %v1449
    %1944 = vmatpush.bf16.msra.mxu0 %v1448
    %1945 = vmatpush.bf16.msra.mxu0 %v1447
    %1946 = vmatpush.bf16.msra.mxu0 %v1446
    %1947 = vmatpush.bf16.msra.mxu0 %v1445
    %1948 = vmatmul.bf16.gmra.mxu0 %v460
    %v1949 = vpop.f32.mrf.mxu0
    %v1950 = vadd.f32 %v1937, %v1949
    %v1951 = vpop.f32.mrf.mxu0
    %1952 = vdwg.mxu0
    %1953 = vmatpush.bf16.msra.mxu0 %v1460
    %1954 = vmatpush.bf16.msra.mxu0 %v1459
    %1955 = vmatpush.bf16.msra.mxu0 %v1458
    %1956 = vmatpush.bf16.msra.mxu0 %v1457
    %1957 = vmatpush.bf16.msra.mxu0 %v1456
    %1958 = vmatpush.bf16.msra.mxu0 %v1455
    %1959 = vmatpush.bf16.msra.mxu0 %v1454
    %1960 = vmatpush.bf16.msra.mxu0 %v1453
    %1961 = vmatmul.bf16.gmra.mxu0 %v461
    %v1962 = vpop.f32.mrf.mxu0
    %v1963 = vadd.f32 %v1950, %v1962
    %v1964 = vpop.f32.mrf.mxu0
    %1965 = vdwg.mxu0
    %1966 = vmatpush.bf16.msra.mxu0 %v1468
    %1967 = vmatpush.bf16.msra.mxu0 %v1467
    %1968 = vmatpush.bf16.msra.mxu0 %v1466
    %1969 = vmatpush.bf16.msra.mxu0 %v1465
    %1970 = vmatpush.bf16.msra.mxu0 %v1464
    %1971 = vmatpush.bf16.msra.mxu0 %v1463
    %1972 = vmatpush.bf16.msra.mxu0 %v1462
    %1973 = vmatpush.bf16.msra.mxu0 %v1461
    %1974 = vmatmul.bf16.gmra.mxu0 %v462
    %v1975 = vpop.f32.mrf.mxu0
    %v1976 = vadd.f32 %v1963, %v1975
    %v1977 = vpop.f32.mrf.mxu0
    %1978 = vdwg.mxu0
    %1979 = vmatpush.bf16.msra.mxu0 %v1476
    %1980 = vmatpush.bf16.msra.mxu0 %v1475
    %1981 = vmatpush.bf16.msra.mxu0 %v1474
    %1982 = vmatpush.bf16.msra.mxu0 %v1473
    %1983 = vmatpush.bf16.msra.mxu0 %v1472
    %1984 = vmatpush.bf16.msra.mxu0 %v1471
    %1985 = vmatpush.bf16.msra.mxu0 %v1470
    %1986 = vmatpush.bf16.msra.mxu0 %v1469
    %1987 = vmatmul.bf16.gmra.mxu0 %v463
    %v1988 = vpop.f32.mrf.mxu0
    %v1989 = vadd.f32 %v1976, %v1988
    %v1990 = vpop.f32.mrf.mxu0
    %1991 = vdwg.mxu0
    %1992 = vmatpush.bf16.msra.mxu0 %v1484
    %1993 = vmatpush.bf16.msra.mxu0 %v1483
    %1994 = vmatpush.bf16.msra.mxu0 %v1482
    %1995 = vmatpush.bf16.msra.mxu0 %v1481
    %1996 = vmatpush.bf16.msra.mxu0 %v1480
    %1997 = vmatpush.bf16.msra.mxu0 %v1479
    %1998 = vmatpush.bf16.msra.mxu0 %v1478
    %1999 = vmatpush.bf16.msra.mxu0 %v1477
    %2000 = vmatmul.bf16.gmra.mxu0 %v464
    %v2001 = vpop.f32.mrf.mxu0
    %v2002 = vadd.f32 %v1989, %v2001
    %v2003 = vpop.f32.mrf.mxu0
    %2004 = vdwg.mxu0
    %2005 = vmatpush.bf16.msra.mxu0 %v1492
    %2006 = vmatpush.bf16.msra.mxu0 %v1491
    %2007 = vmatpush.bf16.msra.mxu0 %v1490
    %2008 = vmatpush.bf16.msra.mxu0 %v1489
    %2009 = vmatpush.bf16.msra.mxu0 %v1488
    %2010 = vmatpush.bf16.msra.mxu0 %v1487
    %2011 = vmatpush.bf16.msra.mxu0 %v1486
    %2012 = vmatpush.bf16.msra.mxu0 %v1485
    %2013 = vmatmul.bf16.gmra.mxu0 %v467
    %v2014 = vpop.f32.mrf.mxu0
    %v2015 = vadd.f32 %v2002, %v2014
    %v2016 = vpop.f32.mrf.mxu0
    %2017 = vdwg.mxu0
    %v2018 = vmax.f32 %v2015, 0.0
    %v2019 = vpack.c.bf16 %v2018, %v2018
    %v2020 = vld [vmem:[%s3] sm:$0xf]
    %v2021 = vld [vmem:[%s3 + $0x4] sm:$0xf]
    %v2022 = vld [vmem:[%s3 + $0x8] sm:$0xf]
    %v2023 = vld [vmem:[%s3 + $0xc] sm:$0xf]
    %v2024 = vld [vmem:[%s3 + $0x10] sm:$0xf]
    %v2025 = vld [vmem:[%s3 + $0x14] sm:$0xf]
    %v2026 = vld [vmem:[%s3 + $0x18] sm:$0xf]
    %v2027 = vld [vmem:[%s3 + $0x1c] sm:$0xf]
    %v2028 = vld [vmem:[%s3 + $0x20] sm:$0xf]
    %v2029 = vld [vmem:[%s3 + $0x24] sm:$0xf]
    %v2030 = vld [vmem:[%s3 + $0x28] sm:$0xf]
    %v2031 = vld [vmem:[%s3 + $0x2c] sm:$0xf]
    %v2032 = vld [vmem:[%s3 + $0x30] sm:$0xf]
    %v2033 = vld [vmem:[%s3 + $0x34] sm:$0xf]
    %v2034 = vld [vmem:[%s3 + $0x38] sm:$0xf]
    %v2035 = vld [vmem:[%s3 + $0x3c] sm:$0xf]
    %v2036 = vld [vmem:[%s4] sm:$0x1]
    %v2038 = vperm.slane %v2036, 0
    %v2056 = vunpack.c.l.b16 %v2020
    %v2057 = vunpack.c.l.b16 %v2021
    %v2058 = vunpack.c.l.b16 %v2022
    %v2059 = vunpack.c.l.b16 %v2023
    %v2060 = vunpack.c.l.b16 %v2024
    %v2061 = vunpack.c.l.b16 %v2025
    %v2062 = vunpack.c.l.b16 %v2026
    %v2063 = vunpack.c.l.b16 %v2027
    %v2064 = vunpack.c.l.b16 %v2028
    %v2065 = vunpack.c.l.b16 %v2029
    %v2066 = vunpack.c.l.b16 %v2030
    %v2067 = vunpack.c.l.b16 %v2031
    %v2068 = vunpack.c.l.b16 %v2032
    %v2069 = vunpack.c.l.b16 %v2033
    %v2070 = vunpack.c.l.b16 %v2034
    %v2071 = vunpack.c.l.b16 %v2035
    %v2072 = vpack.c.b16 %v2057, %v2056
    %v2073 = vpack.c.b16 %v2059, %v2058
    %v2074 = vpack.c.b16 %v2061, %v2060
    %v2075 = vpack.c.b16 %v2063, %v2062
    %v2076 = vpack.c.b16 %v2065, %v2064
    %v2077 = vpack.c.b16 %v2067, %v2066
    %v2078 = vpack.c.b16 %v2069, %v2068
    %v2079 = vpack.c.b16 %v2071, %v2070
    %2088 = vmatpush.bf16.msra.mxu0 %v2079
    %2089 = vmatpush.bf16.msra.mxu0 %v2078
    %2090 = vmatpush.bf16.msra.mxu0 %v2077
    %2091 = vmatpush.bf16.msra.mxu0 %v2076
    %2092 = vmatpush.bf16.msra.mxu0 %v2075
    %2093 = vmatpush.bf16.msra.mxu0 %v2074
    %2094 = vmatpush.bf16.msra.mxu0 %v2073
    %2095 = vmatpush.bf16.msra.mxu0 %v2072
    %2096 = vmatmul.bf16.gmra.mxu0 %v2019
    %v2097 = vpop.f32.mrf.mxu0
    %v2098 = vadd.f32 %v2038, %v2097
    %v2099 = vpop.f32.mrf.mxu0
    %2100 = vdwg.mxu0
    %v2101 = vmax.f32 %v2098, 0.0
    %v2102 = vpack.c.bf16 %v2101, %v2101
    %v2103 = vld [vmem:[%s5] sm:$0xf]
    %v2104 = vld [vmem:[%s5 + $0x4] sm:$0xf]
    %v2105 = vld [vmem:[%s5 + $0x8] sm:$0xf]
    %v2106 = vld [vmem:[%s5 + $0xc] sm:$0xf]
    %v2107 = vld [vmem:[%s5 + $0x10] sm:$0xf]
    %v2108 = vld [vmem:[%s5 + $0x14] sm:$0xf]
    %v2109 = vld [vmem:[%s5 + $0x18] sm:$0xf]
    %v2110 = vld [vmem:[%s5 + $0x1c] sm:$0xf]
    %v2111 = vld [vmem:[%s5 + $0x20] sm:$0xf]
    %v2112 = vld [vmem:[%s5 + $0x24] sm:$0xf]
    %v2113 = vld [vmem:[%s5 + $0x28] sm:$0xf]
    %v2114 = vld [vmem:[%s5 + $0x2c] sm:$0xf]
    %v2115 = vld [vmem:[%s5 + $0x30] sm:$0xf]
    %v2116 = vld [vmem:[%s5 + $0x34] sm:$0xf]
    %v2117 = vld [vmem:[%s5 + $0x38] sm:$0xf]
    %v2118 = vld [vmem:[%s5 + $0x3c] sm:$0xf]
    %v2119 = vld [vmem:[%s6] sm:$0x1]
    %v2121 = vperm.slane %v2119, 0
    %v2139 = vunpack.c.l.b16 %v2103
    %v2140 = vunpack.c.l.b16 %v2104
    %v2141 = vunpack.c.l.b16 %v2105
    %v2142 = vunpack.c.l.b16 %v2106
    %v2143 = vunpack.c.l.b16 %v2107
    %v2144 = vunpack.c.l.b16 %v2108
    %v2145 = vunpack.c.l.b16 %v2109
    %v2146 = vunpack.c.l.b16 %v2110
    %v2147 = vunpack.c.l.b16 %v2111
    %v2148 = vunpack.c.l.b16 %v2112
    %v2149 = vunpack.c.l.b16 %v2113
    %v2150 = vunpack.c.l.b16 %v2114
    %v2151 = vunpack.c.l.b16 %v2115
    %v2152 = vunpack.c.l.b16 %v2116
    %v2153 = vunpack.c.l.b16 %v2117
    %v2154 = vunpack.c.l.b16 %v2118
    %v2155 = vpack.c.b16 %v2140, %v2139
    %v2156 = vpack.c.b16 %v2142, %v2141
    %v2157 = vpack.c.b16 %v2144, %v2143
    %v2158 = vpack.c.b16 %v2146, %v2145
    %v2159 = vpack.c.b16 %v2148, %v2147
    %v2160 = vpack.c.b16 %v2150, %v2149
    %v2161 = vpack.c.b16 %v2152, %v2151
    %v2162 = vpack.c.b16 %v2154, %v2153
    %2171 = vmatpush.bf16.msra.mxu0 %v2162
    %2172 = vmatpush.bf16.msra.mxu0 %v2161
    %2173 = vmatpush.bf16.msra.mxu0 %v2160
    %2174 = vmatpush.bf16.msra.mxu0 %v2159
    %2175 = vmatpush.bf16.msra.mxu0 %v2158
    %2176 = vmatpush.bf16.msra.mxu0 %v2157
    %2177 = vmatpush.bf16.msra.mxu0 %v2156
    %2178 = vmatpush.bf16.msra.mxu0 %v2155
    %2179 = vmatmul.bf16.gmra.mxu0 %v2102
    %v2180 = vpop.f32.mrf.mxu0
    %v2181 = vadd.f32 %v2121, %v2180
    %v2182 = vpop.f32.mrf.mxu0
    %2183 = vdwg.mxu0
    %2184 = vst [vmem:[#allocation2] sm:$0x3] %v2181
    // Predicated region
    $region30: #{forward.5} parent=1 // pred_check
      _
    $region31: #{forward.5} parent=1 // pred_check_branch
      %2186 = sbr.rel (0) target = $region33
    $region32: #{forward.5} parent=1 // pred_region
      %2188 = vsyncadd [#allocation3], 0
      %s2190 = sshll.u32 [#allocation2], 4
      %s2191 = int_to_ptr.vmem [resolvable:$true] %s2190
      %s2192 = sshll.u32 %s7, 4
      %s2193 = int_to_ptr.hbm [resolvable:$true] %s2192
      %2195 = dma.vmem_to_hbm [thread:$0]  %s2191, 32, %s2193, [#allocation3]
    $region33: #{forward.5} parent=1 // pred_fallthru
      _
    // Predicated region
    $region34: #{forward.5} parent=1 // pred_check
      _
    $region35: #{forward.5} parent=1 // pred_check_branch
      %2197 = sbr.rel (0) target = $region37
    $region36: #{forward.5} parent=1 // pred_region
      %2199 = dma.done [#allocation3], 32
    $region37: #{forward.5} parent=1 // pred_fallthru
      _
    %2200 = vsyncpa [#allocation3], 1

</llo_original>
